<compile_context>
chip_gen: v7x
topology: tpu7x:2x2x1
jax: 0.10.0
libtpu: 0.0.40
codegen_flags: <defaults>
</compile_context>

<pallas_src>
import math

import jax
import jax.numpy as jnp
import numpy as np
from jax import lax
from jax.experimental import pallas as pl
from jax.experimental.pallas import tpu as pltpu


# ---------------------------------------------------------------------------
# math helpers shared by the kernel and the pure-JAX reference
# ---------------------------------------------------------------------------
def _erf(x):
    # Abramowitz & Stegun 7.1.26 rational approximation (float32-exact enough), so
    # the exact (erf-based) nn.GELU() semantics lower cleanly on the VPU/EUP.
    a1, a2, a3 = 0.254829592, -0.284496736, 1.421413741
    a4, a5, p = -1.453152027, 1.061405429, 0.3275911
    sgn = jnp.where(x < 0.0, -1.0, 1.0)
    ax = jnp.abs(x)
    t = 1.0 / (1.0 + p * ax)
    poly = ((((a5 * t + a4) * t + a3) * t + a2) * t + a1) * t
    return sgn * (1.0 - poly * jnp.exp(-ax * ax))


def _gelu_exact(x):
    return 0.5 * x * (1.0 + _erf(x * (1.0 / math.sqrt(2.0))))


def _layernorm(x, w, b, eps=1e-5):
    mu = jnp.mean(x, axis=-1, keepdims=True)
    var = jnp.mean((x - mu) ** 2, axis=-1, keepdims=True)
    return (x - mu) * lax.rsqrt(var + eps) * w + b


# ---------------------------------------------------------------------------
# the kernel
# ---------------------------------------------------------------------------
def _make_kernel(heads, hidden, head_size, v_head, log_gammas):
    H, hs, hv = hidden, head_size, v_head
    bf16, f32 = jnp.bfloat16, jnp.float32

    def kernel(x_ref, ln1w_ref, ln1b_ref, wbig_ref, wo_ref, gnw_ref, gnb_ref,
               ln2w_ref, ln2b_ref, w1_ref, b1_ref, w2_ref, b2_ref,
               cosq_ref, sinq_ref, cosk_ref, sink_ref,
               p1w_ref, p1b_ref, p2w_ref, p2b_ref,
               out_ref, x_scr):
        l = pl.program_id(0)
        nl = pl.num_programs(0)

        @pl.when(l == 0)
        def _():
            x_scr[...] = x_ref[...]

        x = x_scr[...]                                   # (S, H) f32 hidden state
        S = x.shape[0]

        # ---- LayerNorm 1 + fused [Q | Q@R | K | K@R | V | G] projection -----
        h1 = _layernorm(x, ln1w_ref[0], ln1b_ref[0])
        proj = jnp.dot(h1.astype(bf16), wbig_ref[0],
                       preferred_element_type=f32)        # (S, 8H)

        # xPos rotary: x*cos + rotate_every_two(x)*sin ; the rotate is folded
        # into the weights on the host (W @ R), so here it is slice + FMA only.
        q = proj[:, 0 * H:1 * H] * cosq_ref[...] + proj[:, 1 * H:2 * H] * sinq_ref[...]
        k = proj[:, 2 * H:3 * H] * cosk_ref[...] + proj[:, 3 * H:4 * H] * sink_ref[...]
        v = proj[:, 4 * H:6 * H]                          # (S, 2H)
        g = proj[:, 6 * H:8 * H]                          # (S, 2H)
        g = g * jax.nn.sigmoid(g)                         # swish gate (lane-dense)

        # ---- rank-1 decay pieces, generated in-kernel ------------------------
        # D_h = gamma_h^(n-m) for n>=m else 0 = where(causal, gamma^n * gamma^-m, 0)
        # -> EUP exps on (S,1)/(1,S) vectors only; no f32 (S,S) delta matrix.
        n_col = lax.broadcasted_iota(jnp.int32, (S, 1), 0).astype(f32)
        m_row = lax.broadcasted_iota(jnp.int32, (1, S), 1).astype(f32)
        causal = (lax.broadcasted_iota(jnp.int32, (S, S), 0)
                  >= lax.broadcasted_iota(jnp.int32, (S, S), 1))

        # ---- multi-scale retention (per-head, statically unrolled) ----------
        # TODO(synk): head-batch the QK^T / PV contractions ((heads,S,hs) einsum)
        # once a layout-friendly head-batched projection is in place.
        y_heads = []
        for h in range(heads):
            lg = log_gammas[h]                            # python float, < 0
            qh = q[:, h * hs:(h + 1) * hs].astype(bf16)
            kh = k[:, h * hs:(h + 1) * hs].astype(bf16)
            vh = v[:, h * hv:(h + 1) * hv].astype(bf16)
            att = lax.dot_general(qh, kh, (((1,), (1,)), ((), ())),
                                  preferred_element_type=f32)       # (S, S)
            dmask = jnp.where(causal,
                              jnp.exp(n_col * lg) * jnp.exp(m_row * (-lg)),
                              0.0)
            yh = jnp.dot((att * dmask).astype(bf16), vh,
                         preferred_element_type=f32)                # (S, hv)
            # per-head slice of nn.GroupNorm(heads, v_dim): per-position stats
            # over this head's hv channels (affine applied full-width below).
            mu = jnp.mean(yh, axis=-1, keepdims=True)
            var = jnp.mean((yh - mu) ** 2, axis=-1, keepdims=True)
            y_heads.append((yh - mu) * lax.rsqrt(var + 1e-5))

        yn = jnp.concatenate(y_heads, axis=-1)            # (S, 2H) lane-contiguous
        gated = g * (yn * gnw_ref[0] + gnb_ref[0])        # GroupNorm affine + gate
        ret = jnp.dot(gated.astype(bf16), wo_ref[0],
                      preferred_element_type=f32)         # ONE (S,2H)@(2H,H) matmul

        y = ret + x                                       # residual 1
        h2 = _layernorm(y, ln2w_ref[0], ln2b_ref[0])      # LayerNorm 2
        f = jnp.dot(h2.astype(bf16), w1_ref[0], preferred_element_type=f32) + b1_ref[0]
        f = _gelu_exact(f)                                # nn.GELU() (exact, f32)
        f = jnp.dot(f.astype(bf16), w2_ref[0], preferred_element_type=f32) + b2_ref[0]
        x_new = f + y                                     # residual 2
        x_scr[...] = x_new

        # ---- prediction head: Linear(H,128) -> Linear(128,1), last step only -
        @pl.when(l == nl - 1)
        def _():
            p = jnp.dot(x_new.astype(bf16), p1w_ref[...],
                        preferred_element_type=f32) + p1b_ref[...]
            out_ref[...] = jnp.dot(p.astype(bf16), p2w_ref[...],
                                   preferred_element_type=f32) + p2b_ref[...]

    return kernel


# ---------------------------------------------------------------------------
# host-side constants: xPos tables, rotate_every_two matrix, decay log-gammas
# ---------------------------------------------------------------------------
def _xpos_tables(seq_len, head_dim, scale_base=512.0):
    half = head_dim // 2
    base = (jnp.arange(0, head_dim, 2, dtype=jnp.float32) + 0.4 * head_dim) / (1.4 * head_dim)
    pos = jnp.arange(seq_len, dtype=jnp.float32)
    scale_q = base[None, :] ** (pos / scale_base)[:, None]          # (S, half)
    scale_k = 1.0 / scale_q
    inv_freq = 1.0 / (10000.0 ** (jnp.arange(half, dtype=jnp.float32) / half))
    ang = pos[:, None] * inv_freq[None, :]
    sin, cos = jnp.sin(ang), jnp.cos(ang)
    dup = lambda m: jnp.repeat(m, 2, axis=-1)                       # duplicate_interleave
    return dup(cos * scale_q), dup(sin * scale_q), dup(cos * scale_k), dup(sin * scale_k)


def _rotate_matrix(head_dim):
    # rotate_every_two as a linear map R so that rot(x) = x @ R (folded into weights).
    half = head_dim // 2
    idx = jnp.arange(half)
    rm = jnp.zeros((head_dim, head_dim), jnp.float32)
    rm = rm.at[2 * idx + 1, 2 * idx].set(-1.0)   # out[2i]   = -x[2i+1]
    rm = rm.at[2 * idx, 2 * idx + 1].set(1.0)    # out[2i+1] =  x[2i]
    return rm


def _log_gammas(heads):
    lo, hi = math.log(1.0 / 32.0), math.log(1.0 / 512.0)
    if heads == 1:
        pts = [lo]
    else:
        pts = [lo + i * (hi - lo) / (heads - 1) for i in range(heads)]
    return [math.log(1.0 - math.exp(p)) for p in pts]


def _prepare_inputs(mels, params):
    S, B, H = mels.shape
    assert B == 1, "plantGPT squeezes the batch dim -> batch must be 1"
    x = mels[:, 0, :].astype(jnp.float32)                   # (S, H)

    wq = params["wq"]                                       # (L, heads, H, hs)
    L, heads, _, hs = wq.shape
    hv = params["wv"].shape[3]
    F = params["w1"].shape[2]

    # xPos tables for one head, tiled across the head-concatenated lane axis.
    cosq, sinq, cosk, sink = _xpos_tables(S, hs)
    cosq, sinq, cosk, sink = (jnp.tile(t, (1, heads)) for t in (cosq, sinq, cosk, sink))

    # Fold rotate_every_two into the weights and fuse all per-head projections
    # into one lane-dense (H, 8H) matrix: [Q | Q@R | K | K@R | V | G].
    R = _rotate_matrix(hs)

    def to_cols(w):   # (L, heads, H, out) -> (L, H, heads*out), head-major columns
        return jnp.transpose(w, (0, 2, 1, 3)).reshape(L, H, heads * w.shape[-1])

    wbig = jnp.concatenate(
        [to_cols(wq), to_cols(wq @ R),
         to_cols(params["wk"]), to_cols(params["wk"] @ R),
         to_cols(params["wv"]), to_cols(params["wg"])],
        axis=-1).astype(jnp.bfloat16)                       # (L, H, 8H)

    # Fused full-width output projection (= the module's single W_O) and the
    # full-width GroupNorm affine, both head-major along the v_dim axis.
    wo = params["wo"].reshape(L, heads * hv, H).astype(jnp.bfloat16)   # (L, 2H, H)
    gnw = params["gnw"].reshape(L, heads * hv)[:, None, :]             # (L, 1, 2H)
    gnb = params["gnb"].reshape(L, heads * hv)[:, None, :]             # (L, 1, 2H)

    w1 = params["w1"].astype(jnp.bfloat16)                  # (L, H, F)
    w2 = params["w2"].astype(jnp.bfloat16)                  # (L, F, H)
    p1w = params["p1w"].astype(jnp.bfloat16)                # (H, 128)
    p2w = params["p2w"].astype(jnp.bfloat16)                # (128, 1)

    args = (x, params["ln1w"], params["ln1b"], wbig, wo, gnw, gnb,
            params["ln2w"], params["ln2b"],
            w1, params["b1"], w2, params["b2"],
            cosq, sinq, cosk, sink,
            p1w, params["p1b"], p2w, params["p2b"])
    cfg = dict(S=S, H=H, L=L, heads=heads, hs=hs, hv=hv, F=F,
               log_gammas=_log_gammas(heads))
    return args, cfg


def _vmem_limit_bytes(S, H, F):
    """Estimate VMEM need (double-buffered blocks + live intermediates) with headroom,
    capped at 56 MiB so the same scheme fits v7x's 64 MiB VMEM."""
    f4, b2 = 4, 2
    layer = (5 * H * f4 + F * f4                       # ln1/ln2 w+b, b2, b1
             + H * 8 * H * b2                          # fused projection
             + 2 * H * H * b2                          # fused W_O
             + 2 * 2 * H * f4                          # group-norm w,b
             + H * F * b2 + F * H * b2)                # ffn weights
    consts = 5 * S * H * f4 + H * 128 * b2 + 128 * f4 + 128 * b2 + f4
    scratch = S * H * f4
    live = (S * 8 * H * f4 + 6 * S * H * f4            # proj + q/k/v/g
            + 4 * S * S * f4                           # scores / decay / causal
            + S * 2 * H * f4 + S * F * f4)             # concat values + ffn hidden
    need = 2 * (layer + consts) + scratch + live + (8 << 20)
    return int(min(56 << 20, max(32 << 20, need)))


# ---------------------------------------------------------------------------
# wrapper
# ---------------------------------------------------------------------------
def plant_gpt_forward(mels, params):
    args, cfg = _prepare_inputs(mels, params)
    S, H, F = cfg["S"], cfg["H"], cfg["F"]
    L, heads, hv = cfg["L"], cfg["heads"], cfg["hv"]

    def layer_spec(*shape):   # per-layer weights: blocked on the leading (layer) axis
        zeros = (0,) * len(shape)
        return pl.BlockSpec((1,) + tuple(shape), lambda l, z=zeros: (l,) + z)

    def const_spec(*shape):   # per-call constants: same block every grid step
        zeros = (0,) * len(shape)
        return pl.BlockSpec(tuple(shape), lambda l, z=zeros: z)

    in_specs = [
        const_spec(S, H),                                          # x
        layer_spec(1, H), layer_spec(1, H),                        # ln1 w,b
        layer_spec(H, 8 * H),                                      # fused [Q|QR|K|KR|V|G] (bf16)
        layer_spec(2 * H, H),                                      # fused W_O (bf16)
        layer_spec(1, 2 * H), layer_spec(1, 2 * H),                # group-norm w,b (full width)
        layer_spec(1, H), layer_spec(1, H),                        # ln2 w,b
        layer_spec(H, F), layer_spec(1, F),                        # ffn lin1 (bf16 w)
        layer_spec(F, H), layer_spec(1, H),                        # ffn lin2 (bf16 w)
        const_spec(S, H), const_spec(S, H),                        # cos_q, sin_q
        const_spec(S, H), const_spec(S, H),                        # cos_k, sin_k
        const_spec(H, 128), const_spec(1, 128),                    # pred lin1 (bf16 w)
        const_spec(128, 1), const_spec(1, 1),                      # pred lin2 (bf16 w)
    ]

    grid_spec = pltpu.PrefetchScalarGridSpec(
        num_scalar_prefetch=0,
        grid=(L,),
        in_specs=in_specs,
        out_specs=pl.BlockSpec((S, 1), lambda l: (0, 0)),
        scratch_shapes=[pltpu.VMEM((S, H), jnp.float32)],          # hidden-state carry
    )

    kernel = _make_kernel(heads, H, cfg["hs"], hv, cfg["log_gammas"])
    return pl.pallas_call(
        kernel,
        grid_spec=grid_spec,
        out_shape=jax.ShapeDtypeStruct((S, 1), jnp.float32),
        compiler_params=pltpu.CompilerParams(
            dimension_semantics=("arbitrary",),                    # sequential layer carry
            vmem_limit_bytes=_vmem_limit_bytes(S, H, F)),
    )(*args)


# ---------------------------------------------------------------------------
# pure-JAX reference (same math as the kernel) used as a correctness check
# ---------------------------------------------------------------------------
def plant_gpt_reference(mels, params):
    (x, ln1w, ln1b, wbig, wo, gnw, gnb, ln2w, ln2b, w1, b1, w2, b2,
     cosq, sinq, cosk, sink, p1w, p1b, p2w, p2b), cfg = _prepare_inputs(mels, params)
    H, heads, hs, hv, S = cfg["H"], cfg["heads"], cfg["hs"], cfg["hv"], cfg["S"]
    lg = cfg["log_gammas"]
    bf16, f32 = jnp.bfloat16, jnp.float32

    n = jnp.arange(S, dtype=f32)[:, None]
    m = jnp.arange(S, dtype=f32)[None, :]
    causal = (n - m) >= 0.0

    for l in range(cfg["L"]):
        h1 = _layernorm(x, ln1w[l], ln1b[l])
        proj = jnp.dot(h1.astype(bf16), wbig[l], preferred_element_type=f32)
        q = proj[:, 0 * H:1 * H] * cosq + proj[:, 1 * H:2 * H] * sinq
        k = proj[:, 2 * H:3 * H] * cosk + proj[:, 3 * H:4 * H] * sink
        v = proj[:, 4 * H:6 * H]
        g = proj[:, 6 * H:8 * H]
        g = g * jax.nn.sigmoid(g)
        ys = []
        for h in range(heads):
            qh = q[:, h * hs:(h + 1) * hs].astype(bf16)
            kh = k[:, h * hs:(h + 1) * hs].astype(bf16)
            vh = v[:, h * hv:(h + 1) * hv].astype(bf16)
            att = jnp.dot(qh, kh.T, preferred_element_type=f32)
            dmask = jnp.where(causal, jnp.exp(n * lg[h]) * jnp.exp(-m * lg[h]), 0.0)
            yh = jnp.dot((att * dmask).astype(bf16), vh, preferred_element_type=f32)
            mu = jnp.mean(yh, axis=-1, keepdims=True)
            var = jnp.mean((yh - mu) ** 2, axis=-1, keepdims=True)
            ys.append((yh - mu) * lax.rsqrt(var + 1e-5))
        yn = jnp.concatenate(ys, axis=-1)
        gated = g * (yn * gnw[l] + gnb[l])
        ret = jnp.dot(gated.astype(bf16), wo[l], preferred_element_type=f32)
        y = ret + x
        h2 = _layernorm(y, ln2w[l], ln2b[l])
        f = jnp.dot(h2.astype(bf16), w1[l], preferred_element_type=f32) + b1[l]
        f = _gelu_exact(f)
        f = jnp.dot(f.astype(bf16), w2[l], preferred_element_type=f32) + b2[l]
        x = f + y
    p = jnp.dot(x.astype(bf16), p1w, preferred_element_type=f32) + p1b
    return jnp.dot(p.astype(bf16), p2w, preferred_element_type=f32) + p2b


# ---------------------------------------------------------------------------
# deterministic parameter init (shapes from plantGPT.__init__ / RetNet modules)
# ---------------------------------------------------------------------------
def init_params(key, layers, hidden, ffn, heads, d_model):
    assert hidden == d_model, "retnet hidden size must equal d_model"
    assert d_model <= 200, "this script instantiates the small pred head"
    hs = hidden // heads
    hv = 2 * hs                         # double_v_dim=True
    ks = jax.random.split(key, 13)
    rn = lambda k, shape, s: jax.random.normal(k, shape, jnp.float32) * s
    f32 = jnp.float32
    return dict(
        ln1w=jnp.ones((layers, 1, hidden), f32), ln1b=jnp.zeros((layers, 1, hidden), f32),
        ln2w=jnp.ones((layers, 1, hidden), f32), ln2b=jnp.zeros((layers, 1, hidden), f32),
        wq=rn(ks[0], (layers, heads, hidden, hs), 1.0 / hidden),
        wk=rn(ks[1], (layers, heads, hidden, hs), 1.0 / hidden),
        wv=rn(ks[2], (layers, heads, hidden, hv), 1.0 / hidden),
        wg=rn(ks[3], (layers, heads, hidden, hv), 1.0 / hidden),
        wo=rn(ks[4], (layers, heads, hv, hidden), 1.0 / hidden),
        gnw=jnp.ones((layers, heads, 1, hv), f32), gnb=jnp.zeros((layers, heads, 1, hv), f32),
        w1=rn(ks[5], (layers, hidden, ffn), 1.0 / math.sqrt(hidden)),
        b1=rn(ks[6], (layers, 1, ffn), 0.02),
        w2=rn(ks[7], (layers, ffn, hidden), 1.0 / math.sqrt(ffn)),
        b2=rn(ks[8], (layers, 1, hidden), 0.02),
        p1w=rn(ks[9], (hidden, 128), 1.0 / math.sqrt(hidden)),
        p1b=rn(ks[10], (1, 128), 0.02),
        p2w=rn(ks[11], (128, 1), 1.0 / math.sqrt(128)),
        p2b=rn(ks[12], (1, 1), 0.02),
    )


if __name__ == "__main__":
    # small config consistent with plantGPT defaults:
    # plantGPT(input_dim=64, layers=2, hidden_size=64, ffn_size=128, nhead=4, d_model=64)
    S, d_model, layers, ffn, heads = 16, 64, 2, 128, 4
    key = jax.random.PRNGKey(0)
    k_in, k_par = jax.random.split(key)
    params = init_params(k_par, layers, d_model, ffn, heads, d_model)
    mels = jax.random.normal(k_in, (S, 1, d_model), jnp.float32)   # (seq, batch=1, d_model)

    out = jax.block_until_ready(plant_gpt_forward(mels, params))
    assert out.shape == (S, 1) and out.dtype == jnp.float32

    ref = jax.block_until_ready(plant_gpt_reference(mels, params))
    np.testing.assert_allclose(np.asarray(out), np.asarray(ref), rtol=2e-2, atol=2e-2)
    print("KERNEL_OK")
</pallas_src>

<mosaic_0001>
module attributes {stable_mosaic.version = 11 : i64} {
  func.func @kernel(%arg0: i32, %arg1: memref<16x64xf32, #tpu.memory_space<vmem>>, %arg2: memref<1x1x64xf32, #tpu.memory_space<vmem>>, %arg3: memref<1x1x64xf32, #tpu.memory_space<vmem>>, %arg4: memref<1x64x512xbf16, #tpu.memory_space<vmem>>, %arg5: memref<1x128x64xbf16, #tpu.memory_space<vmem>>, %arg6: memref<1x1x128xf32, #tpu.memory_space<vmem>>, %arg7: memref<1x1x128xf32, #tpu.memory_space<vmem>>, %arg8: memref<1x1x64xf32, #tpu.memory_space<vmem>>, %arg9: memref<1x1x64xf32, #tpu.memory_space<vmem>>, %arg10: memref<1x64x128xbf16, #tpu.memory_space<vmem>>, %arg11: memref<1x1x128xf32, #tpu.memory_space<vmem>>, %arg12: memref<1x128x64xbf16, #tpu.memory_space<vmem>>, %arg13: memref<1x1x64xf32, #tpu.memory_space<vmem>>, %arg14: memref<16x64xf32, #tpu.memory_space<vmem>>, %arg15: memref<16x64xf32, #tpu.memory_space<vmem>>, %arg16: memref<16x64xf32, #tpu.memory_space<vmem>>, %arg17: memref<16x64xf32, #tpu.memory_space<vmem>>, %arg18: memref<64x128xbf16, #tpu.memory_space<vmem>>, %arg19: memref<1x128xf32, #tpu.memory_space<vmem>>, %arg20: memref<128x1xbf16, #tpu.memory_space<vmem>>, %arg21: memref<1x1xf32, #tpu.memory_space<vmem>>, %arg22: memref<16x1xf32, #tpu.memory_space<vmem>>, %arg23: memref<16x64xf32, #tpu.memory_space<vmem>>) attributes {dimension_semantics = [#tpu.dimension_semantics<arbitrary>], iteration_bounds = array<i64: 2>, scalar_prefetch = 0 : i64, scratch_operands = 1 : i64, tpu.core_type = #tpu.core_type<tc>, window_params = [{pipeline_mode = #tpu.pipeline_mode<synchronous>, transform_indices = @transform_0, window_bounds = array<i64: 16, 64>}, {transform_indices = @transform_1, window_bounds = array<i64: 1, 1, 64>}, {transform_indices = @transform_2, window_bounds = array<i64: 1, 1, 64>}, {transform_indices = @transform_3, window_bounds = array<i64: 1, 64, 512>}, {transform_indices = @transform_4, window_bounds = array<i64: 1, 128, 64>}, {transform_indices = @transform_5, window_bounds = array<i64: 1, 1, 128>}, {transform_indices = @transform_6, window_bounds = array<i64: 1, 1, 128>}, {transform_indices = @transform_7, window_bounds = array<i64: 1, 1, 64>}, {transform_indices = @transform_8, window_bounds = array<i64: 1, 1, 64>}, {transform_indices = @transform_9, window_bounds = array<i64: 1, 64, 128>}, {transform_indices = @transform_10, window_bounds = array<i64: 1, 1, 128>}, {transform_indices = @transform_11, window_bounds = array<i64: 1, 128, 64>}, {transform_indices = @transform_12, window_bounds = array<i64: 1, 1, 64>}, {pipeline_mode = #tpu.pipeline_mode<synchronous>, transform_indices = @transform_13, window_bounds = array<i64: 16, 64>}, {pipeline_mode = #tpu.pipeline_mode<synchronous>, transform_indices = @transform_14, window_bounds = array<i64: 16, 64>}, {pipeline_mode = #tpu.pipeline_mode<synchronous>, transform_indices = @transform_15, window_bounds = array<i64: 16, 64>}, {pipeline_mode = #tpu.pipeline_mode<synchronous>, transform_indices = @transform_16, window_bounds = array<i64: 16, 64>}, {pipeline_mode = #tpu.pipeline_mode<synchronous>, transform_indices = @transform_17, window_bounds = array<i64: 64, 128>}, {pipeline_mode = #tpu.pipeline_mode<synchronous>, transform_indices = @transform_18, window_bounds = array<i64: 1, 128>}, {pipeline_mode = #tpu.pipeline_mode<synchronous>, transform_indices = @transform_19, window_bounds = array<i64: 128, 1>}, {pipeline_mode = #tpu.pipeline_mode<synchronous>, transform_indices = @transform_20, window_bounds = array<i64: 1, 1>}, {pipeline_mode = #tpu.pipeline_mode<synchronous>, transform_indices = @transform_21, window_bounds = array<i64: 16, 1>}]} {
    %c0_i32 = arith.constant 0 : i32
    %0 = arith.cmpi eq, %arg0, %c0_i32 : i32
    %1 = arith.extui %0 : i1 to i32
    %c0_i32_0 = arith.constant 0 : i32
    %2 = arith.cmpi ne, %1, %c0_i32_0 : i32
    scf.if %2 {
      %c0_119 = arith.constant 0 : index
      %c0_120 = arith.constant 0 : index
      %322 = vector.load %arg1[%c0_119, %c0_120] : memref<16x64xf32, #tpu.memory_space<vmem>>, vector<16x64xf32>
      %c0_121 = arith.constant 0 : index
      %c0_122 = arith.constant 0 : index
      %323 = vector.load %arg23[%c0_121, %c0_122] : memref<16x64xf32, #tpu.memory_space<vmem>>, vector<16x64xf32>
      tpu.vector_store %arg23[%c0_121, %c0_122], %322 {strides = array<i32>} : memref<16x64xf32, #tpu.memory_space<vmem>>, vector<16x64xf32>,
    } else {
    }
    %c0 = arith.constant 0 : index
    %c0_1 = arith.constant 0 : index
    %3 = vector.load %arg23[%c0, %c0_1] : memref<16x64xf32, #tpu.memory_space<vmem>>, vector<16x64xf32>
    %c0_2 = arith.constant 0 : index
    %c0_3 = arith.constant 0 : index
    %c0_4 = arith.constant 0 : index
    %4 = vector.load %arg2[%c0_2, %c0_3, %c0_4] : memref<1x1x64xf32, #tpu.memory_space<vmem>>, vector<1x1x64xf32>
    %5 = vector.shape_cast %4 : vector<1x1x64xf32> to vector<1x64xf32>
    %c0_5 = arith.constant 0 : index
    %c0_6 = arith.constant 0 : index
    %c0_7 = arith.constant 0 : index
    %6 = vector.load %arg3[%c0_5, %c0_6, %c0_7] : memref<1x1x64xf32, #tpu.memory_space<vmem>>, vector<1x1x64xf32>
    %7 = vector.shape_cast %6 : vector<1x1x64xf32> to vector<1x64xf32>
    %cst = arith.constant dense<0.000000e+00> : vector<16xf32>
    %8 = vector.multi_reduction <add>, %3, %cst [1] : vector<16x64xf32> to vector<16xf32>
    %9 = vector.shape_cast %8 : vector<16xf32> to vector<16x1xf32>
    %cst_8 = arith.constant 6.400000e+01 : f32
    %10 = vector.broadcast %cst_8 : f32 to vector<16x1xf32>
    %11 = arith.divf %9, %10 : vector<16x1xf32>
    %12 = vector.broadcast %11 : vector<16x1xf32> to vector<16x64xf32>
    %13 = arith.subf %3, %12 : vector<16x64xf32>
    %14 = arith.mulf %13, %13 : vector<16x64xf32>
    %cst_9 = arith.constant dense<0.000000e+00> : vector<16xf32>
    %15 = vector.multi_reduction <add>, %14, %cst_9 [1] : vector<16x64xf32> to vector<16xf32>
    %16 = vector.shape_cast %15 : vector<16xf32> to vector<16x1xf32>
    %cst_10 = arith.constant 6.400000e+01 : f32
    %17 = vector.broadcast %cst_10 : f32 to vector<16x1xf32>
    %18 = arith.divf %16, %17 : vector<16x1xf32>
    %19 = vector.broadcast %11 : vector<16x1xf32> to vector<16x64xf32>
    %20 = arith.subf %3, %19 : vector<16x64xf32>
    %cst_11 = arith.constant 9.99999974E-6 : f32
    %21 = vector.broadcast %cst_11 : f32 to vector<16x1xf32>
    %22 = arith.addf %18, %21 : vector<16x1xf32>
    %23 = math.rsqrt %22 : vector<16x1xf32>
    %24 = vector.broadcast %23 : vector<16x1xf32> to vector<16x64xf32>
    %25 = arith.mulf %20, %24 : vector<16x64xf32>
    %26 = vector.broadcast %5 : vector<1x64xf32> to vector<16x64xf32>
    %27 = arith.mulf %25, %26 : vector<16x64xf32>
    %28 = vector.broadcast %7 : vector<1x64xf32> to vector<16x64xf32>
    %29 = arith.addf %27, %28 : vector<16x64xf32>
    %30 = arith.truncf %29 : vector<16x64xf32> to vector<16x64xbf16>
    %c0_12 = arith.constant 0 : index
    %c0_13 = arith.constant 0 : index
    %c0_14 = arith.constant 0 : index
    %31 = vector.load %arg4[%c0_12, %c0_13, %c0_14] : memref<1x64x512xbf16, #tpu.memory_space<vmem>>, vector<1x64x512xbf16>
    %32 = vector.shape_cast %31 : vector<1x64x512xbf16> to vector<64x512xbf16>
    %cst_15 = arith.constant dense<0.000000e+00> : vector<16x512xf32>
    %33 = tpu.matmul %30, %32, %cst_15 {dimension_numbers = #tpu.dot_dimension_numbers<[1], [0], [0], [1], [0, 0, 1, 1], [], []>} : vector<16x64xbf16>, vector<64x512xbf16>, vector<16x512xf32> -> vector<16x512xf32>
    %34 = vector.extract_strided_slice %33 {offsets = [0, 0], sizes = [16, 64], strides = [1, 1]} : vector<16x512xf32> to vector<16x64xf32>
    %c0_16 = arith.constant 0 : index
    %c0_17 = arith.constant 0 : index
    %35 = vector.load %arg14[%c0_16, %c0_17] : memref<16x64xf32, #tpu.memory_space<vmem>>, vector<16x64xf32>
    %36 = arith.mulf %34, %35 : vector<16x64xf32>
    %37 = vector.extract_strided_slice %33 {offsets = [0, 64], sizes = [16, 64], strides = [1, 1]} : vector<16x512xf32> to vector<16x64xf32>
    %c0_18 = arith.constant 0 : index
    %c0_19 = arith.constant 0 : index
    %38 = vector.load %arg15[%c0_18, %c0_19] : memref<16x64xf32, #tpu.memory_space<vmem>>, vector<16x64xf32>
    %39 = arith.mulf %37, %38 : vector<16x64xf32>
    %40 = arith.addf %36, %39 : vector<16x64xf32>
    %41 = vector.extract_strided_slice %33 {offsets = [0, 128], sizes = [16, 64], strides = [1, 1]} : vector<16x512xf32> to vector<16x64xf32>
    %c0_20 = arith.constant 0 : index
    %c0_21 = arith.constant 0 : index
    %42 = vector.load %arg16[%c0_20, %c0_21] : memref<16x64xf32, #tpu.memory_space<vmem>>, vector<16x64xf32>
    %43 = arith.mulf %41, %42 : vector<16x64xf32>
    %44 = vector.extract_strided_slice %33 {offsets = [0, 192], sizes = [16, 64], strides = [1, 1]} : vector<16x512xf32> to vector<16x64xf32>
    %c0_22 = arith.constant 0 : index
    %c0_23 = arith.constant 0 : index
    %45 = vector.load %arg17[%c0_22, %c0_23] : memref<16x64xf32, #tpu.memory_space<vmem>>, vector<16x64xf32>
    %46 = arith.mulf %44, %45 : vector<16x64xf32>
    %47 = arith.addf %43, %46 : vector<16x64xf32>
    %48 = vector.extract_strided_slice %33 {offsets = [0, 256], sizes = [16, 128], strides = [1, 1]} : vector<16x512xf32> to vector<16x128xf32>
    %49 = vector.extract_strided_slice %33 {offsets = [0, 384], sizes = [16, 128], strides = [1, 1]} : vector<16x512xf32> to vector<16x128xf32>
    %50 = arith.negf %49 : vector<16x128xf32>
    %51 = math.exp %50 : vector<16x128xf32>
    %cst_24 = arith.constant 1.000000e+00 : f32
    %52 = vector.broadcast %cst_24 : f32 to vector<16x128xf32>
    %53 = arith.addf %52, %51 : vector<16x128xf32>
    %54 = arith.divf %52, %53 : vector<16x128xf32>
    %55 = arith.mulf %49, %54 : vector<16x128xf32>
    %56 = tpu.iota {dimensions = array<i32: 0>} : vector<16x1xi32>
    %57 = arith.sitofp %56 : vector<16x1xi32> to vector<16x1xf32>
    %58 = tpu.iota {dimensions = array<i32: 1>} : vector<1x16xi32>
    %59 = arith.sitofp %58 : vector<1x16xi32> to vector<1x16xf32>
    %60 = tpu.iota {dimensions = array<i32: 0>} : vector<16x16xi32>
    %61 = tpu.iota {dimensions = array<i32: 1>} : vector<16x16xi32>
    %62 = arith.cmpi sge, %60, %61 : vector<16x16xi32>
    %63 = vector.extract_strided_slice %40 {offsets = [0, 0], sizes = [16, 16], strides = [1, 1]} : vector<16x64xf32> to vector<16x16xf32>
    %64 = arith.truncf %63 : vector<16x16xf32> to vector<16x16xbf16>
    %65 = vector.extract_strided_slice %47 {offsets = [0, 0], sizes = [16, 16], strides = [1, 1]} : vector<16x64xf32> to vector<16x16xf32>
    %66 = arith.truncf %65 : vector<16x16xf32> to vector<16x16xbf16>
    %67 = vector.extract_strided_slice %48 {offsets = [0, 0], sizes = [16, 32], strides = [1, 1]} : vector<16x128xf32> to vector<16x32xf32>
    %68 = arith.truncf %67 : vector<16x32xf32> to vector<16x32xbf16>
    %cst_25 = arith.constant dense<0.000000e+00> : vector<16x16xf32>
    %69 = tpu.matmul %64, %66, %cst_25 {dimension_numbers = #tpu.dot_dimension_numbers<[1], [1], [0], [0], [0, 0, 1, 0], [], []>} : vector<16x16xbf16>, vector<16x16xbf16>, vector<16x16xf32> -> vector<16x16xf32>
    %cst_26 = arith.constant -0.0317486972 : f32
    %70 = vector.broadcast %cst_26 : f32 to vector<16x1xf32>
    %71 = arith.mulf %57, %70 : vector<16x1xf32>
    %72 = math.exp %71 : vector<16x1xf32>
    %cst_27 = arith.constant 0.0317486972 : f32
    %73 = vector.broadcast %cst_27 : f32 to vector<1x16xf32>
    %74 = arith.mulf %59, %73 : vector<1x16xf32>
    %75 = math.exp %74 : vector<1x16xf32>
    %76 = vector.broadcast %72 : vector<16x1xf32> to vector<16x16xf32>
    %77 = vector.broadcast %75 : vector<1x16xf32> to vector<16x16xf32>
    %78 = arith.mulf %76, %77 : vector<16x16xf32>
    %cst_28 = arith.constant 0.000000e+00 : f32
    %79 = vector.broadcast %cst_28 : f32 to vector<16x16xf32>
    %80 = arith.select %62, %78, %79 : vector<16x16xi1>, vector<16x16xf32>
    %81 = arith.mulf %69, %80 : vector<16x16xf32>
    %82 = arith.truncf %81 : vector<16x16xf32> to vector<16x16xbf16>
    %cst_29 = arith.constant dense<0.000000e+00> : vector<16x32xf32>
    %83 = tpu.matmul %82, %68, %cst_29 {dimension_numbers = #tpu.dot_dimension_numbers<[1], [0], [0], [1], [0, 0, 1, 1], [], []>} : vector<16x16xbf16>, vector<16x32xbf16>, vector<16x32xf32> -> vector<16x32xf32>
    %cst_30 = arith.constant dense<0.000000e+00> : vector<16xf32>
    %84 = vector.multi_reduction <add>, %83, %cst_30 [1] : vector<16x32xf32> to vector<16xf32>
    %85 = vector.shape_cast %84 : vector<16xf32> to vector<16x1xf32>
    %cst_31 = arith.constant 3.200000e+01 : f32
    %86 = vector.broadcast %cst_31 : f32 to vector<16x1xf32>
    %87 = arith.divf %85, %86 : vector<16x1xf32>
    %88 = vector.broadcast %87 : vector<16x1xf32> to vector<16x32xf32>
    %89 = arith.subf %83, %88 : vector<16x32xf32>
    %90 = arith.mulf %89, %89 : vector<16x32xf32>
    %cst_32 = arith.constant dense<0.000000e+00> : vector<16xf32>
    %91 = vector.multi_reduction <add>, %90, %cst_32 [1] : vector<16x32xf32> to vector<16xf32>
    %92 = vector.shape_cast %91 : vector<16xf32> to vector<16x1xf32>
    %cst_33 = arith.constant 3.200000e+01 : f32
    %93 = vector.broadcast %cst_33 : f32 to vector<16x1xf32>
    %94 = arith.divf %92, %93 : vector<16x1xf32>
    %95 = vector.broadcast %87 : vector<16x1xf32> to vector<16x32xf32>
    %96 = arith.subf %83, %95 : vector<16x32xf32>
    %cst_34 = arith.constant 9.99999974E-6 : f32
    %97 = vector.broadcast %cst_34 : f32 to vector<16x1xf32>
    %98 = arith.addf %94, %97 : vector<16x1xf32>
    %99 = math.rsqrt %98 : vector<16x1xf32>
    %100 = vector.broadcast %99 : vector<16x1xf32> to vector<16x32xf32>
    %101 = arith.mulf %96, %100 : vector<16x32xf32>
    %102 = vector.extract_strided_slice %40 {offsets = [0, 16], sizes = [16, 16], strides = [1, 1]} : vector<16x64xf32> to vector<16x16xf32>
    %103 = arith.truncf %102 : vector<16x16xf32> to vector<16x16xbf16>
    %104 = vector.extract_strided_slice %47 {offsets = [0, 16], sizes = [16, 16], strides = [1, 1]} : vector<16x64xf32> to vector<16x16xf32>
    %105 = arith.truncf %104 : vector<16x16xf32> to vector<16x16xbf16>
    %106 = vector.extract_strided_slice %48 {offsets = [0, 32], sizes = [16, 32], strides = [1, 1]} : vector<16x128xf32> to vector<16x32xf32>
    %107 = arith.truncf %106 : vector<16x32xf32> to vector<16x32xbf16>
    %cst_35 = arith.constant dense<0.000000e+00> : vector<16x16xf32>
    %108 = tpu.matmul %103, %105, %cst_35 {dimension_numbers = #tpu.dot_dimension_numbers<[1], [1], [0], [0], [0, 0, 1, 0], [], []>} : vector<16x16xbf16>, vector<16x16xbf16>, vector<16x16xf32> -> vector<16x16xf32>
    %cst_36 = arith.constant -0.0124791116 : f32
    %109 = vector.broadcast %cst_36 : f32 to vector<16x1xf32>
    %110 = arith.mulf %57, %109 : vector<16x1xf32>
    %111 = math.exp %110 : vector<16x1xf32>
    %cst_37 = arith.constant 0.0124791116 : f32
    %112 = vector.broadcast %cst_37 : f32 to vector<1x16xf32>
    %113 = arith.mulf %59, %112 : vector<1x16xf32>
    %114 = math.exp %113 : vector<1x16xf32>
    %115 = vector.broadcast %111 : vector<16x1xf32> to vector<16x16xf32>
    %116 = vector.broadcast %114 : vector<1x16xf32> to vector<16x16xf32>
    %117 = arith.mulf %115, %116 : vector<16x16xf32>
    %cst_38 = arith.constant 0.000000e+00 : f32
    %118 = vector.broadcast %cst_38 : f32 to vector<16x16xf32>
    %119 = arith.select %62, %117, %118 : vector<16x16xi1>, vector<16x16xf32>
    %120 = arith.mulf %108, %119 : vector<16x16xf32>
    %121 = arith.truncf %120 : vector<16x16xf32> to vector<16x16xbf16>
    %cst_39 = arith.constant dense<0.000000e+00> : vector<16x32xf32>
    %122 = tpu.matmul %121, %107, %cst_39 {dimension_numbers = #tpu.dot_dimension_numbers<[1], [0], [0], [1], [0, 0, 1, 1], [], []>} : vector<16x16xbf16>, vector<16x32xbf16>, vector<16x32xf32> -> vector<16x32xf32>
    %cst_40 = arith.constant dense<0.000000e+00> : vector<16xf32>
    %123 = vector.multi_reduction <add>, %122, %cst_40 [1] : vector<16x32xf32> to vector<16xf32>
    %124 = vector.shape_cast %123 : vector<16xf32> to vector<16x1xf32>
    %cst_41 = arith.constant 3.200000e+01 : f32
    %125 = vector.broadcast %cst_41 : f32 to vector<16x1xf32>
    %126 = arith.divf %124, %125 : vector<16x1xf32>
    %127 = vector.broadcast %126 : vector<16x1xf32> to vector<16x32xf32>
    %128 = arith.subf %122, %127 : vector<16x32xf32>
    %129 = arith.mulf %128, %128 : vector<16x32xf32>
    %cst_42 = arith.constant dense<0.000000e+00> : vector<16xf32>
    %130 = vector.multi_reduction <add>, %129, %cst_42 [1] : vector<16x32xf32> to vector<16xf32>
    %131 = vector.shape_cast %130 : vector<16xf32> to vector<16x1xf32>
    %cst_43 = arith.constant 3.200000e+01 : f32
    %132 = vector.broadcast %cst_43 : f32 to vector<16x1xf32>
    %133 = arith.divf %131, %132 : vector<16x1xf32>
    %134 = vector.broadcast %126 : vector<16x1xf32> to vector<16x32xf32>
    %135 = arith.subf %122, %134 : vector<16x32xf32>
    %cst_44 = arith.constant 9.99999974E-6 : f32
    %136 = vector.broadcast %cst_44 : f32 to vector<16x1xf32>
    %137 = arith.addf %133, %136 : vector<16x1xf32>
    %138 = math.rsqrt %137 : vector<16x1xf32>
    %139 = vector.broadcast %138 : vector<16x1xf32> to vector<16x32xf32>
    %140 = arith.mulf %135, %139 : vector<16x32xf32>
    %141 = vector.extract_strided_slice %40 {offsets = [0, 32], sizes = [16, 16], strides = [1, 1]} : vector<16x64xf32> to vector<16x16xf32>
    %142 = arith.truncf %141 : vector<16x16xf32> to vector<16x16xbf16>
    %143 = vector.extract_strided_slice %47 {offsets = [0, 32], sizes = [16, 16], strides = [1, 1]} : vector<16x64xf32> to vector<16x16xf32>
    %144 = arith.truncf %143 : vector<16x16xf32> to vector<16x16xbf16>
    %145 = vector.extract_strided_slice %48 {offsets = [0, 64], sizes = [16, 32], strides = [1, 1]} : vector<16x128xf32> to vector<16x32xf32>
    %146 = arith.truncf %145 : vector<16x32xf32> to vector<16x32xbf16>
    %cst_45 = arith.constant dense<0.000000e+00> : vector<16x16xf32>
    %147 = tpu.matmul %142, %144, %cst_45 {dimension_numbers = #tpu.dot_dimension_numbers<[1], [1], [0], [0], [0, 0, 1, 0], [], []>} : vector<16x16xbf16>, vector<16x16xbf16>, vector<16x16xf32> -> vector<16x16xf32>
    %cst_46 = arith.constant -0.00493371719 : f32
    %148 = vector.broadcast %cst_46 : f32 to vector<16x1xf32>
    %149 = arith.mulf %57, %148 : vector<16x1xf32>
    %150 = math.exp %149 : vector<16x1xf32>
    %cst_47 = arith.constant 0.00493371719 : f32
    %151 = vector.broadcast %cst_47 : f32 to vector<1x16xf32>
    %152 = arith.mulf %59, %151 : vector<1x16xf32>
    %153 = math.exp %152 : vector<1x16xf32>
    %154 = vector.broadcast %150 : vector<16x1xf32> to vector<16x16xf32>
    %155 = vector.broadcast %153 : vector<1x16xf32> to vector<16x16xf32>
    %156 = arith.mulf %154, %155 : vector<16x16xf32>
    %cst_48 = arith.constant 0.000000e+00 : f32
    %157 = vector.broadcast %cst_48 : f32 to vector<16x16xf32>
    %158 = arith.select %62, %156, %157 : vector<16x16xi1>, vector<16x16xf32>
    %159 = arith.mulf %147, %158 : vector<16x16xf32>
    %160 = arith.truncf %159 : vector<16x16xf32> to vector<16x16xbf16>
    %cst_49 = arith.constant dense<0.000000e+00> : vector<16x32xf32>
    %161 = tpu.matmul %160, %146, %cst_49 {dimension_numbers = #tpu.dot_dimension_numbers<[1], [0], [0], [1], [0, 0, 1, 1], [], []>} : vector<16x16xbf16>, vector<16x32xbf16>, vector<16x32xf32> -> vector<16x32xf32>
    %cst_50 = arith.constant dense<0.000000e+00> : vector<16xf32>
    %162 = vector.multi_reduction <add>, %161, %cst_50 [1] : vector<16x32xf32> to vector<16xf32>
    %163 = vector.shape_cast %162 : vector<16xf32> to vector<16x1xf32>
    %cst_51 = arith.constant 3.200000e+01 : f32
    %164 = vector.broadcast %cst_51 : f32 to vector<16x1xf32>
    %165 = arith.divf %163, %164 : vector<16x1xf32>
    %166 = vector.broadcast %165 : vector<16x1xf32> to vector<16x32xf32>
    %167 = arith.subf %161, %166 : vector<16x32xf32>
    %168 = arith.mulf %167, %167 : vector<16x32xf32>
    %cst_52 = arith.constant dense<0.000000e+00> : vector<16xf32>
    %169 = vector.multi_reduction <add>, %168, %cst_52 [1] : vector<16x32xf32> to vector<16xf32>
    %170 = vector.shape_cast %169 : vector<16xf32> to vector<16x1xf32>
    %cst_53 = arith.constant 3.200000e+01 : f32
    %171 = vector.broadcast %cst_53 : f32 to vector<16x1xf32>
    %172 = arith.divf %170, %171 : vector<16x1xf32>
    %173 = vector.broadcast %165 : vector<16x1xf32> to vector<16x32xf32>
    %174 = arith.subf %161, %173 : vector<16x32xf32>
    %cst_54 = arith.constant 9.99999974E-6 : f32
    %175 = vector.broadcast %cst_54 : f32 to vector<16x1xf32>
    %176 = arith.addf %172, %175 : vector<16x1xf32>
    %177 = math.rsqrt %176 : vector<16x1xf32>
    %178 = vector.broadcast %177 : vector<16x1xf32> to vector<16x32xf32>
    %179 = arith.mulf %174, %178 : vector<16x32xf32>
    %180 = vector.extract_strided_slice %40 {offsets = [0, 48], sizes = [16, 16], strides = [1, 1]} : vector<16x64xf32> to vector<16x16xf32>
    %181 = arith.truncf %180 : vector<16x16xf32> to vector<16x16xbf16>
    %182 = vector.extract_strided_slice %47 {offsets = [0, 48], sizes = [16, 16], strides = [1, 1]} : vector<16x64xf32> to vector<16x16xf32>
    %183 = arith.truncf %182 : vector<16x16xf32> to vector<16x16xbf16>
    %184 = vector.extract_strided_slice %48 {offsets = [0, 96], sizes = [16, 32], strides = [1, 1]} : vector<16x128xf32> to vector<16x32xf32>
    %185 = arith.truncf %184 : vector<16x32xf32> to vector<16x32xbf16>
    %cst_55 = arith.constant dense<0.000000e+00> : vector<16x16xf32>
    %186 = tpu.matmul %181, %183, %cst_55 {dimension_numbers = #tpu.dot_dimension_numbers<[1], [1], [0], [0], [0, 0, 1, 0], [], []>} : vector<16x16xbf16>, vector<16x16xbf16>, vector<16x16xf32> -> vector<16x16xf32>
    %cst_56 = arith.constant -0.00195503491 : f32
    %187 = vector.broadcast %cst_56 : f32 to vector<16x1xf32>
    %188 = arith.mulf %57, %187 : vector<16x1xf32>
    %189 = math.exp %188 : vector<16x1xf32>
    %cst_57 = arith.constant 0.00195503491 : f32
    %190 = vector.broadcast %cst_57 : f32 to vector<1x16xf32>
    %191 = arith.mulf %59, %190 : vector<1x16xf32>
    %192 = math.exp %191 : vector<1x16xf32>
    %193 = vector.broadcast %189 : vector<16x1xf32> to vector<16x16xf32>
    %194 = vector.broadcast %192 : vector<1x16xf32> to vector<16x16xf32>
    %195 = arith.mulf %193, %194 : vector<16x16xf32>
    %cst_58 = arith.constant 0.000000e+00 : f32
    %196 = vector.broadcast %cst_58 : f32 to vector<16x16xf32>
    %197 = arith.select %62, %195, %196 : vector<16x16xi1>, vector<16x16xf32>
    %198 = arith.mulf %186, %197 : vector<16x16xf32>
    %199 = arith.truncf %198 : vector<16x16xf32> to vector<16x16xbf16>
    %cst_59 = arith.constant dense<0.000000e+00> : vector<16x32xf32>
    %200 = tpu.matmul %199, %185, %cst_59 {dimension_numbers = #tpu.dot_dimension_numbers<[1], [0], [0], [1], [0, 0, 1, 1], [], []>} : vector<16x16xbf16>, vector<16x32xbf16>, vector<16x32xf32> -> vector<16x32xf32>
    %cst_60 = arith.constant dense<0.000000e+00> : vector<16xf32>
    %201 = vector.multi_reduction <add>, %200, %cst_60 [1] : vector<16x32xf32> to vector<16xf32>
    %202 = vector.shape_cast %201 : vector<16xf32> to vector<16x1xf32>
    %cst_61 = arith.constant 3.200000e+01 : f32
    %203 = vector.broadcast %cst_61 : f32 to vector<16x1xf32>
    %204 = arith.divf %202, %203 : vector<16x1xf32>
    %205 = vector.broadcast %204 : vector<16x1xf32> to vector<16x32xf32>
    %206 = arith.subf %200, %205 : vector<16x32xf32>
    %207 = arith.mulf %206, %206 : vector<16x32xf32>
    %cst_62 = arith.constant dense<0.000000e+00> : vector<16xf32>
    %208 = vector.multi_reduction <add>, %207, %cst_62 [1] : vector<16x32xf32> to vector<16xf32>
    %209 = vector.shape_cast %208 : vector<16xf32> to vector<16x1xf32>
    %cst_63 = arith.constant 3.200000e+01 : f32
    %210 = vector.broadcast %cst_63 : f32 to vector<16x1xf32>
    %211 = arith.divf %209, %210 : vector<16x1xf32>
    %212 = vector.broadcast %204 : vector<16x1xf32> to vector<16x32xf32>
    %213 = arith.subf %200, %212 : vector<16x32xf32>
    %cst_64 = arith.constant 9.99999974E-6 : f32
    %214 = vector.broadcast %cst_64 : f32 to vector<16x1xf32>
    %215 = arith.addf %211, %214 : vector<16x1xf32>
    %216 = math.rsqrt %215 : vector<16x1xf32>
    %217 = vector.broadcast %216 : vector<16x1xf32> to vector<16x32xf32>
    %218 = arith.mulf %213, %217 : vector<16x32xf32>
    %219 = tpu.concatenate %101, %140, %179, %218 in 1 : vector<16x32xf32>, vector<16x32xf32>, vector<16x32xf32>, vector<16x32xf32> -> vector<16x128xf32>
    %c0_65 = arith.constant 0 : index
    %c0_66 = arith.constant 0 : index
    %c0_67 = arith.constant 0 : index
    %220 = vector.load %arg6[%c0_65, %c0_66, %c0_67] : memref<1x1x128xf32, #tpu.memory_space<vmem>>, vector<1x1x128xf32>
    %221 = vector.shape_cast %220 : vector<1x1x128xf32> to vector<1x128xf32>
    %222 = vector.broadcast %221 : vector<1x128xf32> to vector<16x128xf32>
    %223 = arith.mulf %219, %222 : vector<16x128xf32>
    %c0_68 = arith.constant 0 : index
    %c0_69 = arith.constant 0 : index
    %c0_70 = arith.constant 0 : index
    %224 = vector.load %arg7[%c0_68, %c0_69, %c0_70] : memref<1x1x128xf32, #tpu.memory_space<vmem>>, vector<1x1x128xf32>
    %225 = vector.shape_cast %224 : vector<1x1x128xf32> to vector<1x128xf32>
    %226 = vector.broadcast %225 : vector<1x128xf32> to vector<16x128xf32>
    %227 = arith.addf %223, %226 : vector<16x128xf32>
    %228 = arith.mulf %55, %227 : vector<16x128xf32>
    %229 = arith.truncf %228 : vector<16x128xf32> to vector<16x128xbf16>
    %c0_71 = arith.constant 0 : index
    %c0_72 = arith.constant 0 : index
    %c0_73 = arith.constant 0 : index
    %230 = vector.load %arg5[%c0_71, %c0_72, %c0_73] : memref<1x128x64xbf16, #tpu.memory_space<vmem>>, vector<1x128x64xbf16>
    %231 = vector.shape_cast %230 : vector<1x128x64xbf16> to vector<128x64xbf16>
    %cst_74 = arith.constant dense<0.000000e+00> : vector<16x64xf32>
    %232 = tpu.matmul %229, %231, %cst_74 {dimension_numbers = #tpu.dot_dimension_numbers<[1], [0], [0], [1], [0, 0, 1, 1], [], []>} : vector<16x128xbf16>, vector<128x64xbf16>, vector<16x64xf32> -> vector<16x64xf32>
    %233 = arith.addf %232, %3 : vector<16x64xf32>
    %c0_75 = arith.constant 0 : index
    %c0_76 = arith.constant 0 : index
    %c0_77 = arith.constant 0 : index
    %234 = vector.load %arg8[%c0_75, %c0_76, %c0_77] : memref<1x1x64xf32, #tpu.memory_space<vmem>>, vector<1x1x64xf32>
    %235 = vector.shape_cast %234 : vector<1x1x64xf32> to vector<1x64xf32>
    %c0_78 = arith.constant 0 : index
    %c0_79 = arith.constant 0 : index
    %c0_80 = arith.constant 0 : index
    %236 = vector.load %arg9[%c0_78, %c0_79, %c0_80] : memref<1x1x64xf32, #tpu.memory_space<vmem>>, vector<1x1x64xf32>
    %237 = vector.shape_cast %236 : vector<1x1x64xf32> to vector<1x64xf32>
    %cst_81 = arith.constant dense<0.000000e+00> : vector<16xf32>
    %238 = vector.multi_reduction <add>, %233, %cst_81 [1] : vector<16x64xf32> to vector<16xf32>
    %239 = vector.shape_cast %238 : vector<16xf32> to vector<16x1xf32>
    %cst_82 = arith.constant 6.400000e+01 : f32
    %240 = vector.broadcast %cst_82 : f32 to vector<16x1xf32>
    %241 = arith.divf %239, %240 : vector<16x1xf32>
    %242 = vector.broadcast %241 : vector<16x1xf32> to vector<16x64xf32>
    %243 = arith.subf %233, %242 : vector<16x64xf32>
    %244 = arith.mulf %243, %243 : vector<16x64xf32>
    %cst_83 = arith.constant dense<0.000000e+00> : vector<16xf32>
    %245 = vector.multi_reduction <add>, %244, %cst_83 [1] : vector<16x64xf32> to vector<16xf32>
    %246 = vector.shape_cast %245 : vector<16xf32> to vector<16x1xf32>
    %cst_84 = arith.constant 6.400000e+01 : f32
    %247 = vector.broadcast %cst_84 : f32 to vector<16x1xf32>
    %248 = arith.divf %246, %247 : vector<16x1xf32>
    %249 = vector.broadcast %241 : vector<16x1xf32> to vector<16x64xf32>
    %250 = arith.subf %233, %249 : vector<16x64xf32>
    %cst_85 = arith.constant 9.99999974E-6 : f32
    %251 = vector.broadcast %cst_85 : f32 to vector<16x1xf32>
    %252 = arith.addf %248, %251 : vector<16x1xf32>
    %253 = math.rsqrt %252 : vector<16x1xf32>
    %254 = vector.broadcast %253 : vector<16x1xf32> to vector<16x64xf32>
    %255 = arith.mulf %250, %254 : vector<16x64xf32>
    %256 = vector.broadcast %235 : vector<1x64xf32> to vector<16x64xf32>
    %257 = arith.mulf %255, %256 : vector<16x64xf32>
    %258 = vector.broadcast %237 : vector<1x64xf32> to vector<16x64xf32>
    %259 = arith.addf %257, %258 : vector<16x64xf32>
    %260 = arith.truncf %259 : vector<16x64xf32> to vector<16x64xbf16>
    %c0_86 = arith.constant 0 : index
    %c0_87 = arith.constant 0 : index
    %c0_88 = arith.constant 0 : index
    %261 = vector.load %arg10[%c0_86, %c0_87, %c0_88] : memref<1x64x128xbf16, #tpu.memory_space<vmem>>, vector<1x64x128xbf16>
    %262 = vector.shape_cast %261 : vector<1x64x128xbf16> to vector<64x128xbf16>
    %cst_89 = arith.constant dense<0.000000e+00> : vector<16x128xf32>
    %263 = tpu.matmul %260, %262, %cst_89 {dimension_numbers = #tpu.dot_dimension_numbers<[1], [0], [0], [1], [0, 0, 1, 1], [], []>} : vector<16x64xbf16>, vector<64x128xbf16>, vector<16x128xf32> -> vector<16x128xf32>
    %c0_90 = arith.constant 0 : index
    %c0_91 = arith.constant 0 : index
    %c0_92 = arith.constant 0 : index
    %264 = vector.load %arg11[%c0_90, %c0_91, %c0_92] : memref<1x1x128xf32, #tpu.memory_space<vmem>>, vector<1x1x128xf32>
    %265 = vector.shape_cast %264 : vector<1x1x128xf32> to vector<1x128xf32>
    %266 = vector.broadcast %265 : vector<1x128xf32> to vector<16x128xf32>
    %267 = arith.addf %263, %266 : vector<16x128xf32>
    %cst_93 = arith.constant 5.000000e-01 : f32
    %268 = vector.broadcast %cst_93 : f32 to vector<16x128xf32>
    %269 = arith.mulf %268, %267 : vector<16x128xf32>
    %cst_94 = arith.constant 0.707106769 : f32
    %270 = vector.broadcast %cst_94 : f32 to vector<16x128xf32>
    %271 = arith.mulf %267, %270 : vector<16x128xf32>
    %cst_95 = arith.constant 0.000000e+00 : f32
    %272 = vector.broadcast %cst_95 : f32 to vector<16x128xf32>
    %273 = arith.cmpf olt, %271, %272 : vector<16x128xf32>
    %cst_96 = arith.constant -1.000000e+00 : f32
    %cst_97 = arith.constant 1.000000e+00 : f32
    %274 = vector.broadcast %cst_96 : f32 to vector<16x128xf32>
    %275 = vector.broadcast %cst_97 : f32 to vector<16x128xf32>
    %276 = arith.select %273, %274, %275 : vector<16x128xi1>, vector<16x128xf32>
    %277 = math.absf %271 : vector<16x128xf32>
    %cst_98 = arith.constant 0.327591091 : f32
    %278 = vector.broadcast %cst_98 : f32 to vector<16x128xf32>
    %279 = arith.mulf %278, %277 : vector<16x128xf32>
    %cst_99 = arith.constant 1.000000e+00 : f32
    %280 = vector.broadcast %cst_99 : f32 to vector<16x128xf32>
    %281 = arith.addf %280, %279 : vector<16x128xf32>
    %cst_100 = arith.constant 1.000000e+00 : f32
    %282 = vector.broadcast %cst_100 : f32 to vector<16x128xf32>
    %283 = arith.divf %282, %281 : vector<16x128xf32>
    %cst_101 = arith.constant 1.06140542 : f32
    %284 = vector.broadcast %cst_101 : f32 to vector<16x128xf32>
    %285 = arith.mulf %284, %283 : vector<16x128xf32>
    %cst_102 = arith.constant -1.45315206 : f32
    %286 = vector.broadcast %cst_102 : f32 to vector<16x128xf32>
    %287 = arith.addf %285, %286 : vector<16x128xf32>
    %288 = arith.mulf %287, %283 : vector<16x128xf32>
    %cst_103 = arith.constant 1.42141378 : f32
    %289 = vector.broadcast %cst_103 : f32 to vector<16x128xf32>
    %290 = arith.addf %288, %289 : vector<16x128xf32>
    %291 = arith.mulf %290, %283 : vector<16x128xf32>
    %cst_104 = arith.constant -0.284496725 : f32
    %292 = vector.broadcast %cst_104 : f32 to vector<16x128xf32>
    %293 = arith.addf %291, %292 : vector<16x128xf32>
    %294 = arith.mulf %293, %283 : vector<16x128xf32>
    %cst_105 = arith.constant 0.254829586 : f32
    %295 = vector.broadcast %cst_105 : f32 to vector<16x128xf32>
    %296 = arith.addf %294, %295 : vector<16x128xf32>
    %297 = arith.mulf %296, %283 : vector<16x128xf32>
    %cst_106 = arith.constant 0.000000e+00 : f32
    %298 = vector.broadcast %cst_106 : f32 to vector<16x128xf32>
    %299 = arith.subf %298, %277 : vector<16x128xf32>
    %300 = arith.mulf %299, %277 : vector<16x128xf32>
    %301 = math.exp %300 : vector<16x128xf32>
    %302 = arith.mulf %297, %301 : vector<16x128xf32>
    %cst_107 = arith.constant 1.000000e+00 : f32
    %303 = vector.broadcast %cst_107 : f32 to vector<16x128xf32>
    %304 = arith.subf %303, %302 : vector<16x128xf32>
    %305 = arith.mulf %276, %304 : vector<16x128xf32>
    %cst_108 = arith.constant 1.000000e+00 : f32
    %306 = vector.broadcast %cst_108 : f32 to vector<16x128xf32>
    %307 = arith.addf %306, %305 : vector<16x128xf32>
    %308 = arith.mulf %269, %307 : vector<16x128xf32>
    %309 = arith.truncf %308 : vector<16x128xf32> to vector<16x128xbf16>
    %c0_109 = arith.constant 0 : index
    %c0_110 = arith.constant 0 : index
    %c0_111 = arith.constant 0 : index
    %310 = vector.load %arg12[%c0_109, %c0_110, %c0_111] : memref<1x128x64xbf16, #tpu.memory_space<vmem>>, vector<1x128x64xbf16>
    %311 = vector.shape_cast %310 : vector<1x128x64xbf16> to vector<128x64xbf16>
    %cst_112 = arith.constant dense<0.000000e+00> : vector<16x64xf32>
    %312 = tpu.matmul %309, %311, %cst_112 {dimension_numbers = #tpu.dot_dimension_numbers<[1], [0], [0], [1], [0, 0, 1, 1], [], []>} : vector<16x128xbf16>, vector<128x64xbf16>, vector<16x64xf32> -> vector<16x64xf32>
    %c0_113 = arith.constant 0 : index
    %c0_114 = arith.constant 0 : index
    %c0_115 = arith.constant 0 : index
    %313 = vector.load %arg13[%c0_113, %c0_114, %c0_115] : memref<1x1x64xf32, #tpu.memory_space<vmem>>, vector<1x1x64xf32>
    %314 = vector.shape_cast %313 : vector<1x1x64xf32> to vector<1x64xf32>
    %315 = vector.broadcast %314 : vector<1x64xf32> to vector<16x64xf32>
    %316 = arith.addf %312, %315 : vector<16x64xf32>
    %317 = arith.addf %316, %233 : vector<16x64xf32>
    %c0_116 = arith.constant 0 : index
    %c0_117 = arith.constant 0 : index
    %318 = vector.load %arg23[%c0_116, %c0_117] : memref<16x64xf32, #tpu.memory_space<vmem>>, vector<16x64xf32>
    tpu.vector_store %arg23[%c0_116, %c0_117], %317 {strides = array<i32>} : memref<16x64xf32, #tpu.memory_space<vmem>>, vector<16x64xf32>,
    %c1_i32 = arith.constant 1 : i32
    %319 = arith.cmpi eq, %arg0, %c1_i32 : i32
    %320 = arith.extui %319 : i1 to i32
    %c0_i32_118 = arith.constant 0 : i32
    %321 = arith.cmpi ne, %320, %c0_i32_118 : i32
    scf.if %321 {
      %322 = arith.truncf %317 : vector<16x64xf32> to vector<16x64xbf16>
      %c0_119 = arith.constant 0 : index
      %c0_120 = arith.constant 0 : index
      %323 = vector.load %arg18[%c0_119, %c0_120] : memref<64x128xbf16, #tpu.memory_space<vmem>>, vector<64x128xbf16>
      %cst_121 = arith.constant dense<0.000000e+00> : vector<16x128xf32>
      %324 = tpu.matmul %322, %323, %cst_121 {dimension_numbers = #tpu.dot_dimension_numbers<[1], [0], [0], [1], [0, 0, 1, 1], [], []>} : vector<16x64xbf16>, vector<64x128xbf16>, vector<16x128xf32> -> vector<16x128xf32>
      %c0_122 = arith.constant 0 : index
      %c0_123 = arith.constant 0 : index
      %325 = vector.load %arg19[%c0_122, %c0_123] : memref<1x128xf32, #tpu.memory_space<vmem>>, vector<1x128xf32>
      %326 = vector.broadcast %325 : vector<1x128xf32> to vector<16x128xf32>
      %327 = arith.addf %324, %326 : vector<16x128xf32>
      %328 = arith.truncf %327 : vector<16x128xf32> to vector<16x128xbf16>
      %c0_124 = arith.constant 0 : index
      %c0_125 = arith.constant 0 : index
      %329 = vector.load %arg20[%c0_124, %c0_125] : memref<128x1xbf16, #tpu.memory_space<vmem>>, vector<128x1xbf16>
      %cst_126 = arith.constant dense<0.000000e+00> : vector<16x1xf32>
      %330 = tpu.matmul %328, %329, %cst_126 {dimension_numbers = #tpu.dot_dimension_numbers<[1], [0], [0], [1], [0, 0, 1, 1], [], []>} : vector<16x128xbf16>, vector<128x1xbf16>, vector<16x1xf32> -> vector<16x1xf32>
      %c0_127 = arith.constant 0 : index
      %c0_128 = arith.constant 0 : index
      %331 = vector.load %arg21[%c0_127, %c0_128] : memref<1x1xf32, #tpu.memory_space<vmem>>, vector<1x1xf32>
      %332 = vector.broadcast %331 : vector<1x1xf32> to vector<16x1xf32>
      %333 = arith.addf %330, %332 : vector<16x1xf32>
      %c0_129 = arith.constant 0 : index
      %c0_130 = arith.constant 0 : index
      %334 = vector.load %arg22[%c0_129, %c0_130] : memref<16x1xf32, #tpu.memory_space<vmem>>, vector<16x1xf32>
      tpu.vector_store %arg22[%c0_129, %c0_130], %333 {strides = array<i32>} : memref<16x1xf32, #tpu.memory_space<vmem>>, vector<16x1xf32>,
    } else {
    }
    return
  }
  func.func @transform_0(%arg0: i32) -> (i32, i32) {
    %c0_i32 = arith.constant 0 : i32
    %c0_i32_0 = arith.constant 0 : i32
    %c0_i32_1 = arith.constant 0 : i32
    return %c0_i32, %c0_i32_0 : i32, i32
  }
  func.func @transform_1(%arg0: i32) -> (i32, i32, i32) {
    %c0_i32 = arith.constant 0 : i32
    %c0_i32_0 = arith.constant 0 : i32
    %c0_i32_1 = arith.constant 0 : i32
    return %arg0, %c0_i32, %c0_i32_0 : i32, i32, i32
  }
  func.func @transform_2(%arg0: i32) -> (i32, i32, i32) {
    %c0_i32 = arith.constant 0 : i32
    %c0_i32_0 = arith.constant 0 : i32
    %c0_i32_1 = arith.constant 0 : i32
    return %arg0, %c0_i32, %c0_i32_0 : i32, i32, i32
  }
  func.func @transform_3(%arg0: i32) -> (i32, i32, i32) {
    %c0_i32 = arith.constant 0 : i32
    %c0_i32_0 = arith.constant 0 : i32
    %c0_i32_1 = arith.constant 0 : i32
    return %arg0, %c0_i32, %c0_i32_0 : i32, i32, i32
  }
  func.func @transform_4(%arg0: i32) -> (i32, i32, i32) {
    %c0_i32 = arith.constant 0 : i32
    %c0_i32_0 = arith.constant 0 : i32
    %c0_i32_1 = arith.constant 0 : i32
    return %arg0, %c0_i32, %c0_i32_0 : i32, i32, i32
  }
  func.func @transform_5(%arg0: i32) -> (i32, i32, i32) {
    %c0_i32 = arith.constant 0 : i32
    %c0_i32_0 = arith.constant 0 : i32
    %c0_i32_1 = arith.constant 0 : i32
    return %arg0, %c0_i32, %c0_i32_0 : i32, i32, i32
  }
  func.func @transform_6(%arg0: i32) -> (i32, i32, i32) {
    %c0_i32 = arith.constant 0 : i32
    %c0_i32_0 = arith.constant 0 : i32
    %c0_i32_1 = arith.constant 0 : i32
    return %arg0, %c0_i32, %c0_i32_0 : i32, i32, i32
  }
  func.func @transform_7(%arg0: i32) -> (i32, i32, i32) {
    %c0_i32 = arith.constant 0 : i32
    %c0_i32_0 = arith.constant 0 : i32
    %c0_i32_1 = arith.constant 0 : i32
    return %arg0, %c0_i32, %c0_i32_0 : i32, i32, i32
  }
  func.func @transform_8(%arg0: i32) -> (i32, i32, i32) {
    %c0_i32 = arith.constant 0 : i32
    %c0_i32_0 = arith.constant 0 : i32
    %c0_i32_1 = arith.constant 0 : i32
    return %arg0, %c0_i32, %c0_i32_0 : i32, i32, i32
  }
  func.func @transform_9(%arg0: i32) -> (i32, i32, i32) {
    %c0_i32 = arith.constant 0 : i32
    %c0_i32_0 = arith.constant 0 : i32
    %c0_i32_1 = arith.constant 0 : i32
    return %arg0, %c0_i32, %c0_i32_0 : i32, i32, i32
  }
  func.func @transform_10(%arg0: i32) -> (i32, i32, i32) {
    %c0_i32 = arith.constant 0 : i32
    %c0_i32_0 = arith.constant 0 : i32
    %c0_i32_1 = arith.constant 0 : i32
    return %arg0, %c0_i32, %c0_i32_0 : i32, i32, i32
  }
  func.func @transform_11(%arg0: i32) -> (i32, i32, i32) {
    %c0_i32 = arith.constant 0 : i32
    %c0_i32_0 = arith.constant 0 : i32
    %c0_i32_1 = arith.constant 0 : i32
    return %arg0, %c0_i32, %c0_i32_0 : i32, i32, i32
  }
  func.func @transform_12(%arg0: i32) -> (i32, i32, i32) {
    %c0_i32 = arith.constant 0 : i32
    %c0_i32_0 = arith.constant 0 : i32
    %c0_i32_1 = arith.constant 0 : i32
    return %arg0, %c0_i32, %c0_i32_0 : i32, i32, i32
  }
  func.func @transform_13(%arg0: i32) -> (i32, i32) {
    %c0_i32 = arith.constant 0 : i32
    %c0_i32_0 = arith.constant 0 : i32
    %c0_i32_1 = arith.constant 0 : i32
    return %c0_i32, %c0_i32_0 : i32, i32
  }
  func.func @transform_14(%arg0: i32) -> (i32, i32) {
    %c0_i32 = arith.constant 0 : i32
    %c0_i32_0 = arith.constant 0 : i32
    %c0_i32_1 = arith.constant 0 : i32
    return %c0_i32, %c0_i32_0 : i32, i32
  }
  func.func @transform_15(%arg0: i32) -> (i32, i32) {
    %c0_i32 = arith.constant 0 : i32
    %c0_i32_0 = arith.constant 0 : i32
    %c0_i32_1 = arith.constant 0 : i32
    return %c0_i32, %c0_i32_0 : i32, i32
  }
  func.func @transform_16(%arg0: i32) -> (i32, i32) {
    %c0_i32 = arith.constant 0 : i32
    %c0_i32_0 = arith.constant 0 : i32
    %c0_i32_1 = arith.constant 0 : i32
    return %c0_i32, %c0_i32_0 : i32, i32
  }
  func.func @transform_17(%arg0: i32) -> (i32, i32) {
    %c0_i32 = arith.constant 0 : i32
    %c0_i32_0 = arith.constant 0 : i32
    %c0_i32_1 = arith.constant 0 : i32
    return %c0_i32, %c0_i32_0 : i32, i32
  }
  func.func @transform_18(%arg0: i32) -> (i32, i32) {
    %c0_i32 = arith.constant 0 : i32
    %c0_i32_0 = arith.constant 0 : i32
    %c0_i32_1 = arith.constant 0 : i32
    return %c0_i32, %c0_i32_0 : i32, i32
  }
  func.func @transform_19(%arg0: i32) -> (i32, i32) {
    %c0_i32 = arith.constant 0 : i32
    %c0_i32_0 = arith.constant 0 : i32
    %c0_i32_1 = arith.constant 0 : i32
    return %c0_i32, %c0_i32_0 : i32, i32
  }
  func.func @transform_20(%arg0: i32) -> (i32, i32) {
    %c0_i32 = arith.constant 0 : i32
    %c0_i32_0 = arith.constant 0 : i32
    %c0_i32_1 = arith.constant 0 : i32
    return %c0_i32, %c0_i32_0 : i32, i32
  }
  func.func @transform_21(%arg0: i32) -> (i32, i32) {
    %c0_i32 = arith.constant 0 : i32
    %c0_i32_0 = arith.constant 0 : i32
    %c0_i32_1 = arith.constant 0 : i32
    return %c0_i32, %c0_i32_0 : i32, i32
  }
}

</mosaic_0001>

<llo_original>
// kernel: tpu_custom_call.1
$region0: #{tpu_custom_call.1}
  #allocation0 [shape = 'u32[]', space=smem, size = 0x4, offset = 0x4, fixed_abs, tag = 'smem constant byte address 0x4 - core index']
  #allocation1 [shape = 'u32[144,128]{1,0:T(1,128)}', space=vmem, size = 0x12000, scoped, tag = 'internal scratch']
  #allocation2 [shape = 'f32[16,64]{1,0:T(8,128)}', space=vmem, size = 0x2000, scoped, tag = 'scratch operand']
  #allocation3 [shape = 'f32[1,1]{1,0:T(1,128)S(1)}', space=vmem, size = 0x200, scoped, tag = 'scoped memory for tpu_custom_call.1']
  %s0 = inlined_call_operand.hbm [shape: f32[16,64], index: 0, kind: input, shape index: {}]
  %s1 = inlined_call_operand.vmem [shape: f32[2,1,64], index: 1, kind: input, shape index: {}]
  %s2 = inlined_call_operand.vmem [shape: f32[2,1,64], index: 2, kind: input, shape index: {}]
  %s3 = inlined_call_operand.vmem [shape: bf16[2,64,512], index: 3, kind: input, shape index: {}]
  %s4 = inlined_call_operand.vmem [shape: bf16[2,128,64], index: 4, kind: input, shape index: {}]
  %s5 = inlined_call_operand.vmem [shape: f32[2,1,128], index: 5, kind: input, shape index: {}]
  %s6 = inlined_call_operand.hbm [shape: f32[2,1,128], index: 6, kind: input, shape index: {}]
  %s7 = inlined_call_operand.hbm [shape: f32[2,1,64], index: 7, kind: input, shape index: {}]
  %s8 = inlined_call_operand.hbm [shape: f32[2,1,64], index: 8, kind: input, shape index: {}]
  %s9 = inlined_call_operand.vmem [shape: bf16[2,64,128], index: 9, kind: input, shape index: {}]
  %s10 = inlined_call_operand.hbm [shape: f32[2,1,128], index: 10, kind: input, shape index: {}]
  %s11 = inlined_call_operand.vmem [shape: bf16[2,128,64], index: 11, kind: input, shape index: {}]
  %s12 = inlined_call_operand.hbm [shape: f32[2,1,64], index: 12, kind: input, shape index: {}]
  %s13 = inlined_call_operand.vmem [shape: f32[16,64], index: 13, kind: input, shape index: {}]
  %s14 = inlined_call_operand.hbm [shape: f32[16,64], index: 14, kind: input, shape index: {}]
  %s15 = inlined_call_operand.hbm [shape: f32[16,64], index: 15, kind: input, shape index: {}]
  %s16 = inlined_call_operand.hbm [shape: f32[16,64], index: 16, kind: input, shape index: {}]
  %s17 = inlined_call_operand.vmem [shape: bf16[64,128], index: 17, kind: input, shape index: {}]
  %s18 = inlined_call_operand.vmem [shape: f32[1,128], index: 18, kind: input, shape index: {}]
  %s19 = inlined_call_operand.vmem [shape: bf16[128,1], index: 19, kind: input, shape index: {}]
  %s20 = inlined_call_operand.<no memory space> [shape: f32[1,1], index: 20, kind: input, shape index: {}]
  %s21 = inlined_call_operand.vmem [shape: f32[16,1], index: 21, kind: output, shape index: {}]
  %s22 = sld [smem:[#allocation0]]
  $region161: #{tpu_custom_call.1} parent=0
    _
  %s24 = ssub.s32 1, %s22
  %s25 = scalar_select 0, %s24, %s22
  %v26 = vstv %s20
  %27 = vst [vmem:[#allocation3] sm:$0x1] %v26
  $region1: #{tpu_custom_call.1} parent=0
    #allocation4 [shape = 'u8[8192]{0}', space=vmem, size = 0x2000, scoped, tag = 'input window, operand 0, single buffered']
    #allocation5 [shape = 's32[2]{0}', space=sflag, size = 0x8, scoped, tag = 'scoped memory for tpu_custom_call.1']
    #allocation6 [shape = 'u8[1024]{0}', space=vmem, size = 0x400, scoped, tag = 'input window, operand 6']
    #allocation7 [shape = 's32[2]{0}', space=sflag, size = 0x8, scoped, tag = 'scoped memory for tpu_custom_call.1']
    #allocation8 [shape = 'u8[1024]{0}', space=vmem, size = 0x400, scoped, tag = 'input window, operand 7']
    #allocation9 [shape = 'u8[1024]{0}', space=vmem, size = 0x400, scoped, tag = 'input window, operand 8']
    #allocation10 [shape = 's32[2]{0}', space=sflag, size = 0x8, scoped, tag = 'scoped memory for tpu_custom_call.1']
    #allocation11 [shape = 'u8[1024]{0}', space=vmem, size = 0x400, scoped, tag = 'input window, operand 10']
    #allocation12 [shape = 'u8[1024]{0}', space=vmem, size = 0x400, scoped, tag = 'input window, operand 12']
    #allocation13 [shape = 's32[2]{0}', space=sflag, size = 0x8, scoped, tag = 'scoped memory for tpu_custom_call.1']
    #allocation14 [shape = 'u8[8192]{0}', space=vmem, size = 0x2000, scoped, tag = 'input window, operand 14, single buffered']
    #allocation15 [shape = 'u8[8192]{0}', space=vmem, size = 0x2000, scoped, tag = 'input window, operand 15, single buffered']
    #allocation16 [shape = 's32[1]{0}', space=sflag, size = 0x4, scoped, tag = 'scoped memory for tpu_custom_call.1']
    #allocation17 [shape = 'u8[8192]{0}', space=vmem, size = 0x2000, scoped, tag = 'input window, operand 16, single buffered']
    %28 = vsyncpa [#allocation5], 0
    %29 = vsyncpa [#allocation7], 0
    %s30 = scalar_lea.sflag [#allocation7], 1
    %31 = vsyncpa %s30, 0
    %32 = vsyncpa [#allocation10], 0
    %s33 = scalar_lea.sflag [#allocation10], 1
    %34 = vsyncpa %s33, 0
    %35 = vsyncpa [#allocation13], 0
    %s36 = scalar_lea.sflag [#allocation13], 1
    %37 = vsyncpa %s36, 0
    %38 = vsyncpa [#allocation16], 0
    loop: start=0, step=1, limit=4
    $region2: #{tpu_custom_call.1} parent=1 // loop_pre_header
      _
    $region3: #{tpu_custom_call.1} parent=1 // loop_header
      %s40 = sphi 0, %s44
      %p41 = scmp.ge.s32.totalorder %s40, 4
      %s48 = sphi 0, %s48
      %s50 = sphi 0, %s48
      %s51 = sphi 0, %s50
      %s65 = sphi 0, %s51
      %s71 = sphi 0, %s73
      %s74 = sphi 0, %s71
      %s75 = sphi 0, %s74
      %s91 = sphi 0, %s75
      %s97 = sphi 0, %s99
      %s100 = sphi 0, %s97
      %s101 = sphi 0, %s100
      %s117 = sphi 0, %s101
      %s123 = sphi 0, %s125
      %s126 = sphi 0, %s123
      %s127 = sphi 0, %s126
      %s143 = sphi 0, %s127
      %s149 = sphi 0, %s151
      %s152 = sphi 0, %s149
      %s153 = sphi 0, %s152
      %s169 = sphi 0, %s153
      %s175 = sphi 0, %s177
      %s178 = sphi 0, %s175
      %s179 = sphi 0, %s178
      %s195 = sphi 0, %s179
      %s201 = sphi 0, %s203
      %s204 = sphi 0, %s201
      %s205 = sphi 0, %s204
      %s221 = sphi 0, %s205
      %s227 = sphi 0, %s229
      %s230 = sphi 0, %s227
      %s231 = sphi 0, %s230
      %s247 = sphi 0, %s231
      %s253 = sphi 0, %s255
      %s256 = sphi 0, %s253
      %s257 = sphi 0, %s256
      %s273 = sphi 0, %s257
      %s279 = sphi 0, %s281
      %s282 = sphi 0, %s279
      %s283 = sphi 0, %s282
      %s299 = sphi 0, %s283
      %s305 = sphi 0, %s307
      %s308 = sphi 0, %s305
      %s309 = sphi 0, %s308
      %s325 = sphi 0, %s309
      %s331 = sphi 0, %s333
      %s334 = sphi 0, %s331
      %s335 = sphi 0, %s334
      %s351 = sphi 0, %s335
      %s357 = sphi 0, %s359
      %s360 = sphi 0, %s357
      %s361 = sphi 0, %s360
      %s377 = sphi 0, %s361
      %s381 = sphi 0, %s381
      %s383 = sphi 0, %s381
      %s384 = sphi 0, %s383
      %s398 = sphi 0, %s384
      %s402 = sphi 0, %s402
      %s404 = sphi 0, %s402
      %s405 = sphi 0, %s404
      %s419 = sphi 0, %s405
      %s423 = sphi 0, %s423
      %s425 = sphi 0, %s423
      %s426 = sphi 0, %s425
      %s440 = sphi 0, %s426
      %s444 = sphi 0, %s444
      %s446 = sphi 0, %s444
      %s447 = sphi 0, %s446
      %s461 = sphi 0, %s447
      %s465 = sphi 0, %s465
      %s467 = sphi 0, %s465
      %s468 = sphi 0, %s467
      %s482 = sphi 0, %s468
      %s486 = sphi 0, %s486
      %s488 = sphi 0, %s486
      %s489 = sphi 0, %s488
      %s503 = sphi 0, %s489
      %s507 = sphi 0, %s507
      %s509 = sphi 0, %s507
      %s510 = sphi 0, %s509
      %s524 = sphi 0, %s510
      %s528 = sphi 0, %s528
      %s530 = sphi 0, %s528
      %s531 = sphi 0, %s530
      %s545 = sphi 0, %s531
      %s549 = sphi 0, %s549
      %s551 = sphi 0, %s549
      %s552 = sphi 0, %s551
      %s566 = sphi 0, %s552
    $region4: #{tpu_custom_call.1} parent=1 // loop_header_branch
      %43 = sbr.rel (%p41) target = $region8
    $region5: #{tpu_custom_call.1} parent=1 // loop_body
      %s45 = ssub.s32 %s40, 1
      %s46 = ssub.s32 %s40, 2
      %s47 = sadd.s32 %s40, 1
      %s49 = sadd.s32 %s48, 1
      %p52 = scmp.eq.s32.totalorder %s40, 1
      %p53 = scmp.ne.s32.totalorder %s48, %s50
      %p54 = scmp.eq.s32.totalorder %s40, 0
      %p55 = por %p53, %p54
      %p56 = scmp.ne.s32.totalorder %s48, %s50
      %p57 = scmp.eq.s32.totalorder %s45, 1
      %p58 = por %p56, %p57
      %p59 = scmp.ne.s32.totalorder %s50, %s51
      %p60 = scmp.eq.s32.totalorder %s45, 0
      %p61 = por %p59, %p60
      %p62 = scmp.ne.s32.totalorder %s50, %s51
      %p63 = scmp.eq.s32.totalorder %s46, 1
      %p64 = por %p62, %p63
      %p66 = scmp.ne.s32.totalorder %s51, %s65
      %p67 = scmp.eq.s32.totalorder %s46, 0
      %p68 = por %p66, %p67
      %s69 = ssub.s32 %s40, %s47
      %p70 = scmp.eq.s32.totalorder %s69, 0
      %s72 = sadd.s32 %s71, 1
      %s73 = scalar_select %p70, %s71, %s72
      %p76 = pneg %p70
      %p77 = scmp.eq.s32.totalorder %s40, 1
      %p78 = por %p76, %p77
      %p79 = scmp.ne.s32.totalorder %s71, %s74
      %p80 = scmp.eq.s32.totalorder %s40, 0
      %p81 = por %p79, %p80
      %p82 = scmp.ne.s32.totalorder %s71, %s74
      %p83 = scmp.eq.s32.totalorder %s45, 1
      %p84 = por %p82, %p83
      %p85 = scmp.ne.s32.totalorder %s74, %s75
      %p86 = scmp.eq.s32.totalorder %s45, 0
      %p87 = por %p85, %p86
      %p88 = scmp.ne.s32.totalorder %s74, %s75
      %p89 = scmp.eq.s32.totalorder %s46, 1
      %p90 = por %p88, %p89
      %p92 = scmp.ne.s32.totalorder %s75, %s91
      %p93 = scmp.eq.s32.totalorder %s46, 0
      %p94 = por %p92, %p93
      %s95 = ssub.s32 %s40, %s47
      %p96 = scmp.eq.s32.totalorder %s95, 0
      %s98 = sadd.s32 %s97, 1
      %s99 = scalar_select %p96, %s97, %s98
      %p102 = pneg %p96
      %p103 = scmp.eq.s32.totalorder %s40, 1
      %p104 = por %p102, %p103
      %p105 = scmp.ne.s32.totalorder %s97, %s100
      %p106 = scmp.eq.s32.totalorder %s40, 0
      %p107 = por %p105, %p106
      %p108 = scmp.ne.s32.totalorder %s97, %s100
      %p109 = scmp.eq.s32.totalorder %s45, 1
      %p110 = por %p108, %p109
      %p111 = scmp.ne.s32.totalorder %s100, %s101
      %p112 = scmp.eq.s32.totalorder %s45, 0
      %p113 = por %p111, %p112
      %p114 = scmp.ne.s32.totalorder %s100, %s101
      %p115 = scmp.eq.s32.totalorder %s46, 1
      %p116 = por %p114, %p115
      %p118 = scmp.ne.s32.totalorder %s101, %s117
      %p119 = scmp.eq.s32.totalorder %s46, 0
      %p120 = por %p118, %p119
      %s121 = ssub.s32 %s40, %s47
      %p122 = scmp.eq.s32.totalorder %s121, 0
      %s124 = sadd.s32 %s123, 1
      %s125 = scalar_select %p122, %s123, %s124
      %p128 = pneg %p122
      %p129 = scmp.eq.s32.totalorder %s40, 1
      %p130 = por %p128, %p129
      %p131 = scmp.ne.s32.totalorder %s123, %s126
      %p132 = scmp.eq.s32.totalorder %s40, 0
      %p133 = por %p131, %p132
      %p134 = scmp.ne.s32.totalorder %s123, %s126
      %p135 = scmp.eq.s32.totalorder %s45, 1
      %p136 = por %p134, %p135
      %p137 = scmp.ne.s32.totalorder %s126, %s127
      %p138 = scmp.eq.s32.totalorder %s45, 0
      %p139 = por %p137, %p138
      %p140 = scmp.ne.s32.totalorder %s126, %s127
      %p141 = scmp.eq.s32.totalorder %s46, 1
      %p142 = por %p140, %p141
      %p144 = scmp.ne.s32.totalorder %s127, %s143
      %p145 = scmp.eq.s32.totalorder %s46, 0
      %p146 = por %p144, %p145
      %s147 = ssub.s32 %s40, %s47
      %p148 = scmp.eq.s32.totalorder %s147, 0
      %s150 = sadd.s32 %s149, 1
      %s151 = scalar_select %p148, %s149, %s150
      %p154 = pneg %p148
      %p155 = scmp.eq.s32.totalorder %s40, 1
      %p156 = por %p154, %p155
      %p157 = scmp.ne.s32.totalorder %s149, %s152
      %p158 = scmp.eq.s32.totalorder %s40, 0
      %p159 = por %p157, %p158
      %p160 = scmp.ne.s32.totalorder %s149, %s152
      %p161 = scmp.eq.s32.totalorder %s45, 1
      %p162 = por %p160, %p161
      %p163 = scmp.ne.s32.totalorder %s152, %s153
      %p164 = scmp.eq.s32.totalorder %s45, 0
      %p165 = por %p163, %p164
      %p166 = scmp.ne.s32.totalorder %s152, %s153
      %p167 = scmp.eq.s32.totalorder %s46, 1
      %p168 = por %p166, %p167
      %p170 = scmp.ne.s32.totalorder %s153, %s169
      %p171 = scmp.eq.s32.totalorder %s46, 0
      %p172 = por %p170, %p171
      %s173 = ssub.s32 %s40, %s47
      %p174 = scmp.eq.s32.totalorder %s173, 0
      %s176 = sadd.s32 %s175, 1
      %s177 = scalar_select %p174, %s175, %s176
      %p180 = pneg %p174
      %p181 = scmp.eq.s32.totalorder %s40, 1
      %p182 = por %p180, %p181
      %p183 = scmp.ne.s32.totalorder %s175, %s178
      %p184 = scmp.eq.s32.totalorder %s40, 0
      %p185 = por %p183, %p184
      %p186 = scmp.ne.s32.totalorder %s175, %s178
      %p187 = scmp.eq.s32.totalorder %s45, 1
      %p188 = por %p186, %p187
      %p189 = scmp.ne.s32.totalorder %s178, %s179
      %p190 = scmp.eq.s32.totalorder %s45, 0
      %p191 = por %p189, %p190
      %p192 = scmp.ne.s32.totalorder %s178, %s179
      %p193 = scmp.eq.s32.totalorder %s46, 1
      %p194 = por %p192, %p193
      %p196 = scmp.ne.s32.totalorder %s179, %s195
      %p197 = scmp.eq.s32.totalorder %s46, 0
      %p198 = por %p196, %p197
      %s199 = ssub.s32 %s40, %s47
      %p200 = scmp.eq.s32.totalorder %s199, 0
      %s202 = sadd.s32 %s201, 1
      %s203 = scalar_select %p200, %s201, %s202
      %p206 = pneg %p200
      %p207 = scmp.eq.s32.totalorder %s40, 1
      %p208 = por %p206, %p207
      %p209 = scmp.ne.s32.totalorder %s201, %s204
      %p210 = scmp.eq.s32.totalorder %s40, 0
      %p211 = por %p209, %p210
      %p212 = scmp.ne.s32.totalorder %s201, %s204
      %p213 = scmp.eq.s32.totalorder %s45, 1
      %p214 = por %p212, %p213
      %p215 = scmp.ne.s32.totalorder %s204, %s205
      %p216 = scmp.eq.s32.totalorder %s45, 0
      %p217 = por %p215, %p216
      %p218 = scmp.ne.s32.totalorder %s204, %s205
      %p219 = scmp.eq.s32.totalorder %s46, 1
      %p220 = por %p218, %p219
      %p222 = scmp.ne.s32.totalorder %s205, %s221
      %p223 = scmp.eq.s32.totalorder %s46, 0
      %p224 = por %p222, %p223
      %s225 = ssub.s32 %s40, %s47
      %p226 = scmp.eq.s32.totalorder %s225, 0
      %s228 = sadd.s32 %s227, 1
      %s229 = scalar_select %p226, %s227, %s228
      %p232 = pneg %p226
      %p233 = scmp.eq.s32.totalorder %s40, 1
      %p234 = por %p232, %p233
      %p235 = scmp.ne.s32.totalorder %s227, %s230
      %p236 = scmp.eq.s32.totalorder %s40, 0
      %p237 = por %p235, %p236
      %p238 = scmp.ne.s32.totalorder %s227, %s230
      %p239 = scmp.eq.s32.totalorder %s45, 1
      %p240 = por %p238, %p239
      %p241 = scmp.ne.s32.totalorder %s230, %s231
      %p242 = scmp.eq.s32.totalorder %s45, 0
      %p243 = por %p241, %p242
      %p244 = scmp.ne.s32.totalorder %s230, %s231
      %p245 = scmp.eq.s32.totalorder %s46, 1
      %p246 = por %p244, %p245
      %p248 = scmp.ne.s32.totalorder %s231, %s247
      %p249 = scmp.eq.s32.totalorder %s46, 0
      %p250 = por %p248, %p249
      %s251 = ssub.s32 %s40, %s47
      %p252 = scmp.eq.s32.totalorder %s251, 0
      %s254 = sadd.s32 %s253, 1
      %s255 = scalar_select %p252, %s253, %s254
      %p258 = pneg %p252
      %p259 = scmp.eq.s32.totalorder %s40, 1
      %p260 = por %p258, %p259
      %p261 = scmp.ne.s32.totalorder %s253, %s256
      %p262 = scmp.eq.s32.totalorder %s40, 0
      %p263 = por %p261, %p262
      %p264 = scmp.ne.s32.totalorder %s253, %s256
      %p265 = scmp.eq.s32.totalorder %s45, 1
      %p266 = por %p264, %p265
      %p267 = scmp.ne.s32.totalorder %s256, %s257
      %p268 = scmp.eq.s32.totalorder %s45, 0
      %p269 = por %p267, %p268
      %p270 = scmp.ne.s32.totalorder %s256, %s257
      %p271 = scmp.eq.s32.totalorder %s46, 1
      %p272 = por %p270, %p271
      %p274 = scmp.ne.s32.totalorder %s257, %s273
      %p275 = scmp.eq.s32.totalorder %s46, 0
      %p276 = por %p274, %p275
      %s277 = ssub.s32 %s40, %s47
      %p278 = scmp.eq.s32.totalorder %s277, 0
      %s280 = sadd.s32 %s279, 1
      %s281 = scalar_select %p278, %s279, %s280
      %p284 = pneg %p278
      %p285 = scmp.eq.s32.totalorder %s40, 1
      %p286 = por %p284, %p285
      %p287 = scmp.ne.s32.totalorder %s279, %s282
      %p288 = scmp.eq.s32.totalorder %s40, 0
      %p289 = por %p287, %p288
      %p290 = scmp.ne.s32.totalorder %s279, %s282
      %p291 = scmp.eq.s32.totalorder %s45, 1
      %p292 = por %p290, %p291
      %p293 = scmp.ne.s32.totalorder %s282, %s283
      %p294 = scmp.eq.s32.totalorder %s45, 0
      %p295 = por %p293, %p294
      %p296 = scmp.ne.s32.totalorder %s282, %s283
      %p297 = scmp.eq.s32.totalorder %s46, 1
      %p298 = por %p296, %p297
      %p300 = scmp.ne.s32.totalorder %s283, %s299
      %p301 = scmp.eq.s32.totalorder %s46, 0
      %p302 = por %p300, %p301
      %s303 = ssub.s32 %s40, %s47
      %p304 = scmp.eq.s32.totalorder %s303, 0
      %s306 = sadd.s32 %s305, 1
      %s307 = scalar_select %p304, %s305, %s306
      %p310 = pneg %p304
      %p311 = scmp.eq.s32.totalorder %s40, 1
      %p312 = por %p310, %p311
      %p313 = scmp.ne.s32.totalorder %s305, %s308
      %p314 = scmp.eq.s32.totalorder %s40, 0
      %p315 = por %p313, %p314
      %p316 = scmp.ne.s32.totalorder %s305, %s308
      %p317 = scmp.eq.s32.totalorder %s45, 1
      %p318 = por %p316, %p317
      %p319 = scmp.ne.s32.totalorder %s308, %s309
      %p320 = scmp.eq.s32.totalorder %s45, 0
      %p321 = por %p319, %p320
      %p322 = scmp.ne.s32.totalorder %s308, %s309
      %p323 = scmp.eq.s32.totalorder %s46, 1
      %p324 = por %p322, %p323
      %p326 = scmp.ne.s32.totalorder %s309, %s325
      %p327 = scmp.eq.s32.totalorder %s46, 0
      %p328 = por %p326, %p327
      %s329 = ssub.s32 %s40, %s47
      %p330 = scmp.eq.s32.totalorder %s329, 0
      %s332 = sadd.s32 %s331, 1
      %s333 = scalar_select %p330, %s331, %s332
      %p336 = pneg %p330
      %p337 = scmp.eq.s32.totalorder %s40, 1
      %p338 = por %p336, %p337
      %p339 = scmp.ne.s32.totalorder %s331, %s334
      %p340 = scmp.eq.s32.totalorder %s40, 0
      %p341 = por %p339, %p340
      %p342 = scmp.ne.s32.totalorder %s331, %s334
      %p343 = scmp.eq.s32.totalorder %s45, 1
      %p344 = por %p342, %p343
      %p345 = scmp.ne.s32.totalorder %s334, %s335
      %p346 = scmp.eq.s32.totalorder %s45, 0
      %p347 = por %p345, %p346
      %p348 = scmp.ne.s32.totalorder %s334, %s335
      %p349 = scmp.eq.s32.totalorder %s46, 1
      %p350 = por %p348, %p349
      %p352 = scmp.ne.s32.totalorder %s335, %s351
      %p353 = scmp.eq.s32.totalorder %s46, 0
      %p354 = por %p352, %p353
      %s355 = ssub.s32 %s40, %s47
      %p356 = scmp.eq.s32.totalorder %s355, 0
      %s358 = sadd.s32 %s357, 1
      %s359 = scalar_select %p356, %s357, %s358
      %p362 = pneg %p356
      %p363 = scmp.eq.s32.totalorder %s40, 1
      %p364 = por %p362, %p363
      %p365 = scmp.ne.s32.totalorder %s357, %s360
      %p366 = scmp.eq.s32.totalorder %s40, 0
      %p367 = por %p365, %p366
      %p368 = scmp.ne.s32.totalorder %s357, %s360
      %p369 = scmp.eq.s32.totalorder %s45, 1
      %p370 = por %p368, %p369
      %p371 = scmp.ne.s32.totalorder %s360, %s361
      %p372 = scmp.eq.s32.totalorder %s45, 0
      %p373 = por %p371, %p372
      %p374 = scmp.ne.s32.totalorder %s360, %s361
      %p375 = scmp.eq.s32.totalorder %s46, 1
      %p376 = por %p374, %p375
      %p378 = scmp.ne.s32.totalorder %s361, %s377
      %p379 = scmp.eq.s32.totalorder %s46, 0
      %p380 = por %p378, %p379
      %s382 = sadd.s32 %s381, 1
      %p385 = scmp.eq.s32.totalorder %s40, 1
      %p386 = scmp.ne.s32.totalorder %s381, %s383
      %p387 = scmp.eq.s32.totalorder %s40, 0
      %p388 = por %p386, %p387
      %p389 = scmp.ne.s32.totalorder %s381, %s383
      %p390 = scmp.eq.s32.totalorder %s45, 1
      %p391 = por %p389, %p390
      %p392 = scmp.ne.s32.totalorder %s383, %s384
      %p393 = scmp.eq.s32.totalorder %s45, 0
      %p394 = por %p392, %p393
      %p395 = scmp.ne.s32.totalorder %s383, %s384
      %p396 = scmp.eq.s32.totalorder %s46, 1
      %p397 = por %p395, %p396
      %p399 = scmp.ne.s32.totalorder %s384, %s398
      %p400 = scmp.eq.s32.totalorder %s46, 0
      %p401 = por %p399, %p400
      %s403 = sadd.s32 %s402, 1
      %p406 = scmp.eq.s32.totalorder %s40, 1
      %p407 = scmp.ne.s32.totalorder %s402, %s404
      %p408 = scmp.eq.s32.totalorder %s40, 0
      %p409 = por %p407, %p408
      %p410 = scmp.ne.s32.totalorder %s402, %s404
      %p411 = scmp.eq.s32.totalorder %s45, 1
      %p412 = por %p410, %p411
      %p413 = scmp.ne.s32.totalorder %s404, %s405
      %p414 = scmp.eq.s32.totalorder %s45, 0
      %p415 = por %p413, %p414
      %p416 = scmp.ne.s32.totalorder %s404, %s405
      %p417 = scmp.eq.s32.totalorder %s46, 1
      %p418 = por %p416, %p417
      %p420 = scmp.ne.s32.totalorder %s405, %s419
      %p421 = scmp.eq.s32.totalorder %s46, 0
      %p422 = por %p420, %p421
      %s424 = sadd.s32 %s423, 1
      %p427 = scmp.eq.s32.totalorder %s40, 1
      %p428 = scmp.ne.s32.totalorder %s423, %s425
      %p429 = scmp.eq.s32.totalorder %s40, 0
      %p430 = por %p428, %p429
      %p431 = scmp.ne.s32.totalorder %s423, %s425
      %p432 = scmp.eq.s32.totalorder %s45, 1
      %p433 = por %p431, %p432
      %p434 = scmp.ne.s32.totalorder %s425, %s426
      %p435 = scmp.eq.s32.totalorder %s45, 0
      %p436 = por %p434, %p435
      %p437 = scmp.ne.s32.totalorder %s425, %s426
      %p438 = scmp.eq.s32.totalorder %s46, 1
      %p439 = por %p437, %p438
      %p441 = scmp.ne.s32.totalorder %s426, %s440
      %p442 = scmp.eq.s32.totalorder %s46, 0
      %p443 = por %p441, %p442
      %s445 = sadd.s32 %s444, 1
      %p448 = scmp.eq.s32.totalorder %s40, 1
      %p449 = scmp.ne.s32.totalorder %s444, %s446
      %p450 = scmp.eq.s32.totalorder %s40, 0
      %p451 = por %p449, %p450
      %p452 = scmp.ne.s32.totalorder %s444, %s446
      %p453 = scmp.eq.s32.totalorder %s45, 1
      %p454 = por %p452, %p453
      %p455 = scmp.ne.s32.totalorder %s446, %s447
      %p456 = scmp.eq.s32.totalorder %s45, 0
      %p457 = por %p455, %p456
      %p458 = scmp.ne.s32.totalorder %s446, %s447
      %p459 = scmp.eq.s32.totalorder %s46, 1
      %p460 = por %p458, %p459
      %p462 = scmp.ne.s32.totalorder %s447, %s461
      %p463 = scmp.eq.s32.totalorder %s46, 0
      %p464 = por %p462, %p463
      %s466 = sadd.s32 %s465, 1
      %p469 = scmp.eq.s32.totalorder %s40, 1
      %p470 = scmp.ne.s32.totalorder %s465, %s467
      %p471 = scmp.eq.s32.totalorder %s40, 0
      %p472 = por %p470, %p471
      %p473 = scmp.ne.s32.totalorder %s465, %s467
      %p474 = scmp.eq.s32.totalorder %s45, 1
      %p475 = por %p473, %p474
      %p476 = scmp.ne.s32.totalorder %s467, %s468
      %p477 = scmp.eq.s32.totalorder %s45, 0
      %p478 = por %p476, %p477
      %p479 = scmp.ne.s32.totalorder %s467, %s468
      %p480 = scmp.eq.s32.totalorder %s46, 1
      %p481 = por %p479, %p480
      %p483 = scmp.ne.s32.totalorder %s468, %s482
      %p484 = scmp.eq.s32.totalorder %s46, 0
      %p485 = por %p483, %p484
      %s487 = sadd.s32 %s486, 1
      %p490 = scmp.eq.s32.totalorder %s40, 1
      %p491 = scmp.ne.s32.totalorder %s486, %s488
      %p492 = scmp.eq.s32.totalorder %s40, 0
      %p493 = por %p491, %p492
      %p494 = scmp.ne.s32.totalorder %s486, %s488
      %p495 = scmp.eq.s32.totalorder %s45, 1
      %p496 = por %p494, %p495
      %p497 = scmp.ne.s32.totalorder %s488, %s489
      %p498 = scmp.eq.s32.totalorder %s45, 0
      %p499 = por %p497, %p498
      %p500 = scmp.ne.s32.totalorder %s488, %s489
      %p501 = scmp.eq.s32.totalorder %s46, 1
      %p502 = por %p500, %p501
      %p504 = scmp.ne.s32.totalorder %s489, %s503
      %p505 = scmp.eq.s32.totalorder %s46, 0
      %p506 = por %p504, %p505
      %s508 = sadd.s32 %s507, 1
      %p511 = scmp.eq.s32.totalorder %s40, 1
      %p512 = scmp.ne.s32.totalorder %s507, %s509
      %p513 = scmp.eq.s32.totalorder %s40, 0
      %p514 = por %p512, %p513
      %p515 = scmp.ne.s32.totalorder %s507, %s509
      %p516 = scmp.eq.s32.totalorder %s45, 1
      %p517 = por %p515, %p516
      %p518 = scmp.ne.s32.totalorder %s509, %s510
      %p519 = scmp.eq.s32.totalorder %s45, 0
      %p520 = por %p518, %p519
      %p521 = scmp.ne.s32.totalorder %s509, %s510
      %p522 = scmp.eq.s32.totalorder %s46, 1
      %p523 = por %p521, %p522
      %p525 = scmp.ne.s32.totalorder %s510, %s524
      %p526 = scmp.eq.s32.totalorder %s46, 0
      %p527 = por %p525, %p526
      %s529 = sadd.s32 %s528, 1
      %p532 = scmp.eq.s32.totalorder %s40, 1
      %p533 = scmp.ne.s32.totalorder %s528, %s530
      %p534 = scmp.eq.s32.totalorder %s40, 0
      %p535 = por %p533, %p534
      %p536 = scmp.ne.s32.totalorder %s528, %s530
      %p537 = scmp.eq.s32.totalorder %s45, 1
      %p538 = por %p536, %p537
      %p539 = scmp.ne.s32.totalorder %s530, %s531
      %p540 = scmp.eq.s32.totalorder %s45, 0
      %p541 = por %p539, %p540
      %p542 = scmp.ne.s32.totalorder %s530, %s531
      %p543 = scmp.eq.s32.totalorder %s46, 1
      %p544 = por %p542, %p543
      %p546 = scmp.ne.s32.totalorder %s531, %s545
      %p547 = scmp.eq.s32.totalorder %s46, 0
      %p548 = por %p546, %p547
      %s550 = sadd.s32 %s549, 1
      %p553 = scmp.eq.s32.totalorder %s40, 1
      %p554 = scmp.ne.s32.totalorder %s549, %s551
      %p555 = scmp.eq.s32.totalorder %s40, 0
      %p556 = por %p554, %p555
      %p557 = scmp.ne.s32.totalorder %s549, %s551
      %p558 = scmp.eq.s32.totalorder %s45, 1
      %p559 = por %p557, %p558
      %p560 = scmp.ne.s32.totalorder %s551, %s552
      %p561 = scmp.eq.s32.totalorder %s45, 0
      %p562 = por %p560, %p561
      %p563 = scmp.ne.s32.totalorder %s551, %s552
      %p564 = scmp.eq.s32.totalorder %s46, 1
      %p565 = por %p563, %p564
      %p567 = scmp.ne.s32.totalorder %s552, %s566
      %p568 = scmp.eq.s32.totalorder %s46, 0
      %p569 = por %p567, %p568
      %p570 = scmp.le.s32.totalorder 1, %s40
      %p571 = scmp.lt.s32.totalorder %s40, 3
      %p572 = pnand %p570, %p571
      %p573 = pneg %p572
      // Predicated region
      $region9: #{tpu_custom_call.1} parent=5 // pred_check
        _
      $region10: #{tpu_custom_call.1} parent=5 // pred_check_branch
        %575 = sbr.rel (%p572) target = $region12
      $region11: #{tpu_custom_call.1} parent=5 // pred_region
        %s576 = ssub.s32 %s40, 1
        // Predicated region
        $region13: #{tpu_custom_call.1} parent=11 // pred_check
          %p577 = pneg %p61
        $region14: #{tpu_custom_call.1} parent=11 // pred_check_branch
          %579 = sbr.rel (%p577) target = $region16
        $region15: #{tpu_custom_call.1} parent=11 // pred_region
          %s581 = ssub.s32 256, 256
          %582 = vsyncadd [#allocation5], %s581
          %s583 = sshll.u32 [#allocation4], 4
          %s584 = int_to_ptr.vmem [resolvable:$true] %s583
          %589 = dma.hbm_to_vmem [thread:$0]  %s0, 256, %s584, [#allocation5], 128, 128, 8
        $region16: #{tpu_custom_call.1} parent=11 // pred_fallthru
          _
        // Predicated region
        $region17: #{tpu_custom_call.1} parent=11 // pred_check
          %p590 = pneg %p394
        $region18: #{tpu_custom_call.1} parent=11 // pred_check_branch
          %592 = sbr.rel (%p590) target = $region20
        $region19: #{tpu_custom_call.1} parent=11 // pred_region
          _
        $region20: #{tpu_custom_call.1} parent=11 // pred_fallthru
          _
        // Predicated region
        $region21: #{tpu_custom_call.1} parent=11 // pred_check
          %p593 = pneg %p415
        $region22: #{tpu_custom_call.1} parent=11 // pred_check_branch
          %595 = sbr.rel (%p593) target = $region24
        $region23: #{tpu_custom_call.1} parent=11 // pred_region
          %s597 = ssub.s32 256, 256
          %598 = vsyncadd [#allocation13], %s597
          %s599 = sshll.u32 [#allocation14], 4
          %s600 = int_to_ptr.vmem [resolvable:$true] %s599
          %605 = dma.hbm_to_vmem [thread:$0]  %s14, 256, %s600, [#allocation13], 128, 128, 8
        $region24: #{tpu_custom_call.1} parent=11 // pred_fallthru
          _
        // Predicated region
        $region25: #{tpu_custom_call.1} parent=11 // pred_check
          %p606 = pneg %p436
        $region26: #{tpu_custom_call.1} parent=11 // pred_check_branch
          %608 = sbr.rel (%p606) target = $region28
        $region27: #{tpu_custom_call.1} parent=11 // pred_region
          %s610 = ssub.s32 256, 256
          %611 = vsyncadd [#allocation16], %s610
          %s612 = sshll.u32 [#allocation15], 4
          %s613 = int_to_ptr.vmem [resolvable:$true] %s612
          %618 = dma.hbm_to_vmem [thread:$0]  %s15, 256, %s613, [#allocation16], 128, 128, 8
        $region28: #{tpu_custom_call.1} parent=11 // pred_fallthru
          _
        // Predicated region
        $region29: #{tpu_custom_call.1} parent=11 // pred_check
          %p619 = pneg %p457
        $region30: #{tpu_custom_call.1} parent=11 // pred_check_branch
          %621 = sbr.rel (%p619) target = $region32
        $region31: #{tpu_custom_call.1} parent=11 // pred_region
          %s623 = ssub.s32 256, 256
          %624 = vsyncadd [#allocation16], %s623
          %s625 = sshll.u32 [#allocation17], 4
          %s626 = int_to_ptr.vmem [resolvable:$true] %s625
          %631 = dma.hbm_to_vmem [thread:$0]  %s16, 256, %s626, [#allocation16], 128, 128, 8
        $region32: #{tpu_custom_call.1} parent=11 // pred_fallthru
          _
        // Predicated region
        $region33: #{tpu_custom_call.1} parent=11 // pred_check
          %p632 = pneg %p478
        $region34: #{tpu_custom_call.1} parent=11 // pred_check_branch
          %634 = sbr.rel (%p632) target = $region36
        $region35: #{tpu_custom_call.1} parent=11 // pred_region
          _
        $region36: #{tpu_custom_call.1} parent=11 // pred_fallthru
          _
        // Predicated region
        $region37: #{tpu_custom_call.1} parent=11 // pred_check
          %p635 = pneg %p499
        $region38: #{tpu_custom_call.1} parent=11 // pred_check_branch
          %637 = sbr.rel (%p635) target = $region40
        $region39: #{tpu_custom_call.1} parent=11 // pred_region
          _
        $region40: #{tpu_custom_call.1} parent=11 // pred_fallthru
          _
        // Predicated region
        $region41: #{tpu_custom_call.1} parent=11 // pred_check
          %p638 = pneg %p520
        $region42: #{tpu_custom_call.1} parent=11 // pred_check_branch
          %640 = sbr.rel (%p638) target = $region44
        $region43: #{tpu_custom_call.1} parent=11 // pred_region
          _
        $region44: #{tpu_custom_call.1} parent=11 // pred_fallthru
          _
        // Predicated region
        $region45: #{tpu_custom_call.1} parent=11 // pred_check
          %p641 = pneg %p541
        $region46: #{tpu_custom_call.1} parent=11 // pred_check_branch
          %643 = sbr.rel (%p641) target = $region48
        $region47: #{tpu_custom_call.1} parent=11 // pred_region
          _
        $region48: #{tpu_custom_call.1} parent=11 // pred_fallthru
          _
      $region12: #{tpu_custom_call.1} parent=5 // pred_fallthru
        _
      %p644 = scmp.lt.s32.totalorder %s40, 2
      // Predicated region
      $region49: #{tpu_custom_call.1} parent=5 // pred_check
        %p645 = pneg %p644
      $region50: #{tpu_custom_call.1} parent=5 // pred_check_branch
        %647 = sbr.rel (%p645) target = $region52
      $region51: #{tpu_custom_call.1} parent=5 // pred_region
        // Predicated region
        $region53: #{tpu_custom_call.1} parent=51 // pred_check
          %p648 = pneg %p81
        $region54: #{tpu_custom_call.1} parent=51 // pred_check_branch
          %650 = sbr.rel (%p648) target = $region56
        $region55: #{tpu_custom_call.1} parent=51 // pred_region
          %p651 = scmp.lt.s32.totalorder %s40, 1
          %s652 = scalar_select %p651, %s40, 1
          %s653 = scalar_lea.vmem %s1, %s652
        $region56: #{tpu_custom_call.1} parent=51 // pred_fallthru
          _
        // Predicated region
        $region57: #{tpu_custom_call.1} parent=51 // pred_check
          %p654 = pneg %p107
        $region58: #{tpu_custom_call.1} parent=51 // pred_check_branch
          %656 = sbr.rel (%p654) target = $region60
        $region59: #{tpu_custom_call.1} parent=51 // pred_region
          %p657 = scmp.lt.s32.totalorder %s40, 1
          %s658 = scalar_select %p657, %s40, 1
          %s659 = scalar_lea.vmem %s2, %s658
        $region60: #{tpu_custom_call.1} parent=51 // pred_fallthru
          _
        // Predicated region
        $region61: #{tpu_custom_call.1} parent=51 // pred_check
          %p660 = pneg %p133
        $region62: #{tpu_custom_call.1} parent=51 // pred_check_branch
          %662 = sbr.rel (%p660) target = $region64
        $region63: #{tpu_custom_call.1} parent=51 // pred_region
          %p663 = scmp.lt.s32.totalorder %s40, 1
          %s664 = scalar_select %p663, %s40, 1
          %s665 = smul.addr %s664, 32
          %s666 = smul.addr %s665, 4
          %s667 = scalar_lea.vmem %s3, %s666
        $region64: #{tpu_custom_call.1} parent=51 // pred_fallthru
          _
        // Predicated region
        $region65: #{tpu_custom_call.1} parent=51 // pred_check
          %p668 = pneg %p159
        $region66: #{tpu_custom_call.1} parent=51 // pred_check_branch
          %670 = sbr.rel (%p668) target = $region68
        $region67: #{tpu_custom_call.1} parent=51 // pred_region
          %p671 = scmp.lt.s32.totalorder %s40, 1
          %s672 = scalar_select %p671, %s40, 1
          %s673 = smul.addr %s672, 16
          %s674 = smul.addr %s673, 4
          %s675 = scalar_lea.vmem %s4, %s674
        $region68: #{tpu_custom_call.1} parent=51 // pred_fallthru
          _
        // Predicated region
        $region69: #{tpu_custom_call.1} parent=51 // pred_check
          %p676 = pneg %p185
        $region70: #{tpu_custom_call.1} parent=51 // pred_check_branch
          %678 = sbr.rel (%p676) target = $region72
        $region71: #{tpu_custom_call.1} parent=51 // pred_region
          %p679 = scmp.lt.s32.totalorder %s40, 1
          %s680 = scalar_select %p679, %s40, 1
          %s681 = scalar_lea.vmem %s5, %s680
        $region72: #{tpu_custom_call.1} parent=51 // pred_fallthru
          _
        // Predicated region
        $region73: #{tpu_custom_call.1} parent=51 // pred_check
          %p682 = pneg %p211
        $region74: #{tpu_custom_call.1} parent=51 // pred_check_branch
          %684 = sbr.rel (%p682) target = $region76
        $region75: #{tpu_custom_call.1} parent=51 // pred_region
          %s685 = sand.u32 %s40, 1
          %s686 = scalar_lea.sflag [#allocation7], %s685
          %s687 = sand.u32 %s201, 1
          %s688 = scalar_lea.vmem [#allocation6], %s687
          %s690 = ssub.s32 16, 16
          %691 = vsyncadd %s686, %s690
          %s692 = smul.addr %s40, 16
          %s693 = scalar_lea.hbm %s6, %s692
          %s695 = sshll.u32 %s688, 4
          %s696 = int_to_ptr.vmem [resolvable:$true] %s695
          %698 = dma.hbm_to_vmem [thread:$0]  %s693, 16, %s696, %s686
        $region76: #{tpu_custom_call.1} parent=51 // pred_fallthru
          _
        // Predicated region
        $region77: #{tpu_custom_call.1} parent=51 // pred_check
          %p699 = pneg %p237
        $region78: #{tpu_custom_call.1} parent=51 // pred_check_branch
          %701 = sbr.rel (%p699) target = $region80
        $region79: #{tpu_custom_call.1} parent=51 // pred_region
          %s702 = sand.u32 %s40, 1
          %s703 = scalar_lea.sflag [#allocation7], %s702
          %s704 = sand.u32 %s227, 1
          %s705 = scalar_lea.vmem [#allocation8], %s704
          %s707 = ssub.s32 16, 16
          %708 = vsyncadd %s703, %s707
          %s709 = smul.addr %s40, 16
          %s710 = scalar_lea.hbm %s7, %s709
          %s712 = sshll.u32 %s705, 4
          %s713 = int_to_ptr.vmem [resolvable:$true] %s712
          %715 = dma.hbm_to_vmem [thread:$0]  %s710, 16, %s713, %s703
        $region80: #{tpu_custom_call.1} parent=51 // pred_fallthru
          _
        // Predicated region
        $region81: #{tpu_custom_call.1} parent=51 // pred_check
          %p716 = pneg %p263
        $region82: #{tpu_custom_call.1} parent=51 // pred_check_branch
          %718 = sbr.rel (%p716) target = $region84
        $region83: #{tpu_custom_call.1} parent=51 // pred_region
          %s719 = sand.u32 %s40, 1
          %s720 = scalar_lea.sflag [#allocation10], %s719
          %s721 = sand.u32 %s253, 1
          %s722 = scalar_lea.vmem [#allocation9], %s721
          %s724 = ssub.s32 16, 16
          %725 = vsyncadd %s720, %s724
          %s726 = smul.addr %s40, 16
          %s727 = scalar_lea.hbm %s8, %s726
          %s729 = sshll.u32 %s722, 4
          %s730 = int_to_ptr.vmem [resolvable:$true] %s729
          %732 = dma.hbm_to_vmem [thread:$0]  %s727, 16, %s730, %s720
        $region84: #{tpu_custom_call.1} parent=51 // pred_fallthru
          _
        // Predicated region
        $region85: #{tpu_custom_call.1} parent=51 // pred_check
          %p733 = pneg %p289
        $region86: #{tpu_custom_call.1} parent=51 // pred_check_branch
          %735 = sbr.rel (%p733) target = $region88
        $region87: #{tpu_custom_call.1} parent=51 // pred_region
          %p736 = scmp.lt.s32.totalorder %s40, 1
          %s737 = scalar_select %p736, %s40, 1
          %s738 = smul.addr %s737, 8
          %s739 = smul.addr %s738, 4
          %s740 = scalar_lea.vmem %s9, %s739
        $region88: #{tpu_custom_call.1} parent=51 // pred_fallthru
          _
        // Predicated region
        $region89: #{tpu_custom_call.1} parent=51 // pred_check
          %p741 = pneg %p315
        $region90: #{tpu_custom_call.1} parent=51 // pred_check_branch
          %743 = sbr.rel (%p741) target = $region92
        $region91: #{tpu_custom_call.1} parent=51 // pred_region
          %s744 = sand.u32 %s40, 1
          %s745 = scalar_lea.sflag [#allocation10], %s744
          %s746 = sand.u32 %s305, 1
          %s747 = scalar_lea.vmem [#allocation11], %s746
          %s749 = ssub.s32 16, 16
          %750 = vsyncadd %s745, %s749
          %s751 = smul.addr %s40, 16
          %s752 = scalar_lea.hbm %s10, %s751
          %s754 = sshll.u32 %s747, 4
          %s755 = int_to_ptr.vmem [resolvable:$true] %s754
          %757 = dma.hbm_to_vmem [thread:$0]  %s752, 16, %s755, %s745
        $region92: #{tpu_custom_call.1} parent=51 // pred_fallthru
          _
        // Predicated region
        $region93: #{tpu_custom_call.1} parent=51 // pred_check
          %p758 = pneg %p341
        $region94: #{tpu_custom_call.1} parent=51 // pred_check_branch
          %760 = sbr.rel (%p758) target = $region96
        $region95: #{tpu_custom_call.1} parent=51 // pred_region
          %p761 = scmp.lt.s32.totalorder %s40, 1
          %s762 = scalar_select %p761, %s40, 1
          %s763 = smul.addr %s762, 16
          %s764 = smul.addr %s763, 4
          %s765 = scalar_lea.vmem %s11, %s764
        $region96: #{tpu_custom_call.1} parent=51 // pred_fallthru
          _
        // Predicated region
        $region97: #{tpu_custom_call.1} parent=51 // pred_check
          %p766 = pneg %p367
        $region98: #{tpu_custom_call.1} parent=51 // pred_check_branch
          %768 = sbr.rel (%p766) target = $region100
        $region99: #{tpu_custom_call.1} parent=51 // pred_region
          %s769 = sand.u32 %s40, 1
          %s770 = scalar_lea.sflag [#allocation13], %s769
          %s771 = sand.u32 %s357, 1
          %s772 = scalar_lea.vmem [#allocation12], %s771
          %s774 = ssub.s32 16, 16
          %775 = vsyncadd %s770, %s774
          %s776 = smul.addr %s40, 16
          %s777 = scalar_lea.hbm %s12, %s776
          %s779 = sshll.u32 %s772, 4
          %s780 = int_to_ptr.vmem [resolvable:$true] %s779
          %782 = dma.hbm_to_vmem [thread:$0]  %s777, 16, %s780, %s770
        $region100: #{tpu_custom_call.1} parent=51 // pred_fallthru
          _
      $region52: #{tpu_custom_call.1} parent=5 // pred_fallthru
        _
      %p783 = scmp.le.s32.totalorder 1, %s40
      %p784 = scmp.lt.s32.totalorder %s40, 3
      %p785 = pnand %p783, %p784
      %p786 = pneg %p785
      // Predicated region
      $region101: #{tpu_custom_call.1} parent=5 // pred_check
        _
      $region102: #{tpu_custom_call.1} parent=5 // pred_check_branch
        %788 = sbr.rel (%p785) target = $region104
      $region103: #{tpu_custom_call.1} parent=5 // pred_region
        %s789 = ssub.s32 %s40, 1
        // Predicated region
        $region105: #{tpu_custom_call.1} parent=103 // pred_check
          %p790 = pneg %p61
        $region106: #{tpu_custom_call.1} parent=103 // pred_check_branch
          %792 = sbr.rel (%p790) target = $region108
        $region107: #{tpu_custom_call.1} parent=103 // pred_region
          %793 = dma.done [#allocation5], 256
        $region108: #{tpu_custom_call.1} parent=103 // pred_fallthru
          _
        %s794 = sand.u32 %s45, 1
        %s795 = scalar_lea.sflag [#allocation7], %s794
        %s796 = sand.u32 %s204, 1
        %s797 = scalar_lea.vmem [#allocation6], %s796
        // Predicated region
        $region109: #{tpu_custom_call.1} parent=103 // pred_check
          %p798 = pneg %p217
        $region110: #{tpu_custom_call.1} parent=103 // pred_check_branch
          %800 = sbr.rel (%p798) target = $region112
        $region111: #{tpu_custom_call.1} parent=103 // pred_region
          %801 = dma.done %s795, 16
        $region112: #{tpu_custom_call.1} parent=103 // pred_fallthru
          _
        %s802 = sand.u32 %s45, 1
        %s803 = scalar_lea.sflag [#allocation7], %s802
        %s804 = sand.u32 %s230, 1
        %s805 = scalar_lea.vmem [#allocation8], %s804
        // Predicated region
        $region113: #{tpu_custom_call.1} parent=103 // pred_check
          %p806 = pneg %p243
        $region114: #{tpu_custom_call.1} parent=103 // pred_check_branch
          %808 = sbr.rel (%p806) target = $region116
        $region115: #{tpu_custom_call.1} parent=103 // pred_region
          %809 = dma.done %s803, 16
        $region116: #{tpu_custom_call.1} parent=103 // pred_fallthru
          _
        %s810 = sand.u32 %s45, 1
        %s811 = scalar_lea.sflag [#allocation10], %s810
        %s812 = sand.u32 %s256, 1
        %s813 = scalar_lea.vmem [#allocation9], %s812
        // Predicated region
        $region117: #{tpu_custom_call.1} parent=103 // pred_check
          %p814 = pneg %p269
        $region118: #{tpu_custom_call.1} parent=103 // pred_check_branch
          %816 = sbr.rel (%p814) target = $region120
        $region119: #{tpu_custom_call.1} parent=103 // pred_region
          %817 = dma.done %s811, 16
        $region120: #{tpu_custom_call.1} parent=103 // pred_fallthru
          _
        %s818 = sand.u32 %s45, 1
        %s819 = scalar_lea.sflag [#allocation10], %s818
        %s820 = sand.u32 %s308, 1
        %s821 = scalar_lea.vmem [#allocation11], %s820
        // Predicated region
        $region121: #{tpu_custom_call.1} parent=103 // pred_check
          %p822 = pneg %p321
        $region122: #{tpu_custom_call.1} parent=103 // pred_check_branch
          %824 = sbr.rel (%p822) target = $region124
        $region123: #{tpu_custom_call.1} parent=103 // pred_region
          %825 = dma.done %s819, 16
        $region124: #{tpu_custom_call.1} parent=103 // pred_fallthru
          _
        %s826 = sand.u32 %s45, 1
        %s827 = scalar_lea.sflag [#allocation13], %s826
        %s828 = sand.u32 %s360, 1
        %s829 = scalar_lea.vmem [#allocation12], %s828
        // Predicated region
        $region125: #{tpu_custom_call.1} parent=103 // pred_check
          %p830 = pneg %p373
        $region126: #{tpu_custom_call.1} parent=103 // pred_check_branch
          %832 = sbr.rel (%p830) target = $region128
        $region127: #{tpu_custom_call.1} parent=103 // pred_region
          %833 = dma.done %s827, 16
        $region128: #{tpu_custom_call.1} parent=103 // pred_fallthru
          _
        // Predicated region
        $region129: #{tpu_custom_call.1} parent=103 // pred_check
          %p834 = pneg %p415
        $region130: #{tpu_custom_call.1} parent=103 // pred_check_branch
          %836 = sbr.rel (%p834) target = $region132
        $region131: #{tpu_custom_call.1} parent=103 // pred_region
          %837 = dma.done [#allocation13], 256
        $region132: #{tpu_custom_call.1} parent=103 // pred_fallthru
          _
        // Predicated region
        $region133: #{tpu_custom_call.1} parent=103 // pred_check
          %p838 = pneg %p436
        $region134: #{tpu_custom_call.1} parent=103 // pred_check_branch
          %840 = sbr.rel (%p838) target = $region136
        $region135: #{tpu_custom_call.1} parent=103 // pred_region
          %841 = dma.done [#allocation16], 256
        $region136: #{tpu_custom_call.1} parent=103 // pred_fallthru
          _
        // Predicated region
        $region137: #{tpu_custom_call.1} parent=103 // pred_check
          %p842 = pneg %p457
        $region138: #{tpu_custom_call.1} parent=103 // pred_check_branch
          %844 = sbr.rel (%p842) target = $region140
        $region139: #{tpu_custom_call.1} parent=103 // pred_region
          %845 = dma.done [#allocation16], 256
        $region140: #{tpu_custom_call.1} parent=103 // pred_fallthru
          _
        %p846 = pneg %p61
        %p847 = pneg %p58
        %p848 = scmp.lt.s32.totalorder %s45, 1
        %s849 = scalar_select %p848, %s45, 1
        %s850 = scalar_lea.vmem %s1, %s849
        %p851 = pneg %p87
        %p852 = pneg %p84
        %p853 = scmp.lt.s32.totalorder %s45, 1
        %s854 = scalar_select %p853, %s45, 1
        %s855 = scalar_lea.vmem %s2, %s854
        %p856 = pneg %p113
        %p857 = pneg %p110
        %p858 = scmp.lt.s32.totalorder %s45, 1
        %s859 = scalar_select %p858, %s45, 1
        %s860 = smul.addr %s859, 32
        %s861 = smul.addr %s860, 4
        %s862 = scalar_lea.vmem %s3, %s861
        %p863 = pneg %p139
        %p864 = pneg %p136
        %p865 = scmp.lt.s32.totalorder %s45, 1
        %s866 = scalar_select %p865, %s45, 1
        %s867 = smul.addr %s866, 16
        %s868 = smul.addr %s867, 4
        %s869 = scalar_lea.vmem %s4, %s868
        %p870 = pneg %p165
        %p871 = pneg %p162
        %p872 = scmp.lt.s32.totalorder %s45, 1
        %s873 = scalar_select %p872, %s45, 1
        %s874 = scalar_lea.vmem %s5, %s873
        %p875 = pneg %p191
        %p876 = pneg %p188
        %s877 = sand.u32 %s45, 1
        %s878 = scalar_lea.sflag [#allocation7], %s877
        %s879 = sand.u32 %s204, 1
        %s880 = scalar_lea.vmem [#allocation6], %s879
        %p881 = pneg %p217
        %p882 = pneg %p214
        %s883 = sand.u32 %s45, 1
        %s884 = scalar_lea.sflag [#allocation7], %s883
        %s885 = sand.u32 %s230, 1
        %s886 = scalar_lea.vmem [#allocation8], %s885
        %p887 = pneg %p243
        %p888 = pneg %p240
        %s889 = sand.u32 %s45, 1
        %s890 = scalar_lea.sflag [#allocation10], %s889
        %s891 = sand.u32 %s256, 1
        %s892 = scalar_lea.vmem [#allocation9], %s891
        %p893 = pneg %p269
        %p894 = pneg %p266
        %p895 = scmp.lt.s32.totalorder %s45, 1
        %s896 = scalar_select %p895, %s45, 1
        %s897 = smul.addr %s896, 8
        %s898 = smul.addr %s897, 4
        %s899 = scalar_lea.vmem %s9, %s898
        %p900 = pneg %p295
        %p901 = pneg %p292
        %s902 = sand.u32 %s45, 1
        %s903 = scalar_lea.sflag [#allocation10], %s902
        %s904 = sand.u32 %s308, 1
        %s905 = scalar_lea.vmem [#allocation11], %s904
        %p906 = pneg %p321
        %p907 = pneg %p318
        %p908 = scmp.lt.s32.totalorder %s45, 1
        %s909 = scalar_select %p908, %s45, 1
        %s910 = smul.addr %s909, 16
        %s911 = smul.addr %s910, 4
        %s912 = scalar_lea.vmem %s11, %s911
        %p913 = pneg %p347
        %p914 = pneg %p344
        %s915 = sand.u32 %s45, 1
        %s916 = scalar_lea.sflag [#allocation13], %s915
        %s917 = sand.u32 %s360, 1
        %s918 = scalar_lea.vmem [#allocation12], %s917
        %p919 = pneg %p373
        %p920 = pneg %p370
        %p921 = pneg %p394
        %p922 = pneg %p391
        %p923 = pneg %p415
        %p924 = pneg %p412
        %p925 = pneg %p436
        %p926 = pneg %p433
        %p927 = pneg %p457
        %p928 = pneg %p454
        %p929 = pneg %p478
        %p930 = pneg %p475
        %p931 = pneg %p499
        %p932 = pneg %p496
        %p933 = pneg %p520
        %p934 = pneg %p517
        %p935 = pneg %p541
        %p936 = pneg %p538
        %p937 = pneg %p562
        %p938 = pneg %p559
        %p939 = scmp.lt.s32.totalorder %s45, 1
        %s940 = scalar_select %p939, %s45, 1
        %s941 = scalar_lea.vmem %s1, %s940
        %p942 = scmp.lt.s32.totalorder %s45, 1
        %s943 = scalar_select %p942, %s45, 1
        %s944 = scalar_lea.vmem %s2, %s943
        %p945 = scmp.lt.s32.totalorder %s45, 1
        %s946 = scalar_select %p945, %s45, 1
        %s947 = smul.addr %s946, 32
        %s948 = smul.addr %s947, 4
        %s949 = scalar_lea.vmem %s3, %s948
        %p950 = scmp.lt.s32.totalorder %s45, 1
        %s951 = scalar_select %p950, %s45, 1
        %s952 = smul.addr %s951, 16
        %s953 = smul.addr %s952, 4
        %s954 = scalar_lea.vmem %s4, %s953
        %p955 = scmp.lt.s32.totalorder %s45, 1
        %s956 = scalar_select %p955, %s45, 1
        %s957 = scalar_lea.vmem %s5, %s956
        %p958 = scmp.lt.s32.totalorder %s45, 1
        %s959 = scalar_select %p958, %s45, 1
        %s960 = smul.addr %s959, 8
        %s961 = smul.addr %s960, 4
        %s962 = scalar_lea.vmem %s9, %s961
        %p963 = scmp.lt.s32.totalorder %s45, 1
        %s964 = scalar_select %p963, %s45, 1
        %s965 = smul.addr %s964, 16
        %s966 = smul.addr %s965, 4
        %s967 = scalar_lea.vmem %s11, %s966
        %p969 = scmp.eq.s32.totalorder %s45, 0
        // Predicated region
        $region141: #{tpu_custom_call.1} parent=103 // pred_check
          %p970 = pneg %p969
        $region142: #{tpu_custom_call.1} parent=103 // pred_check_branch
          %972 = sbr.rel (%p970) target = $region144
        $region143: #{tpu_custom_call.1} parent=103 // pred_region
          %v973 = vld [vmem:[#allocation4] sm:$0xff]
          %v974 = vld [vmem:[#allocation4 + $0x8] sm:$0xff]
          %vm975 = vcmask 523264
          %976 = vst.msk [vmem:[#allocation2] sm:$0xff] %vm975, %v973
          %977 = vst.msk [vmem:[#allocation2 + $0x8] sm:$0xff] %vm975, %v974
        $region144: #{tpu_custom_call.1} parent=103 // pred_fallthru
          _
        %v978 = vld [vmem:[#allocation2] sm:$0xff]
        %v979 = vld [vmem:[#allocation2 + $0x8] sm:$0xff]
        %v980 = vld [vmem:[%s941] sm:$0x1]
        %v981 = vld [vmem:[%s944] sm:$0x1]
        %vm982 = vcmask 523264
        %v983 = vsel %vm982, %v978, 0.0
        %984 = vadd.xlane.f32.xlu0 %v983
        %v985 = vpop.xlane.xlu0 %984
        %v986 = vsel %vm982, %v979, 0.0
        %987 = vadd.xlane.f32.xlu0 %v986
        %v988 = vpop.xlane.xlu0 %987
        %v989 = vrcp.pop 64.0
        %v990 = vmul.f32 %v985, %v989
        %v991 = vmul.f32 %v988, %v989
        %v992 = vsub.f32 %v978, %v990
        %v993 = vsub.f32 %v979, %v991
        %v994 = vmul.f32 %v992, %v992
        %v995 = vmul.f32 %v993, %v993
        %v996 = vsel %vm982, %v994, 0.0
        %997 = vadd.xlane.f32.xlu0 %v996
        %v998 = vpop.xlane.xlu0 %997
        %v999 = vsel %vm982, %v995, 0.0
        %1000 = vadd.xlane.f32.xlu0 %v999
        %v1001 = vpop.xlane.xlu0 %1000
        %v1002 = vmul.f32 %v998, %v989
        %v1003 = vmul.f32 %v1001, %v989
        %v1004 = vadd.f32 %v1002, 1e-05
        %v1005 = vadd.f32 %v1003, 1e-05
        %v1006 = vrsqrt.pop %v1004
        %v1007 = vrsqrt.pop %v1005
        %v1008 = vmul.f32 %v992, %v1006
        %v1009 = vmul.f32 %v993, %v1007
        %v1011 = vlaneseq
        %v1012 = vshrl.u32 %v1011, 7
        %v1013 = vsub.s32 0, %v1012
        %v1014 = vrot.slane %v980, %v1013
        %v1016 = vmul.f32 %v1008, %v1014
        %v1017 = vmul.f32 %v1009, %v1014
        %v1019 = vlaneseq
        %v1020 = vshrl.u32 %v1019, 7
        %v1021 = vsub.s32 0, %v1020
        %v1022 = vrot.slane %v981, %v1021
        %v1024 = vadd.f32 %v1016, %v1022
        %v1025 = vadd.f32 %v1017, %v1022
        %v1026 = vpack.c.bf16 %v1025, %v1024
        %v1027 = vld [vmem:[%s949] sm:$0xff]
        %v1028 = vld [vmem:[%s949 + $0x8] sm:$0xff]
        %v1029 = vld [vmem:[%s949 + $0x10] sm:$0xff]
        %v1030 = vld [vmem:[%s949 + $0x18] sm:$0xff]
        %v1031 = vld [vmem:[%s949 + $0x20] sm:$0xff]
        %v1032 = vld [vmem:[%s949 + $0x28] sm:$0xff]
        %v1033 = vld [vmem:[%s949 + $0x30] sm:$0xff]
        %v1034 = vld [vmem:[%s949 + $0x38] sm:$0xff]
        %v1035 = vld [vmem:[%s949 + $0x40] sm:$0xff]
        %v1036 = vld [vmem:[%s949 + $0x48] sm:$0xff]
        %v1037 = vld [vmem:[%s949 + $0x50] sm:$0xff]
        %v1038 = vld [vmem:[%s949 + $0x58] sm:$0xff]
        %v1039 = vld [vmem:[%s949 + $0x60] sm:$0xff]
        %v1040 = vld [vmem:[%s949 + $0x68] sm:$0xff]
        %v1041 = vld [vmem:[%s949 + $0x70] sm:$0xff]
        %v1042 = vld [vmem:[%s949 + $0x78] sm:$0xff]
        %v1059 = vunpack.c.l.b16 %v1027
        %v1060 = vunpack.c.h.b16 %v1027
        %v1061 = vunpack.c.l.b16 %v1028
        %v1062 = vunpack.c.h.b16 %v1028
        %v1063 = vunpack.c.l.b16 %v1029
        %v1064 = vunpack.c.h.b16 %v1029
        %v1065 = vunpack.c.l.b16 %v1030
        %v1066 = vunpack.c.h.b16 %v1030
        %v1067 = vunpack.c.l.b16 %v1031
        %v1068 = vunpack.c.h.b16 %v1031
        %v1069 = vunpack.c.l.b16 %v1032
        %v1070 = vunpack.c.h.b16 %v1032
        %v1071 = vunpack.c.l.b16 %v1033
        %v1072 = vunpack.c.h.b16 %v1033
        %v1073 = vunpack.c.l.b16 %v1034
        %v1074 = vunpack.c.h.b16 %v1034
        %v1075 = vunpack.c.l.b16 %v1035
        %v1076 = vunpack.c.h.b16 %v1035
        %v1077 = vunpack.c.l.b16 %v1036
        %v1078 = vunpack.c.h.b16 %v1036
        %v1079 = vunpack.c.l.b16 %v1037
        %v1080 = vunpack.c.h.b16 %v1037
        %v1081 = vunpack.c.l.b16 %v1038
        %v1082 = vunpack.c.h.b16 %v1038
        %v1083 = vunpack.c.l.b16 %v1039
        %v1084 = vunpack.c.h.b16 %v1039
        %v1085 = vunpack.c.l.b16 %v1040
        %v1086 = vunpack.c.h.b16 %v1040
        %v1087 = vunpack.c.l.b16 %v1041
        %v1088 = vunpack.c.h.b16 %v1041
        %v1089 = vunpack.c.l.b16 %v1042
        %v1090 = vunpack.c.h.b16 %v1042
        %v1091 = vpack.c.b16 %v1063, %v1059
        %v1092 = vpack.c.b16 %v1064, %v1060
        %v1093 = vpack.c.b16 %v1065, %v1061
        %v1094 = vpack.c.b16 %v1066, %v1062
        %v1095 = vpack.c.b16 %v1071, %v1067
        %v1096 = vpack.c.b16 %v1072, %v1068
        %v1097 = vpack.c.b16 %v1073, %v1069
        %v1098 = vpack.c.b16 %v1074, %v1070
        %v1099 = vpack.c.b16 %v1079, %v1075
        %v1100 = vpack.c.b16 %v1080, %v1076
        %v1101 = vpack.c.b16 %v1081, %v1077
        %v1102 = vpack.c.b16 %v1082, %v1078
        %v1103 = vpack.c.b16 %v1087, %v1083
        %v1104 = vpack.c.b16 %v1088, %v1084
        %v1105 = vpack.c.b16 %v1089, %v1085
        %v1106 = vpack.c.b16 %v1090, %v1086
        %v1124 = vsel %vm982, %v1026, 0
        %1126 = vmatprep.subr.bf16.mxu0 %v1092
        %1127 = vmatpush1.bf16.msra.mxu0 %v1091
        %1128 = vmatprep.subr.bf16.mxu0 %v1096
        %1129 = vmatpush1.bf16.msra.mxu0 %v1095
        %1130 = vmatprep.subr.bf16.mxu0 %v1100
        %1131 = vmatpush1.bf16.msra.mxu0 %v1099
        %1132 = vmatprep.subr.bf16.mxu0 %v1104
        %1133 = vmatpush1.bf16.msra.mxu0 %v1103
        %1134 = vmatprep.subr.bf16.mxu0 0
        %1135 = vmatpush1.bf16.msra.mxu0 0
        %1136 = vmatprep.subr.bf16.mxu0 0
        %1137 = vmatpush1.bf16.msra.mxu0 0
        %1138 = vmatprep.subr.bf16.mxu0 0
        %1139 = vmatpush1.bf16.msra.mxu0 0
        %1140 = vmatprep.subr.bf16.mxu0 0
        %1141 = vmatpush1.bf16.msra.mxu0 0
        %1142 = vmatprep.subr.bf16.mxu0 0
        %1143 = vmatpush1.bf16.msra.mxu0 0
        %1144 = vmatprep.subr.bf16.mxu0 0
        %1145 = vmatpush1.bf16.msra.mxu0 0
        %1146 = vmatprep.subr.bf16.mxu0 0
        %1147 = vmatpush1.bf16.msra.mxu0 0
        %1148 = vmatprep.subr.bf16.mxu0 0
        %1149 = vmatpush1.bf16.msra.mxu0 0
        %1150 = vmatprep.subr.bf16.mxu0 0
        %1151 = vmatpush1.bf16.msra.mxu0 0
        %1152 = vmatprep.subr.bf16.mxu0 0
        %1153 = vmatpush1.bf16.msra.mxu0 0
        %1154 = vmatprep.subr.bf16.mxu0 0
        %1155 = vmatpush1.bf16.msra.mxu0 0
        %1156 = vmatprep.subr.bf16.mxu0 0
        %1157 = vmatpush1.bf16.msra.mxu0 0
        %1158 = vmatprep.mubr.bf16.mxu0 0
        %1159 = vmatmul.mubr.bf16.gmra.mrb[0].mxu0 %v1124
        %v1160 = vpop.f32.mrb[0].mxu0
        %v1161 = vadd.f32 0.0, %v1160
        %v1162 = vpop.f32.mrb[0].mxu0
        %v1163 = vadd.f32 0.0, %v1162
        %v1164 = vpop.f32.mrb[0].mxu0
        %v1165 = vadd.f32 0.0, %v1164
        %v1166 = vpop.f32.mrb[0].mxu0
        %v1167 = vadd.f32 0.0, %v1166
        %1168 = vdwg.mxu0
        %1169 = vmatprep.subr.bf16.mxu0 %v1094
        %1170 = vmatpush1.bf16.msra.mxu0 %v1093
        %1171 = vmatprep.subr.bf16.mxu0 %v1098
        %1172 = vmatpush1.bf16.msra.mxu0 %v1097
        %1173 = vmatprep.subr.bf16.mxu0 %v1102
        %1174 = vmatpush1.bf16.msra.mxu0 %v1101
        %1175 = vmatprep.subr.bf16.mxu0 %v1106
        %1176 = vmatpush1.bf16.msra.mxu0 %v1105
        %1177 = vmatprep.subr.bf16.mxu0 0
        %1178 = vmatpush1.bf16.msra.mxu0 0
        %1179 = vmatprep.subr.bf16.mxu0 0
        %1180 = vmatpush1.bf16.msra.mxu0 0
        %1181 = vmatprep.subr.bf16.mxu0 0
        %1182 = vmatpush1.bf16.msra.mxu0 0
        %1183 = vmatprep.subr.bf16.mxu0 0
        %1184 = vmatpush1.bf16.msra.mxu0 0
        %1185 = vmatprep.subr.bf16.mxu0 0
        %1186 = vmatpush1.bf16.msra.mxu0 0
        %1187 = vmatprep.subr.bf16.mxu0 0
        %1188 = vmatpush1.bf16.msra.mxu0 0
        %1189 = vmatprep.subr.bf16.mxu0 0
        %1190 = vmatpush1.bf16.msra.mxu0 0
        %1191 = vmatprep.subr.bf16.mxu0 0
        %1192 = vmatpush1.bf16.msra.mxu0 0
        %1193 = vmatprep.subr.bf16.mxu0 0
        %1194 = vmatpush1.bf16.msra.mxu0 0
        %1195 = vmatprep.subr.bf16.mxu0 0
        %1196 = vmatpush1.bf16.msra.mxu0 0
        %1197 = vmatprep.subr.bf16.mxu0 0
        %1198 = vmatpush1.bf16.msra.mxu0 0
        %1199 = vmatprep.subr.bf16.mxu0 0
        %1200 = vmatpush1.bf16.msra.mxu0 0
        %1201 = vmatprep.mubr.bf16.mxu0 0
        %1202 = vmatmul.mubr.bf16.gmra.mrb[0].mxu0 %v1124
        %v1203 = vpop.f32.mrb[0].mxu0
        %v1204 = vadd.f32 0.0, %v1203
        %v1205 = vpop.f32.mrb[0].mxu0
        %v1206 = vadd.f32 0.0, %v1205
        %v1207 = vpop.f32.mrb[0].mxu0
        %v1208 = vadd.f32 0.0, %v1207
        %v1209 = vpop.f32.mrb[0].mxu0
        %v1210 = vadd.f32 0.0, %v1209
        %1211 = vdwg.mxu0
        %v1212 = vld [vmem:[%s13] sm:$0xff]
        %v1213 = vld [vmem:[%s13 + $0x8] sm:$0xff]
        %v1214 = vmul.f32 %v1161, %v1212
        %v1215 = vmul.f32 %v1165, %v1213
        %v1216 = vld [vmem:[#allocation14] sm:$0xff]
        %v1217 = vld [vmem:[#allocation14 + $0x8] sm:$0xff]
        %1220 = vrot.lane.b32.xlu0 %v1216, 64
        %v1221 = vpop.permute.xlu0 %1220
        %1222 = vrot.lane.b32.xlu0 %v1217, 64
        %v1223 = vpop.permute.xlu0 %1222
        %v1226 = vmul.f32 %v1161, %v1221
        %v1227 = vmul.f32 %v1165, %v1223
        %1230 = vrot.lane.b32.xlu0 %v1226, 64
        %v1231 = vpop.permute.xlu0 %1230
        %1232 = vrot.lane.b32.xlu0 %v1227, 64
        %v1233 = vpop.permute.xlu0 %1232
        %v1236 = vadd.f32 %v1214, %v1231
        %v1237 = vadd.f32 %v1215, %v1233
        %v1238 = vld [vmem:[#allocation15] sm:$0xff]
        %v1239 = vld [vmem:[#allocation15 + $0x8] sm:$0xff]
        %v1240 = vmul.f32 %v1163, %v1238
        %v1241 = vmul.f32 %v1167, %v1239
        %v1242 = vld [vmem:[#allocation17] sm:$0xff]
        %v1243 = vld [vmem:[#allocation17 + $0x8] sm:$0xff]
        %1246 = vrot.lane.b32.xlu0 %v1242, 64
        %v1247 = vpop.permute.xlu0 %1246
        %1248 = vrot.lane.b32.xlu0 %v1243, 64
        %v1249 = vpop.permute.xlu0 %1248
        %v1252 = vmul.f32 %v1163, %v1247
        %v1253 = vmul.f32 %v1167, %v1249
        %1256 = vrot.lane.b32.xlu0 %v1252, 64
        %v1257 = vpop.permute.xlu0 %1256
        %1258 = vrot.lane.b32.xlu0 %v1253, 64
        %v1259 = vpop.permute.xlu0 %1258
        %v1262 = vadd.f32 %v1240, %v1257
        %v1263 = vadd.f32 %v1241, %v1259
        %v1264 = vxor.u32 %v1206, 2147483648
        %v1265 = vxor.u32 %v1210, 2147483648
        %v1266 = vmul.f32 %v1264, 1.442695
        %v1267 = vpow.pop %v1266
        %v1268 = vmul.f32 %v1265, 1.442695
        %v1269 = vpow.pop %v1268
        %v1270 = vadd.f32 %v1267, 1.0
        %v1271 = vadd.f32 %v1269, 1.0
        %v1272 = vrcp.pop %v1270
        %v1273 = vmul.f32 1.0, %v1272
        %v1274 = vrcp.pop %v1271
        %v1275 = vmul.f32 1.0, %v1274
        %v1276 = vmul.f32 %v1206, %v1273
        %v1277 = vmul.f32 %v1210, %v1275
        %v1278 = vlaneseq
        %v1279 = vshrl.u32 %v1278, 7
        %v1280 = vadd.s32 %v1279, 8
        %v1281 = vcvt.s32.f32 %v1279
        %v1282 = vcvt.s32.f32 %v1280
        %v1283 = vlaneseq
        %v1284 = vand.u32 %v1283, 127
        %v1285 = vcvt.s32.f32 %v1284
        %vm1286 = vcmp.ge.s32.totalorder %v1279, %v1284
        %vm1287 = vcmp.ge.s32.totalorder %v1280, %v1284
        %v1288 = vpack.c.bf16 %v1237, %v1236
        %v1289 = vpack.c.bf16 %v1263, %v1262
        %v1290 = vpack.c.bf16 %v1208, %v1204
        %vm1291 = vcmask 130048
        %v1293 = vsel %vm1291, %v1288, 0
        %v1296 = vsel %vm1291, %v1289, 0
        %1298 = vmatprep.subr.bf16.mxu0 0
        %1299 = vmatpush1.bf16.xpose.msra.mxu0 %v1296
        %1300 = vmatprep.subr.bf16.mxu0 0
        %1301 = vmatpush1.bf16.xpose.msra.mxu0 0
        %1302 = vmatprep.subr.bf16.mxu0 0
        %1303 = vmatpush1.bf16.xpose.msra.mxu0 0
        %1304 = vmatprep.subr.bf16.mxu0 0
        %1305 = vmatpush1.bf16.xpose.msra.mxu0 0
        %1306 = vmatprep.subr.bf16.mxu0 0
        %1307 = vmatpush1.bf16.xpose.msra.mxu0 0
        %1308 = vmatprep.subr.bf16.mxu0 0
        %1309 = vmatpush1.bf16.xpose.msra.mxu0 0
        %1310 = vmatprep.subr.bf16.mxu0 0
        %1311 = vmatpush1.bf16.xpose.msra.mxu0 0
        %1312 = vmatprep.subr.bf16.mxu0 0
        %1313 = vmatpush1.bf16.xpose.msra.mxu0 0
        %1314 = vmatprep.subr.bf16.mxu0 0
        %1315 = vmatpush1.bf16.xpose.msra.mxu0 0
        %1316 = vmatprep.subr.bf16.mxu0 0
        %1317 = vmatpush1.bf16.xpose.msra.mxu0 0
        %1318 = vmatprep.subr.bf16.mxu0 0
        %1319 = vmatpush1.bf16.xpose.msra.mxu0 0
        %1320 = vmatprep.subr.bf16.mxu0 0
        %1321 = vmatpush1.bf16.xpose.msra.mxu0 0
        %1322 = vmatprep.subr.bf16.mxu0 0
        %1323 = vmatpush1.bf16.xpose.msra.mxu0 0
        %1324 = vmatprep.subr.bf16.mxu0 0
        %1325 = vmatpush1.bf16.xpose.msra.mxu0 0
        %1326 = vmatprep.subr.bf16.mxu0 0
        %1327 = vmatpush1.bf16.xpose.msra.mxu0 0
        %1328 = vmatprep.subr.bf16.mxu0 0
        %1329 = vmatpush1.bf16.xpose.msra.mxu0 0
        %1330 = vmatprep.mubr.bf16.mxu0 0
        %1331 = vmatmul.mubr.bf16.gmra.mrb[0].mxu0 %v1293
        %v1332 = vpop.f32.mrb[0].mxu0
        %v1333 = vadd.f32 0.0, %v1332
        %v1334 = vpop.f32.mrb[0].mxu0
        %v1335 = vpop.f32.mrb[0].mxu0
        %v1336 = vadd.f32 0.0, %v1335
        %v1337 = vpop.f32.mrb[0].mxu0
        %1338 = vdwg.mxu0
        %v1339 = vmul.f32 %v1281, -0.031748697
        %v1340 = vmul.f32 %v1282, -0.031748697
        %v1341 = vmul.f32 %v1339, 1.442695
        %v1342 = vpow.pop %v1341
        %v1343 = vmul.f32 %v1340, 1.442695
        %v1344 = vpow.pop %v1343
        %v1345 = vmul.f32 %v1285, 0.031748697
        %v1346 = vmul.f32 %v1345, 1.442695
        %v1347 = vpow.pop %v1346
        %v1348 = vmul.f32 %v1342, %v1347
        %v1349 = vmul.f32 %v1344, %v1347
        %v1350 = vsel %vm1286, %v1348, 0.0
        %v1351 = vsel %vm1287, %v1349, 0.0
        %v1352 = vmul.f32 %v1333, %v1350
        %v1353 = vmul.f32 %v1336, %v1351
        %v1354 = vpack.c.bf16 %v1353, %v1352
        %v1356 = vsel %vm1291, %v1354, 0
        %1358 = vmatprep.subr.bf16.mxu0 0
        %1359 = vmatpush1.bf16.msra.mxu0 %v1290
        %1360 = vmatprep.subr.bf16.mxu0 0
        %1361 = vmatpush1.bf16.msra.mxu0 0
        %1362 = vmatprep.subr.bf16.mxu0 0
        %1363 = vmatpush1.bf16.msra.mxu0 0
        %1364 = vmatprep.subr.bf16.mxu0 0
        %1365 = vmatpush1.bf16.msra.mxu0 0
        %1366 = vmatprep.subr.bf16.mxu0 0
        %1367 = vmatpush1.bf16.msra.mxu0 0
        %1368 = vmatprep.subr.bf16.mxu0 0
        %1369 = vmatpush1.bf16.msra.mxu0 0
        %1370 = vmatprep.subr.bf16.mxu0 0
        %1371 = vmatpush1.bf16.msra.mxu0 0
        %1372 = vmatprep.subr.bf16.mxu0 0
        %1373 = vmatpush1.bf16.msra.mxu0 0
        %1374 = vmatprep.subr.bf16.mxu0 0
        %1375 = vmatpush1.bf16.msra.mxu0 0
        %1376 = vmatprep.subr.bf16.mxu0 0
        %1377 = vmatpush1.bf16.msra.mxu0 0
        %1378 = vmatprep.subr.bf16.mxu0 0
        %1379 = vmatpush1.bf16.msra.mxu0 0
        %1380 = vmatprep.subr.bf16.mxu0 0
        %1381 = vmatpush1.bf16.msra.mxu0 0
        %1382 = vmatprep.subr.bf16.mxu0 0
        %1383 = vmatpush1.bf16.msra.mxu0 0
        %1384 = vmatprep.subr.bf16.mxu0 0
        %1385 = vmatpush1.bf16.msra.mxu0 0
        %1386 = vmatprep.subr.bf16.mxu0 0
        %1387 = vmatpush1.bf16.msra.mxu0 0
        %1388 = vmatprep.subr.bf16.mxu0 0
        %1389 = vmatpush1.bf16.msra.mxu0 0
        %1390 = vmatprep.mubr.bf16.mxu0 0
        %1391 = vmatmul.mubr.bf16.gmra.mrb[0].mxu0 %v1356
        %v1392 = vpop.f32.mrb[0].mxu0
        %v1393 = vadd.f32 0.0, %v1392
        %v1394 = vpop.f32.mrb[0].mxu0
        %v1395 = vpop.f32.mrb[0].mxu0
        %v1396 = vadd.f32 0.0, %v1395
        %v1397 = vpop.f32.mrb[0].mxu0
        %1398 = vdwg.mxu0
        %vm1399 = vcmask 261120
        %v1400 = vsel %vm1399, %v1393, 0.0
        %1401 = vadd.xlane.f32.xlu0 %v1400
        %v1402 = vpop.xlane.xlu0 %1401
        %v1403 = vsel %vm1399, %v1396, 0.0
        %1404 = vadd.xlane.f32.xlu0 %v1403
        %v1405 = vpop.xlane.xlu0 %1404
        %v1406 = vrcp.pop 32.0
        %v1407 = vmul.f32 %v1402, %v1406
        %v1408 = vmul.f32 %v1405, %v1406
        %v1409 = vsub.f32 %v1393, %v1407
        %v1410 = vsub.f32 %v1396, %v1408
        %v1411 = vmul.f32 %v1409, %v1409
        %v1412 = vmul.f32 %v1410, %v1410
        %v1413 = vsel %vm1399, %v1411, 0.0
        %1414 = vadd.xlane.f32.xlu0 %v1413
        %v1415 = vpop.xlane.xlu0 %1414
        %v1416 = vsel %vm1399, %v1412, 0.0
        %1417 = vadd.xlane.f32.xlu0 %v1416
        %v1418 = vpop.xlane.xlu0 %1417
        %v1419 = vmul.f32 %v1415, %v1406
        %v1420 = vmul.f32 %v1418, %v1406
        %v1421 = vadd.f32 %v1419, 1e-05
        %v1422 = vadd.f32 %v1420, 1e-05
        %v1423 = vrsqrt.pop %v1421
        %v1424 = vrsqrt.pop %v1422
        %v1425 = vmul.f32 %v1409, %v1423
        %v1426 = vmul.f32 %v1410, %v1424
        %1428 = vrot.lane.b32.xlu0 %v1288, 112
        %v1429 = vpop.permute.xlu0 %1428
        %1431 = vrot.lane.b32.xlu0 %v1289, 112
        %v1432 = vpop.permute.xlu0 %1431
        %v1434 = vsel %vm1291, %v1429, 0
        %v1437 = vsel %vm1291, %v1432, 0
        %1439 = vmatprep.subr.bf16.mxu0 0
        %1440 = vmatpush1.bf16.xpose.msra.mxu0 %v1437
        %1441 = vmatprep.subr.bf16.mxu0 0
        %1442 = vmatpush1.bf16.xpose.msra.mxu0 0
        %1443 = vmatprep.subr.bf16.mxu0 0
        %1444 = vmatpush1.bf16.xpose.msra.mxu0 0
        %1445 = vmatprep.subr.bf16.mxu0 0
        %1446 = vmatpush1.bf16.xpose.msra.mxu0 0
        %1447 = vmatprep.subr.bf16.mxu0 0
        %1448 = vmatpush1.bf16.xpose.msra.mxu0 0
        %1449 = vmatprep.subr.bf16.mxu0 0
        %1450 = vmatpush1.bf16.xpose.msra.mxu0 0
        %1451 = vmatprep.subr.bf16.mxu0 0
        %1452 = vmatpush1.bf16.xpose.msra.mxu0 0
        %1453 = vmatprep.subr.bf16.mxu0 0
        %1454 = vmatpush1.bf16.xpose.msra.mxu0 0
        %1455 = vmatprep.subr.bf16.mxu0 0
        %1456 = vmatpush1.bf16.xpose.msra.mxu0 0
        %1457 = vmatprep.subr.bf16.mxu0 0
        %1458 = vmatpush1.bf16.xpose.msra.mxu0 0
        %1459 = vmatprep.subr.bf16.mxu0 0
        %1460 = vmatpush1.bf16.xpose.msra.mxu0 0
        %1461 = vmatprep.subr.bf16.mxu0 0
        %1462 = vmatpush1.bf16.xpose.msra.mxu0 0
        %1463 = vmatprep.subr.bf16.mxu0 0
        %1464 = vmatpush1.bf16.xpose.msra.mxu0 0
        %1465 = vmatprep.subr.bf16.mxu0 0
        %1466 = vmatpush1.bf16.xpose.msra.mxu0 0
        %1467 = vmatprep.subr.bf16.mxu0 0
        %1468 = vmatpush1.bf16.xpose.msra.mxu0 0
        %1469 = vmatprep.subr.bf16.mxu0 0
        %1470 = vmatpush1.bf16.xpose.msra.mxu0 0
        %1471 = vmatprep.mubr.bf16.mxu0 0
        %1472 = vmatmul.mubr.bf16.gmra.mrb[0].mxu0 %v1434
        %v1473 = vpop.f32.mrb[0].mxu0
        %v1474 = vadd.f32 0.0, %v1473
        %v1475 = vpop.f32.mrb[0].mxu0
        %v1476 = vpop.f32.mrb[0].mxu0
        %v1477 = vadd.f32 0.0, %v1476
        %v1478 = vpop.f32.mrb[0].mxu0
        %1479 = vdwg.mxu0
        %v1480 = vmul.f32 %v1281, -0.012479112
        %v1481 = vmul.f32 %v1282, -0.012479112
        %v1482 = vmul.f32 %v1480, 1.442695
        %v1483 = vpow.pop %v1482
        %v1484 = vmul.f32 %v1481, 1.442695
        %v1485 = vpow.pop %v1484
        %v1486 = vmul.f32 %v1285, 0.012479112
        %v1487 = vmul.f32 %v1486, 1.442695
        %v1488 = vpow.pop %v1487
        %v1489 = vmul.f32 %v1483, %v1488
        %v1490 = vmul.f32 %v1485, %v1488
        %v1491 = vsel %vm1286, %v1489, 0.0
        %v1492 = vsel %vm1287, %v1490, 0.0
        %v1493 = vmul.f32 %v1474, %v1491
        %v1494 = vmul.f32 %v1477, %v1492
        %v1495 = vpack.c.bf16 %v1494, %v1493
        %1497 = vrot.lane.b32.xlu0 %v1290, 96
        %v1498 = vpop.permute.xlu0 %1497
        %v1501 = vsel %vm1291, %v1495, 0
        %1503 = vmatprep.subr.bf16.mxu0 0
        %1504 = vmatpush1.bf16.msra.mxu0 %v1498
        %1505 = vmatprep.subr.bf16.mxu0 0
        %1506 = vmatpush1.bf16.msra.mxu0 0
        %1507 = vmatprep.subr.bf16.mxu0 0
        %1508 = vmatpush1.bf16.msra.mxu0 0
        %1509 = vmatprep.subr.bf16.mxu0 0
        %1510 = vmatpush1.bf16.msra.mxu0 0
        %1511 = vmatprep.subr.bf16.mxu0 0
        %1512 = vmatpush1.bf16.msra.mxu0 0
        %1513 = vmatprep.subr.bf16.mxu0 0
        %1514 = vmatpush1.bf16.msra.mxu0 0
        %1515 = vmatprep.subr.bf16.mxu0 0
        %1516 = vmatpush1.bf16.msra.mxu0 0
        %1517 = vmatprep.subr.bf16.mxu0 0
        %1518 = vmatpush1.bf16.msra.mxu0 0
        %1519 = vmatprep.subr.bf16.mxu0 0
        %1520 = vmatpush1.bf16.msra.mxu0 0
        %1521 = vmatprep.subr.bf16.mxu0 0
        %1522 = vmatpush1.bf16.msra.mxu0 0
        %1523 = vmatprep.subr.bf16.mxu0 0
        %1524 = vmatpush1.bf16.msra.mxu0 0
        %1525 = vmatprep.subr.bf16.mxu0 0
        %1526 = vmatpush1.bf16.msra.mxu0 0
        %1527 = vmatprep.subr.bf16.mxu0 0
        %1528 = vmatpush1.bf16.msra.mxu0 0
        %1529 = vmatprep.subr.bf16.mxu0 0
        %1530 = vmatpush1.bf16.msra.mxu0 0
        %1531 = vmatprep.subr.bf16.mxu0 0
        %1532 = vmatpush1.bf16.msra.mxu0 0
        %1533 = vmatprep.subr.bf16.mxu0 0
        %1534 = vmatpush1.bf16.msra.mxu0 0
        %1535 = vmatprep.mubr.bf16.mxu0 0
        %1536 = vmatmul.mubr.bf16.gmra.mrb[0].mxu0 %v1501
        %v1537 = vpop.f32.mrb[0].mxu0
        %v1538 = vadd.f32 0.0, %v1537
        %v1539 = vpop.f32.mrb[0].mxu0
        %v1540 = vpop.f32.mrb[0].mxu0
        %v1541 = vadd.f32 0.0, %v1540
        %v1542 = vpop.f32.mrb[0].mxu0
        %1543 = vdwg.mxu0
        %v1544 = vsel %vm1399, %v1538, 0.0
        %1545 = vadd.xlane.f32.xlu0 %v1544
        %v1546 = vpop.xlane.xlu0 %1545
        %v1547 = vsel %vm1399, %v1541, 0.0
        %1548 = vadd.xlane.f32.xlu0 %v1547
        %v1549 = vpop.xlane.xlu0 %1548
        %v1550 = vmul.f32 %v1546, %v1406
        %v1551 = vmul.f32 %v1549, %v1406
        %v1552 = vsub.f32 %v1538, %v1550
        %v1553 = vsub.f32 %v1541, %v1551
        %v1554 = vmul.f32 %v1552, %v1552
        %v1555 = vmul.f32 %v1553, %v1553
        %v1556 = vsel %vm1399, %v1554, 0.0
        %1557 = vadd.xlane.f32.xlu0 %v1556
        %v1558 = vpop.xlane.xlu0 %1557
        %v1559 = vsel %vm1399, %v1555, 0.0
        %1560 = vadd.xlane.f32.xlu0 %v1559
        %v1561 = vpop.xlane.xlu0 %1560
        %v1562 = vmul.f32 %v1558, %v1406
        %v1563 = vmul.f32 %v1561, %v1406
        %v1564 = vadd.f32 %v1562, 1e-05
        %v1565 = vadd.f32 %v1563, 1e-05
        %v1566 = vrsqrt.pop %v1564
        %v1567 = vrsqrt.pop %v1565
        %v1568 = vmul.f32 %v1552, %v1566
        %v1569 = vmul.f32 %v1553, %v1567
        %1570 = vrot.lane.b32.xlu0 %v1288, 96
        %v1571 = vpop.permute.xlu0 %1570
        %1572 = vrot.lane.b32.xlu0 %v1289, 96
        %v1573 = vpop.permute.xlu0 %1572
        %v1575 = vsel %vm1291, %v1571, 0
        %v1578 = vsel %vm1291, %v1573, 0
        %1580 = vmatprep.subr.bf16.mxu0 0
        %1581 = vmatpush1.bf16.xpose.msra.mxu0 %v1578
        %1582 = vmatprep.subr.bf16.mxu0 0
        %1583 = vmatpush1.bf16.xpose.msra.mxu0 0
        %1584 = vmatprep.subr.bf16.mxu0 0
        %1585 = vmatpush1.bf16.xpose.msra.mxu0 0
        %1586 = vmatprep.subr.bf16.mxu0 0
        %1587 = vmatpush1.bf16.xpose.msra.mxu0 0
        %1588 = vmatprep.subr.bf16.mxu0 0
        %1589 = vmatpush1.bf16.xpose.msra.mxu0 0
        %1590 = vmatprep.subr.bf16.mxu0 0
        %1591 = vmatpush1.bf16.xpose.msra.mxu0 0
        %1592 = vmatprep.subr.bf16.mxu0 0
        %1593 = vmatpush1.bf16.xpose.msra.mxu0 0
        %1594 = vmatprep.subr.bf16.mxu0 0
        %1595 = vmatpush1.bf16.xpose.msra.mxu0 0
        %1596 = vmatprep.subr.bf16.mxu0 0
        %1597 = vmatpush1.bf16.xpose.msra.mxu0 0
        %1598 = vmatprep.subr.bf16.mxu0 0
        %1599 = vmatpush1.bf16.xpose.msra.mxu0 0
        %1600 = vmatprep.subr.bf16.mxu0 0
        %1601 = vmatpush1.bf16.xpose.msra.mxu0 0
        %1602 = vmatprep.subr.bf16.mxu0 0
        %1603 = vmatpush1.bf16.xpose.msra.mxu0 0
        %1604 = vmatprep.subr.bf16.mxu0 0
        %1605 = vmatpush1.bf16.xpose.msra.mxu0 0
        %1606 = vmatprep.subr.bf16.mxu0 0
        %1607 = vmatpush1.bf16.xpose.msra.mxu0 0
        %1608 = vmatprep.subr.bf16.mxu0 0
        %1609 = vmatpush1.bf16.xpose.msra.mxu0 0
        %1610 = vmatprep.subr.bf16.mxu0 0
        %1611 = vmatpush1.bf16.xpose.msra.mxu0 0
        %1612 = vmatprep.mubr.bf16.mxu0 0
        %1613 = vmatmul.mubr.bf16.gmra.mrb[0].mxu0 %v1575
        %v1614 = vpop.f32.mrb[0].mxu0
        %v1615 = vadd.f32 0.0, %v1614
        %v1616 = vpop.f32.mrb[0].mxu0
        %v1617 = vpop.f32.mrb[0].mxu0
        %v1618 = vadd.f32 0.0, %v1617
        %v1619 = vpop.f32.mrb[0].mxu0
        %1620 = vdwg.mxu0
        %v1621 = vmul.f32 %v1281, -0.004933717
        %v1622 = vmul.f32 %v1282, -0.004933717
        %v1623 = vmul.f32 %v1621, 1.442695
        %v1624 = vpow.pop %v1623
        %v1625 = vmul.f32 %v1622, 1.442695
        %v1626 = vpow.pop %v1625
        %v1627 = vmul.f32 %v1285, 0.004933717
        %v1628 = vmul.f32 %v1627, 1.442695
        %v1629 = vpow.pop %v1628
        %v1630 = vmul.f32 %v1624, %v1629
        %v1631 = vmul.f32 %v1626, %v1629
        %v1632 = vsel %vm1286, %v1630, 0.0
        %v1633 = vsel %vm1287, %v1631, 0.0
        %v1634 = vmul.f32 %v1615, %v1632
        %v1635 = vmul.f32 %v1618, %v1633
        %v1636 = vpack.c.bf16 %v1635, %v1634
        %1637 = vrot.lane.b32.xlu0 %v1290, 64
        %v1638 = vpop.permute.xlu0 %1637
        %v1641 = vsel %vm1291, %v1636, 0
        %1643 = vmatprep.subr.bf16.mxu0 0
        %1644 = vmatpush1.bf16.msra.mxu0 %v1638
        %1645 = vmatprep.subr.bf16.mxu0 0
        %1646 = vmatpush1.bf16.msra.mxu0 0
        %1647 = vmatprep.subr.bf16.mxu0 0
        %1648 = vmatpush1.bf16.msra.mxu0 0
        %1649 = vmatprep.subr.bf16.mxu0 0
        %1650 = vmatpush1.bf16.msra.mxu0 0
        %1651 = vmatprep.subr.bf16.mxu0 0
        %1652 = vmatpush1.bf16.msra.mxu0 0
        %1653 = vmatprep.subr.bf16.mxu0 0
        %1654 = vmatpush1.bf16.msra.mxu0 0
        %1655 = vmatprep.subr.bf16.mxu0 0
        %1656 = vmatpush1.bf16.msra.mxu0 0
        %1657 = vmatprep.subr.bf16.mxu0 0
        %1658 = vmatpush1.bf16.msra.mxu0 0
        %1659 = vmatprep.subr.bf16.mxu0 0
        %1660 = vmatpush1.bf16.msra.mxu0 0
        %1661 = vmatprep.subr.bf16.mxu0 0
        %1662 = vmatpush1.bf16.msra.mxu0 0
        %1663 = vmatprep.subr.bf16.mxu0 0
        %1664 = vmatpush1.bf16.msra.mxu0 0
        %1665 = vmatprep.subr.bf16.mxu0 0
        %1666 = vmatpush1.bf16.msra.mxu0 0
        %1667 = vmatprep.subr.bf16.mxu0 0
        %1668 = vmatpush1.bf16.msra.mxu0 0
        %1669 = vmatprep.subr.bf16.mxu0 0
        %1670 = vmatpush1.bf16.msra.mxu0 0
        %1671 = vmatprep.subr.bf16.mxu0 0
        %1672 = vmatpush1.bf16.msra.mxu0 0
        %1673 = vmatprep.subr.bf16.mxu0 0
        %1674 = vmatpush1.bf16.msra.mxu0 0
        %1675 = vmatprep.mubr.bf16.mxu0 0
        %1676 = vmatmul.mubr.bf16.gmra.mrb[0].mxu0 %v1641
        %v1677 = vpop.f32.mrb[0].mxu0
        %v1678 = vadd.f32 0.0, %v1677
        %v1679 = vpop.f32.mrb[0].mxu0
        %v1680 = vpop.f32.mrb[0].mxu0
        %v1681 = vadd.f32 0.0, %v1680
        %v1682 = vpop.f32.mrb[0].mxu0
        %1683 = vdwg.mxu0
        %v1684 = vsel %vm1399, %v1678, 0.0
        %1685 = vadd.xlane.f32.xlu0 %v1684
        %v1686 = vpop.xlane.xlu0 %1685
        %v1687 = vsel %vm1399, %v1681, 0.0
        %1688 = vadd.xlane.f32.xlu0 %v1687
        %v1689 = vpop.xlane.xlu0 %1688
        %v1690 = vmul.f32 %v1686, %v1406
        %v1691 = vmul.f32 %v1689, %v1406
        %v1692 = vsub.f32 %v1678, %v1690
        %v1693 = vsub.f32 %v1681, %v1691
        %v1694 = vmul.f32 %v1692, %v1692
        %v1695 = vmul.f32 %v1693, %v1693
        %v1696 = vsel %vm1399, %v1694, 0.0
        %1697 = vadd.xlane.f32.xlu0 %v1696
        %v1698 = vpop.xlane.xlu0 %1697
        %v1699 = vsel %vm1399, %v1695, 0.0
        %1700 = vadd.xlane.f32.xlu0 %v1699
        %v1701 = vpop.xlane.xlu0 %1700
        %v1702 = vmul.f32 %v1698, %v1406
        %v1703 = vmul.f32 %v1701, %v1406
        %v1704 = vadd.f32 %v1702, 1e-05
        %v1705 = vadd.f32 %v1703, 1e-05
        %v1706 = vrsqrt.pop %v1704
        %v1707 = vrsqrt.pop %v1705
        %v1708 = vmul.f32 %v1692, %v1706
        %v1709 = vmul.f32 %v1693, %v1707
        %1710 = vrot.lane.b32.xlu0 %v1288, 80
        %v1711 = vpop.permute.xlu0 %1710
        %1712 = vrot.lane.b32.xlu0 %v1289, 80
        %v1713 = vpop.permute.xlu0 %1712
        %v1715 = vsel %vm1291, %v1711, 0
        %v1718 = vsel %vm1291, %v1713, 0
        %1720 = vmatprep.subr.bf16.mxu0 0
        %1721 = vmatpush1.bf16.xpose.msra.mxu0 %v1718
        %1722 = vmatprep.subr.bf16.mxu0 0
        %1723 = vmatpush1.bf16.xpose.msra.mxu0 0
        %1724 = vmatprep.subr.bf16.mxu0 0
        %1725 = vmatpush1.bf16.xpose.msra.mxu0 0
        %1726 = vmatprep.subr.bf16.mxu0 0
        %1727 = vmatpush1.bf16.xpose.msra.mxu0 0
        %1728 = vmatprep.subr.bf16.mxu0 0
        %1729 = vmatpush1.bf16.xpose.msra.mxu0 0
        %1730 = vmatprep.subr.bf16.mxu0 0
        %1731 = vmatpush1.bf16.xpose.msra.mxu0 0
        %1732 = vmatprep.subr.bf16.mxu0 0
        %1733 = vmatpush1.bf16.xpose.msra.mxu0 0
        %1734 = vmatprep.subr.bf16.mxu0 0
        %1735 = vmatpush1.bf16.xpose.msra.mxu0 0
        %1736 = vmatprep.subr.bf16.mxu0 0
        %1737 = vmatpush1.bf16.xpose.msra.mxu0 0
        %1738 = vmatprep.subr.bf16.mxu0 0
        %1739 = vmatpush1.bf16.xpose.msra.mxu0 0
        %1740 = vmatprep.subr.bf16.mxu0 0
        %1741 = vmatpush1.bf16.xpose.msra.mxu0 0
        %1742 = vmatprep.subr.bf16.mxu0 0
        %1743 = vmatpush1.bf16.xpose.msra.mxu0 0
        %1744 = vmatprep.subr.bf16.mxu0 0
        %1745 = vmatpush1.bf16.xpose.msra.mxu0 0
        %1746 = vmatprep.subr.bf16.mxu0 0
        %1747 = vmatpush1.bf16.xpose.msra.mxu0 0
        %1748 = vmatprep.subr.bf16.mxu0 0
        %1749 = vmatpush1.bf16.xpose.msra.mxu0 0
        %1750 = vmatprep.subr.bf16.mxu0 0
        %1751 = vmatpush1.bf16.xpose.msra.mxu0 0
        %1752 = vmatprep.mubr.bf16.mxu0 0
        %1753 = vmatmul.mubr.bf16.gmra.mrb[0].mxu0 %v1715
        %v1754 = vpop.f32.mrb[0].mxu0
        %v1755 = vadd.f32 0.0, %v1754
        %v1756 = vpop.f32.mrb[0].mxu0
        %v1757 = vpop.f32.mrb[0].mxu0
        %v1758 = vadd.f32 0.0, %v1757
        %v1759 = vpop.f32.mrb[0].mxu0
        %1760 = vdwg.mxu0
        %v1761 = vmul.f32 %v1281, -0.001955035
        %v1762 = vmul.f32 %v1282, -0.001955035
        %v1763 = vmul.f32 %v1761, 1.442695
        %v1764 = vpow.pop %v1763
        %v1765 = vmul.f32 %v1762, 1.442695
        %v1766 = vpow.pop %v1765
        %v1767 = vmul.f32 %v1285, 0.001955035
        %v1768 = vmul.f32 %v1767, 1.442695
        %v1769 = vpow.pop %v1768
        %v1770 = vmul.f32 %v1764, %v1769
        %v1771 = vmul.f32 %v1766, %v1769
        %v1772 = vsel %vm1286, %v1770, 0.0
        %v1773 = vsel %vm1287, %v1771, 0.0
        %v1774 = vmul.f32 %v1755, %v1772
        %v1775 = vmul.f32 %v1758, %v1773
        %v1776 = vpack.c.bf16 %v1775, %v1774
        %1777 = vrot.lane.b32.xlu0 %v1290, 32
        %v1778 = vpop.permute.xlu0 %1777
        %v1781 = vsel %vm1291, %v1776, 0
        %1783 = vmatprep.subr.bf16.mxu0 0
        %1784 = vmatpush1.bf16.msra.mxu0 %v1778
        %1785 = vmatprep.subr.bf16.mxu0 0
        %1786 = vmatpush1.bf16.msra.mxu0 0
        %1787 = vmatprep.subr.bf16.mxu0 0
        %1788 = vmatpush1.bf16.msra.mxu0 0
        %1789 = vmatprep.subr.bf16.mxu0 0
        %1790 = vmatpush1.bf16.msra.mxu0 0
        %1791 = vmatprep.subr.bf16.mxu0 0
        %1792 = vmatpush1.bf16.msra.mxu0 0
        %1793 = vmatprep.subr.bf16.mxu0 0
        %1794 = vmatpush1.bf16.msra.mxu0 0
        %1795 = vmatprep.subr.bf16.mxu0 0
        %1796 = vmatpush1.bf16.msra.mxu0 0
        %1797 = vmatprep.subr.bf16.mxu0 0
        %1798 = vmatpush1.bf16.msra.mxu0 0
        %1799 = vmatprep.subr.bf16.mxu0 0
        %1800 = vmatpush1.bf16.msra.mxu0 0
        %1801 = vmatprep.subr.bf16.mxu0 0
        %1802 = vmatpush1.bf16.msra.mxu0 0
        %1803 = vmatprep.subr.bf16.mxu0 0
        %1804 = vmatpush1.bf16.msra.mxu0 0
        %1805 = vmatprep.subr.bf16.mxu0 0
        %1806 = vmatpush1.bf16.msra.mxu0 0
        %1807 = vmatprep.subr.bf16.mxu0 0
        %1808 = vmatpush1.bf16.msra.mxu0 0
        %1809 = vmatprep.subr.bf16.mxu0 0
        %1810 = vmatpush1.bf16.msra.mxu0 0
        %1811 = vmatprep.subr.bf16.mxu0 0
        %1812 = vmatpush1.bf16.msra.mxu0 0
        %1813 = vmatprep.subr.bf16.mxu0 0
        %1814 = vmatpush1.bf16.msra.mxu0 0
        %1815 = vmatprep.mubr.bf16.mxu0 0
        %1816 = vmatmul.mubr.bf16.gmra.mrb[0].mxu0 %v1781
        %v1817 = vpop.f32.mrb[0].mxu0
        %v1818 = vadd.f32 0.0, %v1817
        %v1819 = vpop.f32.mrb[0].mxu0
        %v1820 = vpop.f32.mrb[0].mxu0
        %v1821 = vadd.f32 0.0, %v1820
        %v1822 = vpop.f32.mrb[0].mxu0
        %1823 = vdwg.mxu0
        %v1824 = vsel %vm1399, %v1818, 0.0
        %1825 = vadd.xlane.f32.xlu0 %v1824
        %v1826 = vpop.xlane.xlu0 %1825
        %v1827 = vsel %vm1399, %v1821, 0.0
        %1828 = vadd.xlane.f32.xlu0 %v1827
        %v1829 = vpop.xlane.xlu0 %1828
        %v1830 = vmul.f32 %v1826, %v1406
        %v1831 = vmul.f32 %v1829, %v1406
        %v1832 = vsub.f32 %v1818, %v1830
        %v1833 = vsub.f32 %v1821, %v1831
        %v1834 = vmul.f32 %v1832, %v1832
        %v1835 = vmul.f32 %v1833, %v1833
        %v1836 = vsel %vm1399, %v1834, 0.0
        %1837 = vadd.xlane.f32.xlu0 %v1836
        %v1838 = vpop.xlane.xlu0 %1837
        %v1839 = vsel %vm1399, %v1835, 0.0
        %1840 = vadd.xlane.f32.xlu0 %v1839
        %v1841 = vpop.xlane.xlu0 %1840
        %v1842 = vmul.f32 %v1838, %v1406
        %v1843 = vmul.f32 %v1841, %v1406
        %v1844 = vadd.f32 %v1842, 1e-05
        %v1845 = vadd.f32 %v1843, 1e-05
        %v1846 = vrsqrt.pop %v1844
        %v1847 = vrsqrt.pop %v1845
        %v1848 = vmul.f32 %v1832, %v1846
        %v1849 = vmul.f32 %v1833, %v1847
        %1852 = vrot.lane.b32.xlu0 %v1568, 32
        %v1853 = vpop.permute.xlu0 %1852
        %1854 = vrot.lane.b32.xlu0 %v1569, 32
        %v1855 = vpop.permute.xlu0 %1854
        %1860 = vrot.lane.b32.xlu0 %v1708, 64
        %v1861 = vpop.permute.xlu0 %1860
        %1862 = vrot.lane.b32.xlu0 %v1709, 64
        %v1863 = vpop.permute.xlu0 %1862
        %1868 = vrot.lane.b32.xlu0 %v1848, 96
        %v1869 = vpop.permute.xlu0 %1868
        %1870 = vrot.lane.b32.xlu0 %v1849, 96
        %v1871 = vpop.permute.xlu0 %1870
        %v1874 = vsel %vm1399, %v1425, %v1853
        %v1875 = vsel %vm1399, %v1426, %v1855
        %v1876 = vsel %vm982, %v1874, %v1861
        %v1877 = vsel %vm982, %v1875, %v1863
        %vm1878 = vcmask 785408
        %v1879 = vsel %vm1878, %v1876, %v1869
        %v1880 = vsel %vm1878, %v1877, %v1871
        %v1881 = vld [vmem:[%s957] sm:$0x1]
        %v1883 = vlaneseq
        %v1884 = vshrl.u32 %v1883, 7
        %v1885 = vsub.s32 0, %v1884
        %v1886 = vrot.slane %v1881, %v1885
        %v1888 = vmul.f32 %v1879, %v1886
        %v1889 = vmul.f32 %v1880, %v1886
        %v1890 = vld [vmem:[%s797] sm:$0x1]
        %v1892 = vlaneseq
        %v1893 = vshrl.u32 %v1892, 7
        %v1894 = vsub.s32 0, %v1893
        %v1895 = vrot.slane %v1890, %v1894
        %v1897 = vadd.f32 %v1888, %v1895
        %v1898 = vadd.f32 %v1889, %v1895
        %v1899 = vmul.f32 %v1276, %v1897
        %v1900 = vmul.f32 %v1277, %v1898
        %v1901 = vpack.c.bf16 %v1900, %v1899
        %v1902 = vld [vmem:[%s954] sm:$0xf]
        %v1903 = vld [vmem:[%s954 + $0x4] sm:$0xf]
        %v1904 = vld [vmem:[%s954 + $0x8] sm:$0xf]
        %v1905 = vld [vmem:[%s954 + $0xc] sm:$0xf]
        %v1906 = vld [vmem:[%s954 + $0x10] sm:$0xf]
        %v1907 = vld [vmem:[%s954 + $0x14] sm:$0xf]
        %v1908 = vld [vmem:[%s954 + $0x18] sm:$0xf]
        %v1909 = vld [vmem:[%s954 + $0x1c] sm:$0xf]
        %v1910 = vld [vmem:[%s954 + $0x20] sm:$0xf]
        %v1911 = vld [vmem:[%s954 + $0x24] sm:$0xf]
        %v1912 = vld [vmem:[%s954 + $0x28] sm:$0xf]
        %v1913 = vld [vmem:[%s954 + $0x2c] sm:$0xf]
        %v1914 = vld [vmem:[%s954 + $0x30] sm:$0xf]
        %v1915 = vld [vmem:[%s954 + $0x34] sm:$0xf]
        %v1916 = vld [vmem:[%s954 + $0x38] sm:$0xf]
        %v1917 = vld [vmem:[%s954 + $0x3c] sm:$0xf]
        %v1934 = vunpack.c.l.b16 %v1902
        %v1935 = vunpack.c.l.b16 %v1903
        %v1936 = vunpack.c.l.b16 %v1904
        %v1937 = vunpack.c.l.b16 %v1905
        %v1938 = vunpack.c.l.b16 %v1906
        %v1939 = vunpack.c.l.b16 %v1907
        %v1940 = vunpack.c.l.b16 %v1908
        %v1941 = vunpack.c.l.b16 %v1909
        %v1942 = vunpack.c.l.b16 %v1910
        %v1943 = vunpack.c.l.b16 %v1911
        %v1944 = vunpack.c.l.b16 %v1912
        %v1945 = vunpack.c.l.b16 %v1913
        %v1946 = vunpack.c.l.b16 %v1914
        %v1947 = vunpack.c.l.b16 %v1915
        %v1948 = vunpack.c.l.b16 %v1916
        %v1949 = vunpack.c.l.b16 %v1917
        %v1950 = vpack.c.b16 %v1935, %v1934
        %v1951 = vpack.c.b16 %v1937, %v1936
        %v1952 = vpack.c.b16 %v1939, %v1938
        %v1953 = vpack.c.b16 %v1941, %v1940
        %v1954 = vpack.c.b16 %v1943, %v1942
        %v1955 = vpack.c.b16 %v1945, %v1944
        %v1956 = vpack.c.b16 %v1947, %v1946
        %v1957 = vpack.c.b16 %v1949, %v1948
        %1966 = vmatprep.subr.bf16.mxu0 0
        %1967 = vmatpush1.bf16.msra.mxu0 %v1950
        %1968 = vmatprep.subr.bf16.mxu0 0
        %1969 = vmatpush1.bf16.msra.mxu0 %v1951
        %1970 = vmatprep.subr.bf16.mxu0 0
        %1971 = vmatpush1.bf16.msra.mxu0 %v1952
        %1972 = vmatprep.subr.bf16.mxu0 0
        %1973 = vmatpush1.bf16.msra.mxu0 %v1953
        %1974 = vmatprep.subr.bf16.mxu0 0
        %1975 = vmatpush1.bf16.msra.mxu0 %v1954
        %1976 = vmatprep.subr.bf16.mxu0 0
        %1977 = vmatpush1.bf16.msra.mxu0 %v1955
        %1978 = vmatprep.subr.bf16.mxu0 0
        %1979 = vmatpush1.bf16.msra.mxu0 %v1956
        %1980 = vmatprep.subr.bf16.mxu0 0
        %1981 = vmatpush1.bf16.msra.mxu0 %v1957
        %1982 = vmatprep.subr.bf16.mxu0 0
        %1983 = vmatpush1.bf16.msra.mxu0 0
        %1984 = vmatprep.subr.bf16.mxu0 0
        %1985 = vmatpush1.bf16.msra.mxu0 0
        %1986 = vmatprep.subr.bf16.mxu0 0
        %1987 = vmatpush1.bf16.msra.mxu0 0
        %1988 = vmatprep.subr.bf16.mxu0 0
        %1989 = vmatpush1.bf16.msra.mxu0 0
        %1990 = vmatprep.subr.bf16.mxu0 0
        %1991 = vmatpush1.bf16.msra.mxu0 0
        %1992 = vmatprep.subr.bf16.mxu0 0
        %1993 = vmatpush1.bf16.msra.mxu0 0
        %1994 = vmatprep.subr.bf16.mxu0 0
        %1995 = vmatpush1.bf16.msra.mxu0 0
        %1996 = vmatprep.subr.bf16.mxu0 0
        %1997 = vmatpush1.bf16.msra.mxu0 0
        %1998 = vmatprep.mubr.bf16.mxu0 0
        %1999 = vmatmul.mubr.bf16.gmra.mrb[0].mxu0 %v1901
        %v2000 = vpop.f32.mrb[0].mxu0
        %v2001 = vadd.f32 %v978, %v2000
        %v2002 = vpop.f32.mrb[0].mxu0
        %v2003 = vpop.f32.mrb[0].mxu0
        %v2004 = vadd.f32 %v979, %v2003
        %v2005 = vpop.f32.mrb[0].mxu0
        %2006 = vdwg.mxu0
        %v2007 = vld [vmem:[%s805] sm:$0x1]
        %v2008 = vld [vmem:[%s813] sm:$0x1]
        %v2009 = vsel %vm982, %v2001, 0.0
        %2010 = vadd.xlane.f32.xlu0 %v2009
        %v2011 = vpop.xlane.xlu0 %2010
        %v2012 = vsel %vm982, %v2004, 0.0
        %2013 = vadd.xlane.f32.xlu0 %v2012
        %v2014 = vpop.xlane.xlu0 %2013
        %v2015 = vmul.f32 %v2011, %v989
        %v2016 = vmul.f32 %v2014, %v989
        %v2017 = vsub.f32 %v2001, %v2015
        %v2018 = vsub.f32 %v2004, %v2016
        %v2019 = vmul.f32 %v2017, %v2017
        %v2020 = vmul.f32 %v2018, %v2018
        %v2021 = vsel %vm982, %v2019, 0.0
        %2022 = vadd.xlane.f32.xlu0 %v2021
        %v2023 = vpop.xlane.xlu0 %2022
        %v2024 = vsel %vm982, %v2020, 0.0
        %2025 = vadd.xlane.f32.xlu0 %v2024
        %v2026 = vpop.xlane.xlu0 %2025
        %v2027 = vmul.f32 %v2023, %v989
        %v2028 = vmul.f32 %v2026, %v989
        %v2029 = vadd.f32 %v2027, 1e-05
        %v2030 = vadd.f32 %v2028, 1e-05
        %v2031 = vrsqrt.pop %v2029
        %v2032 = vrsqrt.pop %v2030
        %v2033 = vmul.f32 %v2017, %v2031
        %v2034 = vmul.f32 %v2018, %v2032
        %v2036 = vlaneseq
        %v2037 = vshrl.u32 %v2036, 7
        %v2038 = vsub.s32 0, %v2037
        %v2039 = vrot.slane %v2007, %v2038
        %v2041 = vmul.f32 %v2033, %v2039
        %v2042 = vmul.f32 %v2034, %v2039
        %v2044 = vlaneseq
        %v2045 = vshrl.u32 %v2044, 7
        %v2046 = vsub.s32 0, %v2045
        %v2047 = vrot.slane %v2008, %v2046
        %v2049 = vadd.f32 %v2041, %v2047
        %v2050 = vadd.f32 %v2042, %v2047
        %v2051 = vpack.c.bf16 %v2050, %v2049
        %v2052 = vld [vmem:[%s962] sm:$0xf]
        %v2053 = vld [vmem:[%s962 + $0x4] sm:$0xf]
        %v2054 = vld [vmem:[%s962 + $0x8] sm:$0xf]
        %v2055 = vld [vmem:[%s962 + $0xc] sm:$0xf]
        %v2056 = vld [vmem:[%s962 + $0x10] sm:$0xf]
        %v2057 = vld [vmem:[%s962 + $0x14] sm:$0xf]
        %v2058 = vld [vmem:[%s962 + $0x18] sm:$0xf]
        %v2059 = vld [vmem:[%s962 + $0x1c] sm:$0xf]
        %v2060 = vld [vmem:[%s821] sm:$0x1]
        %v2062 = vlaneseq
        %v2063 = vshrl.u32 %v2062, 7
        %v2064 = vsub.s32 0, %v2063
        %v2065 = vrot.slane %v2060, %v2064
        %v2075 = vunpack.c.l.b16 %v2052
        %v2076 = vunpack.c.l.b16 %v2053
        %v2077 = vunpack.c.l.b16 %v2054
        %v2078 = vunpack.c.l.b16 %v2055
        %v2079 = vunpack.c.l.b16 %v2056
        %v2080 = vunpack.c.l.b16 %v2057
        %v2081 = vunpack.c.l.b16 %v2058
        %v2082 = vunpack.c.l.b16 %v2059
        %v2083 = vpack.c.b16 %v2076, %v2075
        %v2084 = vpack.c.b16 %v2078, %v2077
        %v2085 = vpack.c.b16 %v2080, %v2079
        %v2086 = vpack.c.b16 %v2082, %v2081
        %v2092 = vsel %vm982, %v2051, 0
        %2094 = vmatprep.subr.bf16.mxu0 0
        %2095 = vmatpush1.bf16.msra.mxu0 %v2083
        %2096 = vmatprep.subr.bf16.mxu0 0
        %2097 = vmatpush1.bf16.msra.mxu0 %v2084
        %2098 = vmatprep.subr.bf16.mxu0 0
        %2099 = vmatpush1.bf16.msra.mxu0 %v2085
        %2100 = vmatprep.subr.bf16.mxu0 0
        %2101 = vmatpush1.bf16.msra.mxu0 %v2086
        %2102 = vmatprep.subr.bf16.mxu0 0
        %2103 = vmatpush1.bf16.msra.mxu0 0
        %2104 = vmatprep.subr.bf16.mxu0 0
        %2105 = vmatpush1.bf16.msra.mxu0 0
        %2106 = vmatprep.subr.bf16.mxu0 0
        %2107 = vmatpush1.bf16.msra.mxu0 0
        %2108 = vmatprep.subr.bf16.mxu0 0
        %2109 = vmatpush1.bf16.msra.mxu0 0
        %2110 = vmatprep.subr.bf16.mxu0 0
        %2111 = vmatpush1.bf16.msra.mxu0 0
        %2112 = vmatprep.subr.bf16.mxu0 0
        %2113 = vmatpush1.bf16.msra.mxu0 0
        %2114 = vmatprep.subr.bf16.mxu0 0
        %2115 = vmatpush1.bf16.msra.mxu0 0
        %2116 = vmatprep.subr.bf16.mxu0 0
        %2117 = vmatpush1.bf16.msra.mxu0 0
        %2118 = vmatprep.subr.bf16.mxu0 0
        %2119 = vmatpush1.bf16.msra.mxu0 0
        %2120 = vmatprep.subr.bf16.mxu0 0
        %2121 = vmatpush1.bf16.msra.mxu0 0
        %2122 = vmatprep.subr.bf16.mxu0 0
        %2123 = vmatpush1.bf16.msra.mxu0 0
        %2124 = vmatprep.subr.bf16.mxu0 0
        %2125 = vmatpush1.bf16.msra.mxu0 0
        %2126 = vmatprep.mubr.bf16.mxu0 0
        %2127 = vmatmul.mubr.bf16.gmra.mrb[0].mxu0 %v2092
        %v2128 = vpop.f32.mrb[0].mxu0
        %v2129 = vadd.f32 %v2065, %v2128
        %v2130 = vpop.f32.mrb[0].mxu0
        %v2131 = vpop.f32.mrb[0].mxu0
        %v2132 = vadd.f32 %v2065, %v2131
        %v2133 = vpop.f32.mrb[0].mxu0
        %2134 = vdwg.mxu0
        %v2135 = vmul.f32 %v2129, 0.5
        %v2136 = vmul.f32 %v2132, 0.5
        %v2137 = vmul.f32 %v2129, 0.70710677
        %v2138 = vmul.f32 %v2132, 0.70710677
        %vm2139 = vcmp.lt.f32.partialorder %v2137, 0.0
        %vm2140 = vcmp.lt.f32.partialorder %v2138, 0.0
        %v2141 = vsel %vm2139, -1.0, 1.0
        %v2142 = vsel %vm2140, -1.0, 1.0
        %v2143 = vand.u32 2147483647, %v2137
        %v2144 = vand.u32 2147483647, %v2138
        %v2145 = vmul.f32 %v2143, 0.3275911
        %v2146 = vmul.f32 %v2144, 0.3275911
        %v2147 = vadd.f32 %v2145, 1.0
        %v2148 = vadd.f32 %v2146, 1.0
        %v2149 = vrcp.pop %v2147
        %v2150 = vmul.f32 1.0, %v2149
        %v2151 = vrcp.pop %v2148
        %v2152 = vmul.f32 1.0, %v2151
        %v2153 = vmul.f32 %v2150, 1.0614054
        %v2154 = vmul.f32 %v2152, 1.0614054
        %v2155 = vadd.f32 %v2153, -1.4531521
        %v2156 = vadd.f32 %v2154, -1.4531521
        %v2157 = vmul.f32 %v2155, %v2150
        %v2158 = vmul.f32 %v2156, %v2152
        %v2159 = vadd.f32 %v2157, 1.4214138
        %v2160 = vadd.f32 %v2158, 1.4214138
        %v2161 = vmul.f32 %v2159, %v2150
        %v2162 = vmul.f32 %v2160, %v2152
        %v2163 = vadd.f32 %v2161, -0.28449672
        %v2164 = vadd.f32 %v2162, -0.28449672
        %v2165 = vmul.f32 %v2163, %v2150
        %v2166 = vmul.f32 %v2164, %v2152
        %v2167 = vadd.f32 %v2165, 0.2548296
        %v2168 = vadd.f32 %v2166, 0.2548296
        %v2169 = vmul.f32 %v2167, %v2150
        %v2170 = vmul.f32 %v2168, %v2152
        %v2171 = vsub.f32 0.0, %v2143
        %v2172 = vsub.f32 0.0, %v2144
        %v2173 = vmul.f32 %v2171, %v2143
        %v2174 = vmul.f32 %v2172, %v2144
        %v2175 = vmul.f32 %v2173, 1.442695
        %v2176 = vpow.pop %v2175
        %v2177 = vmul.f32 %v2174, 1.442695
        %v2178 = vpow.pop %v2177
        %v2179 = vmul.f32 %v2169, %v2176
        %v2180 = vmul.f32 %v2170, %v2178
        %v2181 = vsub.f32 1.0, %v2179
        %v2182 = vsub.f32 1.0, %v2180
        %v2183 = vmul.f32 %v2141, %v2181
        %v2184 = vmul.f32 %v2142, %v2182
        %v2185 = vadd.f32 %v2183, 1.0
        %v2186 = vadd.f32 %v2184, 1.0
        %v2187 = vmul.f32 %v2135, %v2185
        %v2188 = vmul.f32 %v2136, %v2186
        %v2189 = vpack.c.bf16 %v2188, %v2187
        %v2190 = vld [vmem:[%s967] sm:$0xf]
        %v2191 = vld [vmem:[%s967 + $0x4] sm:$0xf]
        %v2192 = vld [vmem:[%s967 + $0x8] sm:$0xf]
        %v2193 = vld [vmem:[%s967 + $0xc] sm:$0xf]
        %v2194 = vld [vmem:[%s967 + $0x10] sm:$0xf]
        %v2195 = vld [vmem:[%s967 + $0x14] sm:$0xf]
        %v2196 = vld [vmem:[%s967 + $0x18] sm:$0xf]
        %v2197 = vld [vmem:[%s967 + $0x1c] sm:$0xf]
        %v2198 = vld [vmem:[%s967 + $0x20] sm:$0xf]
        %v2199 = vld [vmem:[%s967 + $0x24] sm:$0xf]
        %v2200 = vld [vmem:[%s967 + $0x28] sm:$0xf]
        %v2201 = vld [vmem:[%s967 + $0x2c] sm:$0xf]
        %v2202 = vld [vmem:[%s967 + $0x30] sm:$0xf]
        %v2203 = vld [vmem:[%s967 + $0x34] sm:$0xf]
        %v2204 = vld [vmem:[%s967 + $0x38] sm:$0xf]
        %v2205 = vld [vmem:[%s967 + $0x3c] sm:$0xf]
        %v2206 = vld [vmem:[%s829] sm:$0x1]
        %v2208 = vlaneseq
        %v2209 = vshrl.u32 %v2208, 7
        %v2210 = vsub.s32 0, %v2209
        %v2211 = vrot.slane %v2206, %v2210
        %v2229 = vunpack.c.l.b16 %v2190
        %v2230 = vunpack.c.l.b16 %v2191
        %v2231 = vunpack.c.l.b16 %v2192
        %v2232 = vunpack.c.l.b16 %v2193
        %v2233 = vunpack.c.l.b16 %v2194
        %v2234 = vunpack.c.l.b16 %v2195
        %v2235 = vunpack.c.l.b16 %v2196
        %v2236 = vunpack.c.l.b16 %v2197
        %v2237 = vunpack.c.l.b16 %v2198
        %v2238 = vunpack.c.l.b16 %v2199
        %v2239 = vunpack.c.l.b16 %v2200
        %v2240 = vunpack.c.l.b16 %v2201
        %v2241 = vunpack.c.l.b16 %v2202
        %v2242 = vunpack.c.l.b16 %v2203
        %v2243 = vunpack.c.l.b16 %v2204
        %v2244 = vunpack.c.l.b16 %v2205
        %v2245 = vpack.c.b16 %v2230, %v2229
        %v2246 = vpack.c.b16 %v2232, %v2231
        %v2247 = vpack.c.b16 %v2234, %v2233
        %v2248 = vpack.c.b16 %v2236, %v2235
        %v2249 = vpack.c.b16 %v2238, %v2237
        %v2250 = vpack.c.b16 %v2240, %v2239
        %v2251 = vpack.c.b16 %v2242, %v2241
        %v2252 = vpack.c.b16 %v2244, %v2243
        %2261 = vmatprep.subr.bf16.mxu0 0
        %2262 = vmatpush1.bf16.msra.mxu0 %v2245
        %2263 = vmatprep.subr.bf16.mxu0 0
        %2264 = vmatpush1.bf16.msra.mxu0 %v2246
        %2265 = vmatprep.subr.bf16.mxu0 0
        %2266 = vmatpush1.bf16.msra.mxu0 %v2247
        %2267 = vmatprep.subr.bf16.mxu0 0
        %2268 = vmatpush1.bf16.msra.mxu0 %v2248
        %2269 = vmatprep.subr.bf16.mxu0 0
        %2270 = vmatpush1.bf16.msra.mxu0 %v2249
        %2271 = vmatprep.subr.bf16.mxu0 0
        %2272 = vmatpush1.bf16.msra.mxu0 %v2250
        %2273 = vmatprep.subr.bf16.mxu0 0
        %2274 = vmatpush1.bf16.msra.mxu0 %v2251
        %2275 = vmatprep.subr.bf16.mxu0 0
        %2276 = vmatpush1.bf16.msra.mxu0 %v2252
        %2277 = vmatprep.subr.bf16.mxu0 0
        %2278 = vmatpush1.bf16.msra.mxu0 0
        %2279 = vmatprep.subr.bf16.mxu0 0
        %2280 = vmatpush1.bf16.msra.mxu0 0
        %2281 = vmatprep.subr.bf16.mxu0 0
        %2282 = vmatpush1.bf16.msra.mxu0 0
        %2283 = vmatprep.subr.bf16.mxu0 0
        %2284 = vmatpush1.bf16.msra.mxu0 0
        %2285 = vmatprep.subr.bf16.mxu0 0
        %2286 = vmatpush1.bf16.msra.mxu0 0
        %2287 = vmatprep.subr.bf16.mxu0 0
        %2288 = vmatpush1.bf16.msra.mxu0 0
        %2289 = vmatprep.subr.bf16.mxu0 0
        %2290 = vmatpush1.bf16.msra.mxu0 0
        %2291 = vmatprep.subr.bf16.mxu0 0
        %2292 = vmatpush1.bf16.msra.mxu0 0
        %2293 = vmatprep.mubr.bf16.mxu0 0
        %2294 = vmatmul.mubr.bf16.gmra.mrb[0].mxu0 %v2189
        %v2295 = vpop.f32.mrb[0].mxu0
        %v2296 = vadd.f32 %v2211, %v2295
        %v2297 = vpop.f32.mrb[0].mxu0
        %v2298 = vpop.f32.mrb[0].mxu0
        %v2299 = vadd.f32 %v2211, %v2298
        %v2300 = vpop.f32.mrb[0].mxu0
        %2301 = vdwg.mxu0
        %v2302 = vadd.f32 %v2296, %v2001
        %v2303 = vadd.f32 %v2299, %v2004
        %2304 = vst.msk [vmem:[#allocation2] sm:$0xff] %vm982, %v2302
        %2305 = vst.msk [vmem:[#allocation2 + $0x8] sm:$0xff] %vm982, %v2303
        %p2306 = scmp.eq.s32.totalorder %s45, 1
        // Predicated region
        $region145: #{tpu_custom_call.1} parent=103 // pred_check
          %p2307 = pneg %p2306
        $region146: #{tpu_custom_call.1} parent=103 // pred_check_branch
          %2309 = sbr.rel (%p2307) target = $region148
        $region147: #{tpu_custom_call.1} parent=103 // pred_region
          %v2310 = vpack.c.bf16 %v2303, %v2302
          %v2311 = vld [vmem:[%s17] sm:$0xf]
          %v2312 = vld [vmem:[%s17 + $0x4] sm:$0xf]
          %v2313 = vld [vmem:[%s17 + $0x8] sm:$0xf]
          %v2314 = vld [vmem:[%s17 + $0xc] sm:$0xf]
          %v2315 = vld [vmem:[%s17 + $0x10] sm:$0xf]
          %v2316 = vld [vmem:[%s17 + $0x14] sm:$0xf]
          %v2317 = vld [vmem:[%s17 + $0x18] sm:$0xf]
          %v2318 = vld [vmem:[%s17 + $0x1c] sm:$0xf]
          %v2319 = vld [vmem:[%s18] sm:$0x1]
          %v2321 = vlaneseq
          %v2322 = vshrl.u32 %v2321, 7
          %v2323 = vsub.s32 0, %v2322
          %v2324 = vrot.slane %v2319, %v2323
          %v2334 = vunpack.c.l.b16 %v2311
          %v2335 = vunpack.c.l.b16 %v2312
          %v2336 = vunpack.c.l.b16 %v2313
          %v2337 = vunpack.c.l.b16 %v2314
          %v2338 = vunpack.c.l.b16 %v2315
          %v2339 = vunpack.c.l.b16 %v2316
          %v2340 = vunpack.c.l.b16 %v2317
          %v2341 = vunpack.c.l.b16 %v2318
          %v2342 = vpack.c.b16 %v2335, %v2334
          %v2343 = vpack.c.b16 %v2337, %v2336
          %v2344 = vpack.c.b16 %v2339, %v2338
          %v2345 = vpack.c.b16 %v2341, %v2340
          %v2351 = vsel %vm982, %v2310, 0
          %2353 = vmatprep.subr.bf16.mxu0 0
          %2354 = vmatpush1.bf16.msra.mxu0 %v2342
          %2355 = vmatprep.subr.bf16.mxu0 0
          %2356 = vmatpush1.bf16.msra.mxu0 %v2343
          %2357 = vmatprep.subr.bf16.mxu0 0
          %2358 = vmatpush1.bf16.msra.mxu0 %v2344
          %2359 = vmatprep.subr.bf16.mxu0 0
          %2360 = vmatpush1.bf16.msra.mxu0 %v2345
          %2361 = vmatprep.subr.bf16.mxu0 0
          %2362 = vmatpush1.bf16.msra.mxu0 0
          %2363 = vmatprep.subr.bf16.mxu0 0
          %2364 = vmatpush1.bf16.msra.mxu0 0
          %2365 = vmatprep.subr.bf16.mxu0 0
          %2366 = vmatpush1.bf16.msra.mxu0 0
          %2367 = vmatprep.subr.bf16.mxu0 0
          %2368 = vmatpush1.bf16.msra.mxu0 0
          %2369 = vmatprep.subr.bf16.mxu0 0
          %2370 = vmatpush1.bf16.msra.mxu0 0
          %2371 = vmatprep.subr.bf16.mxu0 0
          %2372 = vmatpush1.bf16.msra.mxu0 0
          %2373 = vmatprep.subr.bf16.mxu0 0
          %2374 = vmatpush1.bf16.msra.mxu0 0
          %2375 = vmatprep.subr.bf16.mxu0 0
          %2376 = vmatpush1.bf16.msra.mxu0 0
          %2377 = vmatprep.subr.bf16.mxu0 0
          %2378 = vmatpush1.bf16.msra.mxu0 0
          %2379 = vmatprep.subr.bf16.mxu0 0
          %2380 = vmatpush1.bf16.msra.mxu0 0
          %2381 = vmatprep.subr.bf16.mxu0 0
          %2382 = vmatpush1.bf16.msra.mxu0 0
          %2383 = vmatprep.subr.bf16.mxu0 0
          %2384 = vmatpush1.bf16.msra.mxu0 0
          %2385 = vmatprep.mubr.bf16.mxu0 0
          %2386 = vmatmul.mubr.bf16.gmra.mrb[0].mxu0 %v2351
          %v2387 = vpop.f32.mrb[0].mxu0
          %v2388 = vadd.f32 %v2324, %v2387
          %v2389 = vpop.f32.mrb[0].mxu0
          %v2390 = vpop.f32.mrb[0].mxu0
          %v2391 = vadd.f32 %v2324, %v2390
          %v2392 = vpop.f32.mrb[0].mxu0
          %2393 = vdwg.mxu0
          %v2394 = vpack.c.bf16 %v2391, %v2388
          %v2395 = vld [vmem:[%s19] sm:$0xf]
          %v2396 = vld [vmem:[%s19 + $0x4] sm:$0xf]
          %v2397 = vld [vmem:[%s19 + $0x8] sm:$0xf]
          %v2398 = vld [vmem:[%s19 + $0xc] sm:$0xf]
          %v2399 = vld [vmem:[%s19 + $0x10] sm:$0xf]
          %v2400 = vld [vmem:[%s19 + $0x14] sm:$0xf]
          %v2401 = vld [vmem:[%s19 + $0x18] sm:$0xf]
          %v2402 = vld [vmem:[%s19 + $0x1c] sm:$0xf]
          %v2403 = vld [vmem:[%s19 + $0x20] sm:$0xf]
          %v2404 = vld [vmem:[%s19 + $0x24] sm:$0xf]
          %v2405 = vld [vmem:[%s19 + $0x28] sm:$0xf]
          %v2406 = vld [vmem:[%s19 + $0x2c] sm:$0xf]
          %v2407 = vld [vmem:[%s19 + $0x30] sm:$0xf]
          %v2408 = vld [vmem:[%s19 + $0x34] sm:$0xf]
          %v2409 = vld [vmem:[%s19 + $0x38] sm:$0xf]
          %v2410 = vld [vmem:[%s19 + $0x3c] sm:$0xf]
          %v2411 = vld [vmem:[#allocation3] sm:$0x1]
          %v2413 = vlaneseq
          %v2414 = vshrl.u32 %v2413, 7
          %v2415 = vsub.s32 0, %v2414
          %v2416 = vrot.slane %v2411, %v2415
          %v2434 = vunpack.c.l.b16 %v2395
          %v2435 = vunpack.c.l.b16 %v2396
          %v2436 = vunpack.c.l.b16 %v2397
          %v2437 = vunpack.c.l.b16 %v2398
          %v2438 = vunpack.c.l.b16 %v2399
          %v2439 = vunpack.c.l.b16 %v2400
          %v2440 = vunpack.c.l.b16 %v2401
          %v2441 = vunpack.c.l.b16 %v2402
          %v2442 = vunpack.c.l.b16 %v2403
          %v2443 = vunpack.c.l.b16 %v2404
          %v2444 = vunpack.c.l.b16 %v2405
          %v2445 = vunpack.c.l.b16 %v2406
          %v2446 = vunpack.c.l.b16 %v2407
          %v2447 = vunpack.c.l.b16 %v2408
          %v2448 = vunpack.c.l.b16 %v2409
          %v2449 = vunpack.c.l.b16 %v2410
          %v2450 = vpack.c.b16 %v2435, %v2434
          %v2451 = vpack.c.b16 %v2437, %v2436
          %v2452 = vpack.c.b16 %v2439, %v2438
          %v2453 = vpack.c.b16 %v2441, %v2440
          %v2454 = vpack.c.b16 %v2443, %v2442
          %v2455 = vpack.c.b16 %v2445, %v2444
          %v2456 = vpack.c.b16 %v2447, %v2446
          %v2457 = vpack.c.b16 %v2449, %v2448
          %2466 = vmatprep.subr.bf16.mxu0 0
          %2467 = vmatpush1.bf16.msra.mxu0 %v2450
          %2468 = vmatprep.subr.bf16.mxu0 0
          %2469 = vmatpush1.bf16.msra.mxu0 %v2451
          %2470 = vmatprep.subr.bf16.mxu0 0
          %2471 = vmatpush1.bf16.msra.mxu0 %v2452
          %2472 = vmatprep.subr.bf16.mxu0 0
          %2473 = vmatpush1.bf16.msra.mxu0 %v2453
          %2474 = vmatprep.subr.bf16.mxu0 0
          %2475 = vmatpush1.bf16.msra.mxu0 %v2454
          %2476 = vmatprep.subr.bf16.mxu0 0
          %2477 = vmatpush1.bf16.msra.mxu0 %v2455
          %2478 = vmatprep.subr.bf16.mxu0 0
          %2479 = vmatpush1.bf16.msra.mxu0 %v2456
          %2480 = vmatprep.subr.bf16.mxu0 0
          %2481 = vmatpush1.bf16.msra.mxu0 %v2457
          %2482 = vmatprep.subr.bf16.mxu0 0
          %2483 = vmatpush1.bf16.msra.mxu0 0
          %2484 = vmatprep.subr.bf16.mxu0 0
          %2485 = vmatpush1.bf16.msra.mxu0 0
          %2486 = vmatprep.subr.bf16.mxu0 0
          %2487 = vmatpush1.bf16.msra.mxu0 0
          %2488 = vmatprep.subr.bf16.mxu0 0
          %2489 = vmatpush1.bf16.msra.mxu0 0
          %2490 = vmatprep.subr.bf16.mxu0 0
          %2491 = vmatpush1.bf16.msra.mxu0 0
          %2492 = vmatprep.subr.bf16.mxu0 0
          %2493 = vmatpush1.bf16.msra.mxu0 0
          %2494 = vmatprep.subr.bf16.mxu0 0
          %2495 = vmatpush1.bf16.msra.mxu0 0
          %2496 = vmatprep.subr.bf16.mxu0 0
          %2497 = vmatpush1.bf16.msra.mxu0 0
          %2498 = vmatprep.mubr.bf16.mxu0 0
          %2499 = vmatmul.mubr.bf16.gmra.mrb[0].mxu0 %v2394
          %v2500 = vpop.f32.mrb[0].mxu0
          %v2501 = vadd.f32 %v2416, %v2500
          %v2502 = vpop.f32.mrb[0].mxu0
          %v2503 = vpop.f32.mrb[0].mxu0
          %v2504 = vadd.f32 %v2416, %v2503
          %v2505 = vpop.f32.mrb[0].mxu0
          %2506 = vdwg.mxu0
          %vm2507 = vcmask 7168
          %2508 = vst.msk [vmem:[%s21] sm:$0xff] %vm2507, %v2501
          %2509 = vst.msk [vmem:[%s21 + $0x8] sm:$0xff] %vm2507, %v2504
        $region148: #{tpu_custom_call.1} parent=103 // pred_fallthru
          _
        // Predicated region
        $region149: #{tpu_custom_call.1} parent=103 // pred_check
          %p2510 = pneg %p559
        $region150: #{tpu_custom_call.1} parent=103 // pred_check_branch
          %2512 = sbr.rel (%p2510) target = $region152
        $region151: #{tpu_custom_call.1} parent=103 // pred_region
          _
        $region152: #{tpu_custom_call.1} parent=103 // pred_fallthru
          _
        // Predicated region
        $region153: #{tpu_custom_call.1} parent=103 // pred_check
          %p2513 = pneg %p559
        $region154: #{tpu_custom_call.1} parent=103 // pred_check_branch
          %2515 = sbr.rel (%p2513) target = $region156
        $region155: #{tpu_custom_call.1} parent=103 // pred_region
          _
        $region156: #{tpu_custom_call.1} parent=103 // pred_fallthru
          _
      $region104: #{tpu_custom_call.1} parent=5 // pred_fallthru
        _
      %p2516 = scmp.le.s32.totalorder 2, %s40
      // Predicated region
      $region157: #{tpu_custom_call.1} parent=5 // pred_check
        %p2517 = pneg %p2516
      $region158: #{tpu_custom_call.1} parent=5 // pred_check_branch
        %2519 = sbr.rel (%p2517) target = $region160
      $region159: #{tpu_custom_call.1} parent=5 // pred_region
        %s2520 = ssub.s32 %s40, 2
      $region160: #{tpu_custom_call.1} parent=5 // pred_fallthru
        _
    $region6: #{tpu_custom_call.1} parent=1 // loop_footer
      %s44 = sadd.s32 1, %s40
    $region7: #{tpu_custom_call.1} parent=1 // loop_footer_branch
      %39 = sbr.rel target = $region3
    $region8: #{tpu_custom_call.1} parent=1 // loop_exit
      _
    %2521 = vsyncpa [#allocation5], 1
    %s2522 = scalar_lea.sflag [#allocation5], 1
    %2523 = vsyncpa %s2522, 1
    %2524 = vsyncpa [#allocation7], 1
    %s2525 = scalar_lea.sflag [#allocation7], 1
    %2526 = vsyncpa %s2525, 1
    %2527 = vsyncpa [#allocation10], 1
    %s2528 = scalar_lea.sflag [#allocation10], 1
    %2529 = vsyncpa %s2528, 1
    %2530 = vsyncpa [#allocation13], 1
    %s2531 = scalar_lea.sflag [#allocation13], 1
    %2532 = vsyncpa %s2531, 1
    %2533 = vsyncpa [#allocation16], 1

</llo_original>
